<compile_context>
chip_gen: v6e
topology: v6e:2x2x1
jax: 0.10.0
libtpu: 0.0.40
codegen_flags: <defaults>
</compile_context>

<pallas_src>
import functools

import jax
import jax.numpy as jnp
from jax.experimental import pallas as pl
from jax.experimental.pallas import tpu as pltpu


# ---------------------------------------------------------------------------
# Kernel 1: single-pass matmul (full K, full N) + fused bias + optional ReLU
# ---------------------------------------------------------------------------
def _mm_kernel(a_ref, w_ref, b_ref, o_ref, *, activation):
    r = jnp.dot(a_ref[...], w_ref[...], preferred_element_type=jnp.float32)
    r = r + b_ref[...]
    if activation == "relu":
        r = jnp.maximum(r, 0.0)
    o_ref[...] = r.astype(o_ref.dtype)


def _pick_tile_m(m):
    # Prefer 256: fills the 256-wide MXU on v6e/v7x and keeps >=2 parallel
    # blocks (two TensorCores on v7x) once M >= 512; 128-multiples are native
    # on v5e anyway.
    for t in (256, 512, 128, 64, 32, 16, 8):
        if m % t == 0:
            return t
    return m


def matmul_bias_act(a, w, b, activation=None, *, out_dtype=jnp.bfloat16):
    """(M,K) @ (K,N) + bias[N], optional ReLU. bf16 operands, fp32 accumulate.

    Every K/N in this net is tiny (<= 9*128), so K and N are single
    full-extent blocks: no K grid axis, no accumulator scratch, no padding."""
    M, K = a.shape
    K2, N = w.shape
    assert K == K2, (K, K2)

    a = a.astype(jnp.bfloat16)
    w = w.astype(jnp.bfloat16)
    bias = b.reshape(1, N).astype(jnp.float32)

    Mp = M + (-M) % 8                         # sublane alignment only
    if Mp != M:
        a = jnp.pad(a, ((0, Mp - M), (0, 0)))
    tm = _pick_tile_m(Mp)

    out = pl.pallas_call(
        functools.partial(_mm_kernel, activation=activation),
        out_shape=jax.ShapeDtypeStruct((Mp, N), out_dtype),
        grid_spec=pltpu.PrefetchScalarGridSpec(
            num_scalar_prefetch=0,
            grid=(Mp // tm,),
            in_specs=[
                pl.BlockSpec((tm, K), lambda i: (i, 0)),
                pl.BlockSpec((K, N), lambda i: (0, 0)),   # resident weight
                pl.BlockSpec((1, N), lambda i: (0, 0)),   # resident bias
            ],
            out_specs=pl.BlockSpec((tm, N), lambda i: (i, 0)),
        ),
        compiler_params=pltpu.CompilerParams(dimension_semantics=("parallel",)),
    )(a, w, bias)
    return out[:M] if Mp != M else out


# ---------------------------------------------------------------------------
# Kernel 2: fused multi-input 3x3 conv (stride 1, pad 1) + bias + optional ReLU
#           + optional fused 1x1 output projection
# ---------------------------------------------------------------------------
def _conv3x3_kernel(*refs, n_in, activation, project):
    x_refs = refs[:n_in]
    w_refs = refs[n_in:2 * n_in]
    b_ref = refs[2 * n_in]
    if project:
        pw_ref = refs[2 * n_in + 1]
        pb_ref = refs[2 * n_in + 2]
        o_ref = refs[2 * n_in + 3]
    else:
        o_ref = refs[2 * n_in + 1]
    _, H, W, _ = o_ref.shape
    Cout = w_refs[0].shape[-1]

    acc = jnp.zeros((H * W, Cout), jnp.float32)
    for x_ref, w_ref in zip(x_refs, w_refs):
        x = x_ref[0]                              # (H+2, W, 3*Cin)
        c3 = x.shape[-1]
        for di in range(3):                       # vertical taps, in-kernel
            patch = x[di:di + H].reshape(H * W, c3)
            acc = acc + jnp.dot(patch, w_ref[di],
                                preferred_element_type=jnp.float32)
    r = acc + b_ref[...]
    if activation == "relu":
        r = jnp.maximum(r, 0.0)
    if project:
        # fused 1x1 projection: (H*W, Cout) @ (Cout, Nout) + bias
        r = jnp.dot(r.astype(jnp.bfloat16), pw_ref[...],
                    preferred_element_type=jnp.float32) + pb_ref[...]
    o_ref[0] = r.reshape(H, W, -1).astype(o_ref.dtype)


def conv3x3_fused(inputs, bias, activation=None, *, proj=None,
                  out_dtype=jnp.bfloat16):
    """3x3 conv summed over multiple (x, w[3,3,Cin,Cout]) channel groups.

    conv(concat([x0,x1],-1), w) == conv(x0, w[...,:C0,:]) + conv(x1, w[...,C0:,:]),
    so skip-connection concats never materialize in HBM. If `proj=(pw, pb)` is
    given, a 1x1 projection is applied in the same kernel (no extra HBM trip).
    """
    B, H, W, _ = inputs[0][0].shape
    Cout = inputs[0][1].shape[-1]

    xws, ws, in_specs = [], [], []
    for x, w in inputs:
        Cin = x.shape[-1]
        xp = jnp.pad(x, ((0, 0), (1, 1), (1, 1), (0, 0)))
        # partial im2col: horizontal taps folded into channels (3x traffic,
        # not 9x); vertical taps handled inside the kernel.
        # TODO(synk): for large H, row-tile the grid (overlapping bands) and
        #             fold the horizontal taps in-kernel too (1x traffic).
        xw = jnp.concatenate([xp[:, :, j:j + W, :] for j in range(3)], axis=-1)
        xws.append(xw.astype(jnp.bfloat16))
        ws.append(w.reshape(3, 3 * Cin, Cout).astype(jnp.bfloat16))
        in_specs.append(pl.BlockSpec((1, H + 2, W, 3 * Cin),
                                     lambda b: (b, 0, 0, 0)))
    for wr in ws:
        in_specs.append(pl.BlockSpec(wr.shape, lambda b: (0, 0, 0)))
    in_specs.append(pl.BlockSpec((1, Cout), lambda b: (0, 0)))

    args = [*xws, *ws, bias.reshape(1, Cout).astype(jnp.float32)]
    n_out = Cout
    if proj is not None:
        pw, pb = proj
        n_out = pw.shape[-1]
        args.append(pw.astype(jnp.bfloat16))
        args.append(pb.reshape(1, n_out).astype(jnp.float32))
        in_specs.append(pl.BlockSpec(pw.shape, lambda b: (0, 0)))
        in_specs.append(pl.BlockSpec((1, n_out), lambda b: (0, 0)))

    return pl.pallas_call(
        functools.partial(_conv3x3_kernel, n_in=len(inputs),
                          activation=activation, project=proj is not None),
        out_shape=jax.ShapeDtypeStruct((B, H, W, n_out), out_dtype),
        grid_spec=pltpu.PrefetchScalarGridSpec(
            num_scalar_prefetch=0,
            grid=(B,),
            in_specs=in_specs,
            out_specs=pl.BlockSpec((1, H, W, n_out), lambda b: (b, 0, 0, 0)),
        ),
        compiler_params=pltpu.CompilerParams(dimension_semantics=("parallel",)),
    )(*args)


# ---------------------------------------------------------------------------
# Kernel 3: fused encoder stages (4 chained MLP+ReLU, hidden state in VMEM)
# ---------------------------------------------------------------------------
def _encoder_stages_kernel(emb_ref, w_ref, b_ref, o_ref, h_ref):
    @pl.when(pl.program_id(0) == 0)
    def _():
        h_ref[...] = emb_ref[...]
    r = jnp.dot(h_ref[...], w_ref[0], preferred_element_type=jnp.float32)
    r = jnp.maximum(r + b_ref[0], 0.0)
    h_ref[...] = r.astype(h_ref.dtype)
    o_ref[0] = r.astype(o_ref.dtype)


def encoder_stages(emb, stage_w, stage_b):
    """emb: (M, E). Returns stacked per-stage features (4, M, E) in bf16."""
    M, E = emb.shape
    n = len(stage_w)
    w = jnp.stack(stage_w).astype(jnp.bfloat16)            # (n, E, E)
    b = jnp.stack(stage_b).reshape(n, 1, E).astype(jnp.float32)
    return pl.pallas_call(
        _encoder_stages_kernel,
        out_shape=jax.ShapeDtypeStruct((n, M, E), jnp.bfloat16),
        grid_spec=pltpu.PrefetchScalarGridSpec(
            num_scalar_prefetch=0,
            grid=(n,),
            in_specs=[
                pl.BlockSpec((M, E), lambda s: (0, 0)),      # resident tokens
                pl.BlockSpec((1, E, E), lambda s: (s, 0, 0)),
                pl.BlockSpec((1, 1, E), lambda s: (s, 0, 0)),
            ],
            out_specs=pl.BlockSpec((1, M, E), lambda s: (s, 0, 0)),
            scratch_shapes=[pltpu.VMEM((M, E), jnp.bfloat16)],
        ),
        compiler_params=pltpu.CompilerParams(dimension_semantics=("arbitrary",)),
    )(emb.astype(jnp.bfloat16), w, b)


# ---------------------------------------------------------------------------
# Layer helpers (thin JAX glue around the Pallas kernels)
# ---------------------------------------------------------------------------
def deconv2x2_nhwc(x, w, b):
    """ConvTranspose2d(kernel=2, stride=2) semantics. w: [Cin,2,2,Cout]."""
    B, H, W, Cin = x.shape
    Cout = w.shape[-1]
    # bias tiled 4x matches the (dh,dw,Cout)-major layout of w.reshape below.
    y = matmul_bias_act(x.reshape(B * H * W, Cin),
                        w.reshape(Cin, 4 * Cout), jnp.tile(b, 4))
    y = y.reshape(B, H, W, 2, 2, Cout).transpose(0, 1, 3, 2, 4, 5)
    return y.reshape(B, 2 * H, 2 * W, Cout)


def patch_embed_nhwc(x, w, b, p):
    """Non-overlapping patchify + linear projection. w: [p*p*Cin, E]."""
    B, H, W, Cin = x.shape
    Hp, Wp = H // p, W // p
    xr = x.reshape(B, Hp, p, Wp, p, Cin).transpose(0, 1, 3, 2, 4, 5)
    xr = xr.reshape(B * Hp * Wp, p * p * Cin)
    y = matmul_bias_act(xr, w, b)
    return y.reshape(B, Hp * Wp, -1)


# ---------------------------------------------------------------------------
# Model: frozen DummyEncoder + UNETR decoder
# ---------------------------------------------------------------------------
def dummy_encoder(x_nhwc, params):
    """Returns 4 token-feature maps [B, N, E] (ViT-stage stand-ins)."""
    p = params["patch_size"]
    emb = patch_embed_nhwc(x_nhwc, params["pe_w"], params["pe_b"], p)  # (B,N,E)
    B, N, E = emb.shape
    feats = encoder_stages(emb.reshape(B * N, E),
                           params["stage_w"], params["stage_b"])       # (4,BN,E)
    return [feats[i].reshape(B, N, E) for i in range(4)]


def unetr_decoder(x_nhwc, feats, params):
    B, H, W, _ = x_nhwc.shape
    E = feats[0].shape[-1]
    p = params["patch_size"]
    Hp, Wp = H // p, W // p

    z_deep = feats[3].reshape(B, Hp, Wp, E)
    z_mid = feats[1].reshape(B, Hp, Wp, E)

    # stage 1: Hp x Wp -> 2Hp x 2Wp
    d1 = deconv2x2_nhwc(z_deep, params["dec1_w"], params["dec1_b"])     # 64ch
    s1 = deconv2x2_nhwc(z_mid, params["skip1_w"], params["skip1_b"])    # 64ch
    c1 = d1.shape[-1]
    d1 = conv3x3_fused([(d1, params["c1_w"][:, :, :c1, :]),             # == conv(concat([d1,s1]))
                        (s1, params["c1_w"][:, :, c1:, :])],
                       params["c1_b"], "relu")                          # 128 -> 64

    # stage 2: 2Hp x 2Wp -> H x W
    d2 = deconv2x2_nhwc(d1, params["dec2_w"], params["dec2_b"])         # 32ch
    s0 = conv3x3_fused([(x_nhwc, params["skip0_w"])],
                       params["skip0_b"], "relu")                       # in -> 32
    c2 = d2.shape[-1]
    # fused: conv(concat([d2,s0])) + ReLU + final 1x1 projection, fp32 out
    out = conv3x3_fused([(d2, params["c2_w"][:, :, :c2, :]),
                         (s0, params["c2_w"][:, :, c2:, :])],
                        params["c2_b"], "relu",
                        proj=(params["out_w"], params["out_b"]),
                        out_dtype=jnp.float32)
    return out                                                          # (B,H,W,out_dim)


def testunetr_forward(x_nchw, params):
    x = jnp.transpose(x_nchw, (0, 2, 3, 1))          # NCHW -> NHWC
    feats = dummy_encoder(x, params)                 # encoder is frozen
    feats = [jax.lax.stop_gradient(f) for f in feats]
    y = unetr_decoder(x, feats, params)
    return jnp.transpose(y, (0, 3, 1, 2)).astype(x_nchw.dtype)


# ---------------------------------------------------------------------------
# Deterministic parameter construction
# ---------------------------------------------------------------------------
def init_params(key, *, embed_dim, patch_size, input_dim, output_dim):
    ks = iter(jax.random.split(key, 32))
    g = lambda shape, s=0.02: (s * jax.random.normal(next(ks), shape)).astype(jnp.float32)
    z = lambda shape: jnp.zeros(shape, jnp.float32)
    E, p = embed_dim, patch_size
    return {
        "patch_size": p,
        # frozen encoder
        "pe_w": g((p * p * input_dim, E)), "pe_b": z((E,)),
        "stage_w": [g((E, E)) for _ in range(4)],
        "stage_b": [z((E,)) for _ in range(4)],
        # decoder
        "dec1_w": g((E, 2, 2, 64)),  "dec1_b": z((64,)),
        "skip1_w": g((E, 2, 2, 64)), "skip1_b": z((64,)),
        "c1_w": g((3, 3, 128, 64)),  "c1_b": z((64,)),
        "dec2_w": g((64, 2, 2, 32)), "dec2_b": z((32,)),
        "skip0_w": g((3, 3, input_dim, 32)), "skip0_b": z((32,)),
        "c2_w": g((3, 3, 64, 32)),   "c2_b": z((32,)),
        "out_w": g((32, output_dim)), "out_b": z((output_dim,)),
    }


if __name__ == "__main__":
    # Small config consistent with the module signature (scaled down):
    B, C_IN, H, W = 2, 3, 16, 16
    EMBED, PATCH, C_OUT = 32, 4, 3

    key = jax.random.PRNGKey(0)
    k_x, k_p = jax.random.split(key)
    x = jax.random.normal(k_x, (B, C_IN, H, W), dtype=jnp.float32)
    params = init_params(k_p, embed_dim=EMBED, patch_size=PATCH,
                         input_dim=C_IN, output_dim=C_OUT)

    fwd = jax.jit(lambda inp: testunetr_forward(inp, params))
    out = jax.block_until_ready(fwd(x))

    assert out.shape == (B, C_OUT, H, W), out.shape
    assert jnp.all(jnp.isfinite(out))
    print("KERNEL_OK")
</pallas_src>

<mosaic_0001>
module attributes {stable_mosaic.version = 11 : i64} {
  func.func @_mm_kernel(%arg0: i32, %arg1: memref<32x48xbf16, #tpu.memory_space<vmem>>, %arg2: memref<48x32xbf16, #tpu.memory_space<vmem>>, %arg3: memref<1x32xf32, #tpu.memory_space<vmem>>, %arg4: memref<32x32xbf16, #tpu.memory_space<vmem>>) attributes {dimension_semantics = [#tpu.dimension_semantics<parallel>], iteration_bounds = array<i64: 1>, scalar_prefetch = 0 : i64, scratch_operands = 0 : i64, tpu.core_type = #tpu.core_type<tc>, window_params = [{transform_indices = @transform_0, window_bounds = array<i64: 32, 48>}, {pipeline_mode = #tpu.pipeline_mode<synchronous>, transform_indices = @transform_1, window_bounds = array<i64: 48, 32>}, {pipeline_mode = #tpu.pipeline_mode<synchronous>, transform_indices = @transform_2, window_bounds = array<i64: 1, 32>}, {transform_indices = @transform_3, window_bounds = array<i64: 32, 32>}]} {
    %c0 = arith.constant 0 : index
    %c0_0 = arith.constant 0 : index
    %0 = vector.load %arg1[%c0, %c0_0] : memref<32x48xbf16, #tpu.memory_space<vmem>>, vector<32x48xbf16>
    %c0_1 = arith.constant 0 : index
    %c0_2 = arith.constant 0 : index
    %1 = vector.load %arg2[%c0_1, %c0_2] : memref<48x32xbf16, #tpu.memory_space<vmem>>, vector<48x32xbf16>
    %cst = arith.constant dense<0.000000e+00> : vector<32x32xf32>
    %2 = tpu.matmul %0, %1, %cst {dimension_numbers = #tpu.dot_dimension_numbers<[1], [0], [0], [1], [0, 0, 1, 1], [], []>} : vector<32x48xbf16>, vector<48x32xbf16>, vector<32x32xf32> -> vector<32x32xf32>
    %c0_3 = arith.constant 0 : index
    %c0_4 = arith.constant 0 : index
    %3 = vector.load %arg3[%c0_3, %c0_4] : memref<1x32xf32, #tpu.memory_space<vmem>>, vector<1x32xf32>
    %4 = vector.broadcast %3 : vector<1x32xf32> to vector<32x32xf32>
    %5 = arith.addf %2, %4 : vector<32x32xf32>
    %6 = arith.truncf %5 : vector<32x32xf32> to vector<32x32xbf16>
    %c0_5 = arith.constant 0 : index
    %c0_6 = arith.constant 0 : index
    %7 = vector.load %arg4[%c0_5, %c0_6] : memref<32x32xbf16, #tpu.memory_space<vmem>>, vector<32x32xbf16>
    tpu.vector_store %arg4[%c0_5, %c0_6], %6 {strides = array<i32>} : memref<32x32xbf16, #tpu.memory_space<vmem>>, vector<32x32xbf16>,
    return
  }
  func.func @transform_0(%arg0: i32) -> (i32, i32) {
    %c0_i32 = arith.constant 0 : i32
    %c0_i32_0 = arith.constant 0 : i32
    return %arg0, %c0_i32 : i32, i32
  }
  func.func @transform_1(%arg0: i32) -> (i32, i32) {
    %c0_i32 = arith.constant 0 : i32
    %c0_i32_0 = arith.constant 0 : i32
    %c0_i32_1 = arith.constant 0 : i32
    return %c0_i32, %c0_i32_0 : i32, i32
  }
  func.func @transform_2(%arg0: i32) -> (i32, i32) {
    %c0_i32 = arith.constant 0 : i32
    %c0_i32_0 = arith.constant 0 : i32
    %c0_i32_1 = arith.constant 0 : i32
    return %c0_i32, %c0_i32_0 : i32, i32
  }
  func.func @transform_3(%arg0: i32) -> (i32, i32) {
    %c0_i32 = arith.constant 0 : i32
    %c0_i32_0 = arith.constant 0 : i32
    return %arg0, %c0_i32 : i32, i32
  }
}

module attributes {stable_mosaic.version = 11 : i64} {
  func.func @_encoder_stages_kernel(%arg0: i32, %arg1: memref<32x32xbf16, #tpu.memory_space<vmem>>, %arg2: memref<1x32x32xbf16, #tpu.memory_space<vmem>>, %arg3: memref<1x1x32xf32, #tpu.memory_space<vmem>>, %arg4: memref<1x32x32xbf16, #tpu.memory_space<vmem>>, %arg5: memref<32x32xbf16, #tpu.memory_space<vmem>>) attributes {dimension_semantics = [#tpu.dimension_semantics<arbitrary>], iteration_bounds = array<i64: 4>, scalar_prefetch = 0 : i64, scratch_operands = 1 : i64, tpu.core_type = #tpu.core_type<tc>, window_params = [{pipeline_mode = #tpu.pipeline_mode<synchronous>, transform_indices = @transform_0, window_bounds = array<i64: 32, 32>}, {transform_indices = @transform_1, window_bounds = array<i64: 1, 32, 32>}, {transform_indices = @transform_2, window_bounds = array<i64: 1, 1, 32>}, {transform_indices = @transform_3, window_bounds = array<i64: 1, 32, 32>}]} {
    %c0_i32 = arith.constant 0 : i32
    %0 = arith.cmpi eq, %arg0, %c0_i32 : i32
    %1 = arith.extui %0 : i1 to i32
    %c0_i32_0 = arith.constant 0 : i32
    %2 = arith.cmpi ne, %1, %c0_i32_0 : i32
    scf.if %2 {
      %c0_14 = arith.constant 0 : index
      %c0_15 = arith.constant 0 : index
      %19 = vector.load %arg1[%c0_14, %c0_15] : memref<32x32xbf16, #tpu.memory_space<vmem>>, vector<32x32xbf16>
      %c0_16 = arith.constant 0 : index
      %c0_17 = arith.constant 0 : index
      %20 = vector.load %arg5[%c0_16, %c0_17] : memref<32x32xbf16, #tpu.memory_space<vmem>>, vector<32x32xbf16>
      tpu.vector_store %arg5[%c0_16, %c0_17], %19 {strides = array<i32>} : memref<32x32xbf16, #tpu.memory_space<vmem>>, vector<32x32xbf16>,
    } else {
    }
    %c0 = arith.constant 0 : index
    %c0_1 = arith.constant 0 : index
    %3 = vector.load %arg5[%c0, %c0_1] : memref<32x32xbf16, #tpu.memory_space<vmem>>, vector<32x32xbf16>
    %c0_2 = arith.constant 0 : index
    %c0_3 = arith.constant 0 : index
    %c0_4 = arith.constant 0 : index
    %4 = vector.load %arg2[%c0_2, %c0_3, %c0_4] : memref<1x32x32xbf16, #tpu.memory_space<vmem>>, vector<1x32x32xbf16>
    %5 = vector.shape_cast %4 : vector<1x32x32xbf16> to vector<32x32xbf16>
    %cst = arith.constant dense<0.000000e+00> : vector<32x32xf32>
    %6 = tpu.matmul %3, %5, %cst {dimension_numbers = #tpu.dot_dimension_numbers<[1], [0], [0], [1], [0, 0, 1, 1], [], []>} : vector<32x32xbf16>, vector<32x32xbf16>, vector<32x32xf32> -> vector<32x32xf32>
    %c0_5 = arith.constant 0 : index
    %c0_6 = arith.constant 0 : index
    %c0_7 = arith.constant 0 : index
    %7 = vector.load %arg3[%c0_5, %c0_6, %c0_7] : memref<1x1x32xf32, #tpu.memory_space<vmem>>, vector<1x1x32xf32>
    %8 = vector.shape_cast %7 : vector<1x1x32xf32> to vector<1x32xf32>
    %9 = vector.broadcast %8 : vector<1x32xf32> to vector<32x32xf32>
    %10 = arith.addf %6, %9 : vector<32x32xf32>
    %cst_8 = arith.constant 0.000000e+00 : f32
    %11 = vector.broadcast %cst_8 : f32 to vector<32x32xf32>
    %12 = arith.maximumf %10, %11 : vector<32x32xf32>
    %13 = arith.truncf %12 : vector<32x32xf32> to vector<32x32xbf16>
    %c0_9 = arith.constant 0 : index
    %c0_10 = arith.constant 0 : index
    %14 = vector.load %arg5[%c0_9, %c0_10] : memref<32x32xbf16, #tpu.memory_space<vmem>>, vector<32x32xbf16>
    tpu.vector_store %arg5[%c0_9, %c0_10], %13 {strides = array<i32>} : memref<32x32xbf16, #tpu.memory_space<vmem>>, vector<32x32xbf16>,
    %15 = arith.truncf %12 : vector<32x32xf32> to vector<32x32xbf16>
    %c0_11 = arith.constant 0 : index
    %c0_12 = arith.constant 0 : index
    %c0_13 = arith.constant 0 : index
    %16 = vector.load %arg4[%c0_11, %c0_12, %c0_13] : memref<1x32x32xbf16, #tpu.memory_space<vmem>>, vector<1x32x32xbf16>
    %17 = vector.shape_cast %16 : vector<1x32x32xbf16> to vector<32x32xbf16>
    %18 = vector.shape_cast %15 : vector<32x32xbf16> to vector<1x32x32xbf16>
    tpu.vector_store %arg4[%c0_11, %c0_12, %c0_13], %18 {strides = array<i32>} : memref<1x32x32xbf16, #tpu.memory_space<vmem>>, vector<1x32x32xbf16>,
    return
  }
  func.func @transform_0(%arg0: i32) -> (i32, i32) {
    %c0_i32 = arith.constant 0 : i32
    %c0_i32_0 = arith.constant 0 : i32
    %c0_i32_1 = arith.constant 0 : i32
    return %c0_i32, %c0_i32_0 : i32, i32
  }
  func.func @transform_1(%arg0: i32) -> (i32, i32, i32) {
    %c0_i32 = arith.constant 0 : i32
    %c0_i32_0 = arith.constant 0 : i32
    %c0_i32_1 = arith.constant 0 : i32
    return %arg0, %c0_i32, %c0_i32_0 : i32, i32, i32
  }
  func.func @transform_2(%arg0: i32) -> (i32, i32, i32) {
    %c0_i32 = arith.constant 0 : i32
    %c0_i32_0 = arith.constant 0 : i32
    %c0_i32_1 = arith.constant 0 : i32
    return %arg0, %c0_i32, %c0_i32_0 : i32, i32, i32
  }
  func.func @transform_3(%arg0: i32) -> (i32, i32, i32) {
    %c0_i32 = arith.constant 0 : i32
    %c0_i32_0 = arith.constant 0 : i32
    %c0_i32_1 = arith.constant 0 : i32
    return %arg0, %c0_i32, %c0_i32_0 : i32, i32, i32
  }
}

module attributes {stable_mosaic.version = 11 : i64} {
  func.func @_mm_kernel(%arg0: i32, %arg1: memref<32x32xbf16, #tpu.memory_space<vmem>>, %arg2: memref<32x256xbf16, #tpu.memory_space<vmem>>, %arg3: memref<1x256xf32, #tpu.memory_space<vmem>>, %arg4: memref<32x256xbf16, #tpu.memory_space<vmem>>) attributes {dimension_semantics = [#tpu.dimension_semantics<parallel>], iteration_bounds = array<i64: 1>, scalar_prefetch = 0 : i64, scratch_operands = 0 : i64, tpu.core_type = #tpu.core_type<tc>, window_params = [{transform_indices = @transform_0, window_bounds = array<i64: 32, 32>}, {pipeline_mode = #tpu.pipeline_mode<synchronous>, transform_indices = @transform_1, window_bounds = array<i64: 32, 256>}, {pipeline_mode = #tpu.pipeline_mode<synchronous>, transform_indices = @transform_2, window_bounds = array<i64: 1, 256>}, {transform_indices = @transform_3, window_bounds = array<i64: 32, 256>}]} {
    %c0 = arith.constant 0 : index
    %c0_0 = arith.constant 0 : index
    %0 = vector.load %arg1[%c0, %c0_0] : memref<32x32xbf16, #tpu.memory_space<vmem>>, vector<32x32xbf16>
    %c0_1 = arith.constant 0 : index
    %c0_2 = arith.constant 0 : index
    %1 = vector.load %arg2[%c0_1, %c0_2] : memref<32x256xbf16, #tpu.memory_space<vmem>>, vector<32x256xbf16>
    %cst = arith.constant dense<0.000000e+00> : vector<32x256xf32>
    %2 = tpu.matmul %0, %1, %cst {dimension_numbers = #tpu.dot_dimension_numbers<[1], [0], [0], [1], [0, 0, 1, 1], [], []>} : vector<32x32xbf16>, vector<32x256xbf16>, vector<32x256xf32> -> vector<32x256xf32>
    %c0_3 = arith.constant 0 : index
    %c0_4 = arith.constant 0 : index
    %3 = vector.load %arg3[%c0_3, %c0_4] : memref<1x256xf32, #tpu.memory_space<vmem>>, vector<1x256xf32>
    %4 = vector.broadcast %3 : vector<1x256xf32> to vector<32x256xf32>
    %5 = arith.addf %2, %4 : vector<32x256xf32>
    %6 = arith.truncf %5 : vector<32x256xf32> to vector<32x256xbf16>
    %c0_5 = arith.constant 0 : index
    %c0_6 = arith.constant 0 : index
    %7 = vector.load %arg4[%c0_5, %c0_6] : memref<32x256xbf16, #tpu.memory_space<vmem>>, vector<32x256xbf16>
    tpu.vector_store %arg4[%c0_5, %c0_6], %6 {strides = array<i32>} : memref<32x256xbf16, #tpu.memory_space<vmem>>, vector<32x256xbf16>,
    return
  }
  func.func @transform_0(%arg0: i32) -> (i32, i32) {
    %c0_i32 = arith.constant 0 : i32
    %c0_i32_0 = arith.constant 0 : i32
    return %arg0, %c0_i32 : i32, i32
  }
  func.func @transform_1(%arg0: i32) -> (i32, i32) {
    %c0_i32 = arith.constant 0 : i32
    %c0_i32_0 = arith.constant 0 : i32
    %c0_i32_1 = arith.constant 0 : i32
    return %c0_i32, %c0_i32_0 : i32, i32
  }
  func.func @transform_2(%arg0: i32) -> (i32, i32) {
    %c0_i32 = arith.constant 0 : i32
    %c0_i32_0 = arith.constant 0 : i32
    %c0_i32_1 = arith.constant 0 : i32
    return %c0_i32, %c0_i32_0 : i32, i32
  }
  func.func @transform_3(%arg0: i32) -> (i32, i32) {
    %c0_i32 = arith.constant 0 : i32
    %c0_i32_0 = arith.constant 0 : i32
    return %arg0, %c0_i32 : i32, i32
  }
}

module attributes {stable_mosaic.version = 11 : i64} {
  func.func @_conv3x3_kernel(%arg0: i32, %arg1: memref<1x10x8x192xbf16, #tpu.memory_space<vmem>>, %arg2: memref<1x10x8x192xbf16, #tpu.memory_space<vmem>>, %arg3: memref<3x192x64xbf16, #tpu.memory_space<vmem>>, %arg4: memref<3x192x64xbf16, #tpu.memory_space<vmem>>, %arg5: memref<1x64xf32, #tpu.memory_space<vmem>>, %arg6: memref<1x8x8x64xbf16, #tpu.memory_space<vmem>>) attributes {dimension_semantics = [#tpu.dimension_semantics<parallel>], iteration_bounds = array<i64: 2>, scalar_prefetch = 0 : i64, scratch_operands = 0 : i64, tpu.core_type = #tpu.core_type<tc>, window_params = [{transform_indices = @transform_0, window_bounds = array<i64: 1, 10, 8, 192>}, {transform_indices = @transform_1, window_bounds = array<i64: 1, 10, 8, 192>}, {pipeline_mode = #tpu.pipeline_mode<synchronous>, transform_indices = @transform_2, window_bounds = array<i64: 3, 192, 64>}, {pipeline_mode = #tpu.pipeline_mode<synchronous>, transform_indices = @transform_3, window_bounds = array<i64: 3, 192, 64>}, {pipeline_mode = #tpu.pipeline_mode<synchronous>, transform_indices = @transform_4, window_bounds = array<i64: 1, 64>}, {transform_indices = @transform_5, window_bounds = array<i64: 1, 8, 8, 64>}]} {
    %cst = arith.constant 0.000000e+00 : f32
    %0 = vector.broadcast %cst : f32 to vector<64x64xf32>
    %c0 = arith.constant 0 : index
    %c0_0 = arith.constant 0 : index
    %c0_1 = arith.constant 0 : index
    %c0_2 = arith.constant 0 : index
    %1 = vector.load %arg1[%c0, %c0_0, %c0_1, %c0_2] : memref<1x10x8x192xbf16, #tpu.memory_space<vmem>>, vector<1x10x8x192xbf16>
    %2 = vector.shape_cast %1 : vector<1x10x8x192xbf16> to vector<10x8x192xbf16>
    %3 = vector.extract_strided_slice %2 {offsets = [0, 0, 0], sizes = [8, 8, 192], strides = [1, 1, 1]} : vector<10x8x192xbf16> to vector<8x8x192xbf16>
    %4 = vector.shape_cast %3 : vector<8x8x192xbf16> to vector<64x192xbf16>
    %c0_3 = arith.constant 0 : index
    %c0_4 = arith.constant 0 : index
    %c0_5 = arith.constant 0 : index
    %5 = vector.load %arg3[%c0_3, %c0_4, %c0_5] : memref<3x192x64xbf16, #tpu.memory_space<vmem>>, vector<1x192x64xbf16>
    %6 = vector.shape_cast %5 : vector<1x192x64xbf16> to vector<192x64xbf16>
    %cst_6 = arith.constant dense<0.000000e+00> : vector<64x64xf32>
    %7 = tpu.matmul %4, %6, %cst_6 {dimension_numbers = #tpu.dot_dimension_numbers<[1], [0], [0], [1], [0, 0, 1, 1], [], []>} : vector<64x192xbf16>, vector<192x64xbf16>, vector<64x64xf32> -> vector<64x64xf32>
    %8 = arith.addf %0, %7 : vector<64x64xf32>
    %9 = vector.extract_strided_slice %2 {offsets = [1, 0, 0], sizes = [8, 8, 192], strides = [1, 1, 1]} : vector<10x8x192xbf16> to vector<8x8x192xbf16>
    %10 = vector.shape_cast %9 : vector<8x8x192xbf16> to vector<64x192xbf16>
    %c1 = arith.constant 1 : index
    %c0_7 = arith.constant 0 : index
    %c0_8 = arith.constant 0 : index
    %11 = vector.load %arg3[%c1, %c0_7, %c0_8] : memref<3x192x64xbf16, #tpu.memory_space<vmem>>, vector<1x192x64xbf16>
    %12 = vector.shape_cast %11 : vector<1x192x64xbf16> to vector<192x64xbf16>
    %cst_9 = arith.constant dense<0.000000e+00> : vector<64x64xf32>
    %13 = tpu.matmul %10, %12, %cst_9 {dimension_numbers = #tpu.dot_dimension_numbers<[1], [0], [0], [1], [0, 0, 1, 1], [], []>} : vector<64x192xbf16>, vector<192x64xbf16>, vector<64x64xf32> -> vector<64x64xf32>
    %14 = arith.addf %8, %13 : vector<64x64xf32>
    %15 = vector.extract_strided_slice %2 {offsets = [2, 0, 0], sizes = [8, 8, 192], strides = [1, 1, 1]} : vector<10x8x192xbf16> to vector<8x8x192xbf16>
    %16 = vector.shape_cast %15 : vector<8x8x192xbf16> to vector<64x192xbf16>
    %c2 = arith.constant 2 : index
    %c0_10 = arith.constant 0 : index
    %c0_11 = arith.constant 0 : index
    %17 = vector.load %arg3[%c2, %c0_10, %c0_11] : memref<3x192x64xbf16, #tpu.memory_space<vmem>>, vector<1x192x64xbf16>
    %18 = vector.shape_cast %17 : vector<1x192x64xbf16> to vector<192x64xbf16>
    %cst_12 = arith.constant dense<0.000000e+00> : vector<64x64xf32>
    %19 = tpu.matmul %16, %18, %cst_12 {dimension_numbers = #tpu.dot_dimension_numbers<[1], [0], [0], [1], [0, 0, 1, 1], [], []>} : vector<64x192xbf16>, vector<192x64xbf16>, vector<64x64xf32> -> vector<64x64xf32>
    %20 = arith.addf %14, %19 : vector<64x64xf32>
    %c0_13 = arith.constant 0 : index
    %c0_14 = arith.constant 0 : index
    %c0_15 = arith.constant 0 : index
    %c0_16 = arith.constant 0 : index
    %21 = vector.load %arg2[%c0_13, %c0_14, %c0_15, %c0_16] : memref<1x10x8x192xbf16, #tpu.memory_space<vmem>>, vector<1x10x8x192xbf16>
    %22 = vector.shape_cast %21 : vector<1x10x8x192xbf16> to vector<10x8x192xbf16>
    %23 = vector.extract_strided_slice %22 {offsets = [0, 0, 0], sizes = [8, 8, 192], strides = [1, 1, 1]} : vector<10x8x192xbf16> to vector<8x8x192xbf16>
    %24 = vector.shape_cast %23 : vector<8x8x192xbf16> to vector<64x192xbf16>
    %c0_17 = arith.constant 0 : index
    %c0_18 = arith.constant 0 : index
    %c0_19 = arith.constant 0 : index
    %25 = vector.load %arg4[%c0_17, %c0_18, %c0_19] : memref<3x192x64xbf16, #tpu.memory_space<vmem>>, vector<1x192x64xbf16>
    %26 = vector.shape_cast %25 : vector<1x192x64xbf16> to vector<192x64xbf16>
    %cst_20 = arith.constant dense<0.000000e+00> : vector<64x64xf32>
    %27 = tpu.matmul %24, %26, %cst_20 {dimension_numbers = #tpu.dot_dimension_numbers<[1], [0], [0], [1], [0, 0, 1, 1], [], []>} : vector<64x192xbf16>, vector<192x64xbf16>, vector<64x64xf32> -> vector<64x64xf32>
    %28 = arith.addf %20, %27 : vector<64x64xf32>
    %29 = vector.extract_strided_slice %22 {offsets = [1, 0, 0], sizes = [8, 8, 192], strides = [1, 1, 1]} : vector<10x8x192xbf16> to vector<8x8x192xbf16>
    %30 = vector.shape_cast %29 : vector<8x8x192xbf16> to vector<64x192xbf16>
    %c1_21 = arith.constant 1 : index
    %c0_22 = arith.constant 0 : index
    %c0_23 = arith.constant 0 : index
    %31 = vector.load %arg4[%c1_21, %c0_22, %c0_23] : memref<3x192x64xbf16, #tpu.memory_space<vmem>>, vector<1x192x64xbf16>
    %32 = vector.shape_cast %31 : vector<1x192x64xbf16> to vector<192x64xbf16>
    %cst_24 = arith.constant dense<0.000000e+00> : vector<64x64xf32>
    %33 = tpu.matmul %30, %32, %cst_24 {dimension_numbers = #tpu.dot_dimension_numbers<[1], [0], [0], [1], [0, 0, 1, 1], [], []>} : vector<64x192xbf16>, vector<192x64xbf16>, vector<64x64xf32> -> vector<64x64xf32>
    %34 = arith.addf %28, %33 : vector<64x64xf32>
    %35 = vector.extract_strided_slice %22 {offsets = [2, 0, 0], sizes = [8, 8, 192], strides = [1, 1, 1]} : vector<10x8x192xbf16> to vector<8x8x192xbf16>
    %36 = vector.shape_cast %35 : vector<8x8x192xbf16> to vector<64x192xbf16>
    %c2_25 = arith.constant 2 : index
    %c0_26 = arith.constant 0 : index
    %c0_27 = arith.constant 0 : index
    %37 = vector.load %arg4[%c2_25, %c0_26, %c0_27] : memref<3x192x64xbf16, #tpu.memory_space<vmem>>, vector<1x192x64xbf16>
    %38 = vector.shape_cast %37 : vector<1x192x64xbf16> to vector<192x64xbf16>
    %cst_28 = arith.constant dense<0.000000e+00> : vector<64x64xf32>
    %39 = tpu.matmul %36, %38, %cst_28 {dimension_numbers = #tpu.dot_dimension_numbers<[1], [0], [0], [1], [0, 0, 1, 1], [], []>} : vector<64x192xbf16>, vector<192x64xbf16>, vector<64x64xf32> -> vector<64x64xf32>
    %40 = arith.addf %34, %39 : vector<64x64xf32>
    %c0_29 = arith.constant 0 : index
    %c0_30 = arith.constant 0 : index
    %41 = vector.load %arg5[%c0_29, %c0_30] : memref<1x64xf32, #tpu.memory_space<vmem>>, vector<1x64xf32>
    %42 = vector.broadcast %41 : vector<1x64xf32> to vector<64x64xf32>
    %43 = arith.addf %40, %42 : vector<64x64xf32>
    %cst_31 = arith.constant 0.000000e+00 : f32
    %44 = vector.broadcast %cst_31 : f32 to vector<64x64xf32>
    %45 = arith.maximumf %43, %44 : vector<64x64xf32>
    %46 = vector.shape_cast %45 : vector<64x64xf32> to vector<8x8x64xf32>
    %47 = arith.truncf %46 : vector<8x8x64xf32> to vector<8x8x64xbf16>
    %c0_32 = arith.constant 0 : index
    %c0_33 = arith.constant 0 : index
    %c0_34 = arith.constant 0 : index
    %c0_35 = arith.constant 0 : index
    %48 = vector.load %arg6[%c0_32, %c0_33, %c0_34, %c0_35] : memref<1x8x8x64xbf16, #tpu.memory_space<vmem>>, vector<1x8x8x64xbf16>
    %49 = vector.shape_cast %48 : vector<1x8x8x64xbf16> to vector<8x8x64xbf16>
    %50 = vector.shape_cast %47 : vector<8x8x64xbf16> to vector<1x8x8x64xbf16>
    tpu.vector_store %arg6[%c0_32, %c0_33, %c0_34, %c0_35], %50 {strides = array<i32>} : memref<1x8x8x64xbf16, #tpu.memory_space<vmem>>, vector<1x8x8x64xbf16>,
    return
  }
  func.func @transform_0(%arg0: i32) -> (i32, i32, i32, i32) {
    %c0_i32 = arith.constant 0 : i32
    %c0_i32_0 = arith.constant 0 : i32
    %c0_i32_1 = arith.constant 0 : i32
    %c0_i32_2 = arith.constant 0 : i32
    return %arg0, %c0_i32, %c0_i32_0, %c0_i32_1 : i32, i32, i32, i32
  }
  func.func @transform_1(%arg0: i32) -> (i32, i32, i32, i32) {
    %c0_i32 = arith.constant 0 : i32
    %c0_i32_0 = arith.constant 0 : i32
    %c0_i32_1 = arith.constant 0 : i32
    %c0_i32_2 = arith.constant 0 : i32
    return %arg0, %c0_i32, %c0_i32_0, %c0_i32_1 : i32, i32, i32, i32
  }
  func.func @transform_2(%arg0: i32) -> (i32, i32, i32) {
    %c0_i32 = arith.constant 0 : i32
    %c0_i32_0 = arith.constant 0 : i32
    %c0_i32_1 = arith.constant 0 : i32
    %c0_i32_2 = arith.constant 0 : i32
    return %c0_i32, %c0_i32_0, %c0_i32_1 : i32, i32, i32
  }
  func.func @transform_3(%arg0: i32) -> (i32, i32, i32) {
    %c0_i32 = arith.constant 0 : i32
    %c0_i32_0 = arith.constant 0 : i32
    %c0_i32_1 = arith.constant 0 : i32
    %c0_i32_2 = arith.constant 0 : i32
    return %c0_i32, %c0_i32_0, %c0_i32_1 : i32, i32, i32
  }
  func.func @transform_4(%arg0: i32) -> (i32, i32) {
    %c0_i32 = arith.constant 0 : i32
    %c0_i32_0 = arith.constant 0 : i32
    %c0_i32_1 = arith.constant 0 : i32
    return %c0_i32, %c0_i32_0 : i32, i32
  }
  func.func @transform_5(%arg0: i32) -> (i32, i32, i32, i32) {
    %c0_i32 = arith.constant 0 : i32
    %c0_i32_0 = arith.constant 0 : i32
    %c0_i32_1 = arith.constant 0 : i32
    %c0_i32_2 = arith.constant 0 : i32
    return %arg0, %c0_i32, %c0_i32_0, %c0_i32_1 : i32, i32, i32, i32
  }
}

module attributes {stable_mosaic.version = 11 : i64} {
  func.func @_mm_kernel(%arg0: i32, %arg1: memref<128x64xbf16, #tpu.memory_space<vmem>>, %arg2: memref<64x128xbf16, #tpu.memory_space<vmem>>, %arg3: memref<1x128xf32, #tpu.memory_space<vmem>>, %arg4: memref<128x128xbf16, #tpu.memory_space<vmem>>) attributes {dimension_semantics = [#tpu.dimension_semantics<parallel>], iteration_bounds = array<i64: 1>, scalar_prefetch = 0 : i64, scratch_operands = 0 : i64, tpu.core_type = #tpu.core_type<tc>, window_params = [{transform_indices = @transform_0, window_bounds = array<i64: 128, 64>}, {pipeline_mode = #tpu.pipeline_mode<synchronous>, transform_indices = @transform_1, window_bounds = array<i64: 64, 128>}, {pipeline_mode = #tpu.pipeline_mode<synchronous>, transform_indices = @transform_2, window_bounds = array<i64: 1, 128>}, {transform_indices = @transform_3, window_bounds = array<i64: 128, 128>}]} {
    %c0 = arith.constant 0 : index
    %c0_0 = arith.constant 0 : index
    %0 = vector.load %arg1[%c0, %c0_0] : memref<128x64xbf16, #tpu.memory_space<vmem>>, vector<128x64xbf16>
    %c0_1 = arith.constant 0 : index
    %c0_2 = arith.constant 0 : index
    %1 = vector.load %arg2[%c0_1, %c0_2] : memref<64x128xbf16, #tpu.memory_space<vmem>>, vector<64x128xbf16>
    %cst = arith.constant dense<0.000000e+00> : vector<128x128xf32>
    %2 = tpu.matmul %0, %1, %cst {dimension_numbers = #tpu.dot_dimension_numbers<[1], [0], [0], [1], [0, 0, 1, 1], [], []>} : vector<128x64xbf16>, vector<64x128xbf16>, vector<128x128xf32> -> vector<128x128xf32>
    %c0_3 = arith.constant 0 : index
    %c0_4 = arith.constant 0 : index
    %3 = vector.load %arg3[%c0_3, %c0_4] : memref<1x128xf32, #tpu.memory_space<vmem>>, vector<1x128xf32>
    %4 = vector.broadcast %3 : vector<1x128xf32> to vector<128x128xf32>
    %5 = arith.addf %2, %4 : vector<128x128xf32>
    %6 = arith.truncf %5 : vector<128x128xf32> to vector<128x128xbf16>
    %c0_5 = arith.constant 0 : index
    %c0_6 = arith.constant 0 : index
    %7 = vector.load %arg4[%c0_5, %c0_6] : memref<128x128xbf16, #tpu.memory_space<vmem>>, vector<128x128xbf16>
    tpu.vector_store %arg4[%c0_5, %c0_6], %6 {strides = array<i32>} : memref<128x128xbf16, #tpu.memory_space<vmem>>, vector<128x128xbf16>,
    return
  }
  func.func @transform_0(%arg0: i32) -> (i32, i32) {
    %c0_i32 = arith.constant 0 : i32
    %c0_i32_0 = arith.constant 0 : i32
    return %arg0, %c0_i32 : i32, i32
  }
  func.func @transform_1(%arg0: i32) -> (i32, i32) {
    %c0_i32 = arith.constant 0 : i32
    %c0_i32_0 = arith.constant 0 : i32
    %c0_i32_1 = arith.constant 0 : i32
    return %c0_i32, %c0_i32_0 : i32, i32
  }
  func.func @transform_2(%arg0: i32) -> (i32, i32) {
    %c0_i32 = arith.constant 0 : i32
    %c0_i32_0 = arith.constant 0 : i32
    %c0_i32_1 = arith.constant 0 : i32
    return %c0_i32, %c0_i32_0 : i32, i32
  }
  func.func @transform_3(%arg0: i32) -> (i32, i32) {
    %c0_i32 = arith.constant 0 : i32
    %c0_i32_0 = arith.constant 0 : i32
    return %arg0, %c0_i32 : i32, i32
  }
}

module attributes {stable_mosaic.version = 11 : i64} {
  func.func @_conv3x3_kernel(%arg0: i32, %arg1: memref<1x18x16x9xbf16, #tpu.memory_space<vmem>>, %arg2: memref<3x9x32xbf16, #tpu.memory_space<vmem>>, %arg3: memref<1x32xf32, #tpu.memory_space<vmem>>, %arg4: memref<1x16x16x32xbf16, #tpu.memory_space<vmem>>) attributes {dimension_semantics = [#tpu.dimension_semantics<parallel>], iteration_bounds = array<i64: 2>, scalar_prefetch = 0 : i64, scratch_operands = 0 : i64, tpu.core_type = #tpu.core_type<tc>, window_params = [{transform_indices = @transform_0, window_bounds = array<i64: 1, 18, 16, 9>}, {pipeline_mode = #tpu.pipeline_mode<synchronous>, transform_indices = @transform_1, window_bounds = array<i64: 3, 9, 32>}, {pipeline_mode = #tpu.pipeline_mode<synchronous>, transform_indices = @transform_2, window_bounds = array<i64: 1, 32>}, {transform_indices = @transform_3, window_bounds = array<i64: 1, 16, 16, 32>}]} {
    %cst = arith.constant 0.000000e+00 : f32
    %0 = vector.broadcast %cst : f32 to vector<256x32xf32>
    %c0 = arith.constant 0 : index
    %c0_0 = arith.constant 0 : index
    %c0_1 = arith.constant 0 : index
    %c0_2 = arith.constant 0 : index
    %1 = vector.load %arg1[%c0, %c0_0, %c0_1, %c0_2] : memref<1x18x16x9xbf16, #tpu.memory_space<vmem>>, vector<1x18x16x9xbf16>
    %2 = vector.shape_cast %1 : vector<1x18x16x9xbf16> to vector<18x16x9xbf16>
    %3 = vector.extract_strided_slice %2 {offsets = [0, 0, 0], sizes = [16, 16, 9], strides = [1, 1, 1]} : vector<18x16x9xbf16> to vector<16x16x9xbf16>
    %4 = vector.shape_cast %3 : vector<16x16x9xbf16> to vector<256x9xbf16>
    %c0_3 = arith.constant 0 : index
    %c0_4 = arith.constant 0 : index
    %c0_5 = arith.constant 0 : index
    %5 = vector.load %arg2[%c0_3, %c0_4, %c0_5] : memref<3x9x32xbf16, #tpu.memory_space<vmem>>, vector<1x9x32xbf16>
    %6 = vector.shape_cast %5 : vector<1x9x32xbf16> to vector<9x32xbf16>
    %cst_6 = arith.constant dense<0.000000e+00> : vector<256x32xf32>
    %7 = tpu.matmul %4, %6, %cst_6 {dimension_numbers = #tpu.dot_dimension_numbers<[1], [0], [0], [1], [0, 0, 1, 1], [], []>} : vector<256x9xbf16>, vector<9x32xbf16>, vector<256x32xf32> -> vector<256x32xf32>
    %8 = arith.addf %0, %7 : vector<256x32xf32>
    %9 = vector.extract_strided_slice %2 {offsets = [1, 0, 0], sizes = [16, 16, 9], strides = [1, 1, 1]} : vector<18x16x9xbf16> to vector<16x16x9xbf16>
    %10 = vector.shape_cast %9 : vector<16x16x9xbf16> to vector<256x9xbf16>
    %c1 = arith.constant 1 : index
    %c0_7 = arith.constant 0 : index
    %c0_8 = arith.constant 0 : index
    %11 = vector.load %arg2[%c1, %c0_7, %c0_8] : memref<3x9x32xbf16, #tpu.memory_space<vmem>>, vector<1x9x32xbf16>
    %12 = vector.shape_cast %11 : vector<1x9x32xbf16> to vector<9x32xbf16>
    %cst_9 = arith.constant dense<0.000000e+00> : vector<256x32xf32>
    %13 = tpu.matmul %10, %12, %cst_9 {dimension_numbers = #tpu.dot_dimension_numbers<[1], [0], [0], [1], [0, 0, 1, 1], [], []>} : vector<256x9xbf16>, vector<9x32xbf16>, vector<256x32xf32> -> vector<256x32xf32>
    %14 = arith.addf %8, %13 : vector<256x32xf32>
    %15 = vector.extract_strided_slice %2 {offsets = [2, 0, 0], sizes = [16, 16, 9], strides = [1, 1, 1]} : vector<18x16x9xbf16> to vector<16x16x9xbf16>
    %16 = vector.shape_cast %15 : vector<16x16x9xbf16> to vector<256x9xbf16>
    %c2 = arith.constant 2 : index
    %c0_10 = arith.constant 0 : index
    %c0_11 = arith.constant 0 : index
    %17 = vector.load %arg2[%c2, %c0_10, %c0_11] : memref<3x9x32xbf16, #tpu.memory_space<vmem>>, vector<1x9x32xbf16>
    %18 = vector.shape_cast %17 : vector<1x9x32xbf16> to vector<9x32xbf16>
    %cst_12 = arith.constant dense<0.000000e+00> : vector<256x32xf32>
    %19 = tpu.matmul %16, %18, %cst_12 {dimension_numbers = #tpu.dot_dimension_numbers<[1], [0], [0], [1], [0, 0, 1, 1], [], []>} : vector<256x9xbf16>, vector<9x32xbf16>, vector<256x32xf32> -> vector<256x32xf32>
    %20 = arith.addf %14, %19 : vector<256x32xf32>
    %c0_13 = arith.constant 0 : index
    %c0_14 = arith.constant 0 : index
    %21 = vector.load %arg3[%c0_13, %c0_14] : memref<1x32xf32, #tpu.memory_space<vmem>>, vector<1x32xf32>
    %22 = vector.broadcast %21 : vector<1x32xf32> to vector<256x32xf32>
    %23 = arith.addf %20, %22 : vector<256x32xf32>
    %cst_15 = arith.constant 0.000000e+00 : f32
    %24 = vector.broadcast %cst_15 : f32 to vector<256x32xf32>
    %25 = arith.maximumf %23, %24 : vector<256x32xf32>
    %26 = vector.shape_cast %25 : vector<256x32xf32> to vector<16x16x32xf32>
    %27 = arith.truncf %26 : vector<16x16x32xf32> to vector<16x16x32xbf16>
    %c0_16 = arith.constant 0 : index
    %c0_17 = arith.constant 0 : index
    %c0_18 = arith.constant 0 : index
    %c0_19 = arith.constant 0 : index
    %28 = vector.load %arg4[%c0_16, %c0_17, %c0_18, %c0_19] : memref<1x16x16x32xbf16, #tpu.memory_space<vmem>>, vector<1x16x16x32xbf16>
    %29 = vector.shape_cast %28 : vector<1x16x16x32xbf16> to vector<16x16x32xbf16>
    %30 = vector.shape_cast %27 : vector<16x16x32xbf16> to vector<1x16x16x32xbf16>
    tpu.vector_store %arg4[%c0_16, %c0_17, %c0_18, %c0_19], %30 {strides = array<i32>} : memref<1x16x16x32xbf16, #tpu.memory_space<vmem>>, vector<1x16x16x32xbf16>,
    return
  }
  func.func @transform_0(%arg0: i32) -> (i32, i32, i32, i32) {
    %c0_i32 = arith.constant 0 : i32
    %c0_i32_0 = arith.constant 0 : i32
    %c0_i32_1 = arith.constant 0 : i32
    %c0_i32_2 = arith.constant 0 : i32
    return %arg0, %c0_i32, %c0_i32_0, %c0_i32_1 : i32, i32, i32, i32
  }
  func.func @transform_1(%arg0: i32) -> (i32, i32, i32) {
    %c0_i32 = arith.constant 0 : i32
    %c0_i32_0 = arith.constant 0 : i32
    %c0_i32_1 = arith.constant 0 : i32
    %c0_i32_2 = arith.constant 0 : i32
    return %c0_i32, %c0_i32_0, %c0_i32_1 : i32, i32, i32
  }
  func.func @transform_2(%arg0: i32) -> (i32, i32) {
    %c0_i32 = arith.constant 0 : i32
    %c0_i32_0 = arith.constant 0 : i32
    %c0_i32_1 = arith.constant 0 : i32
    return %c0_i32, %c0_i32_0 : i32, i32
  }
  func.func @transform_3(%arg0: i32) -> (i32, i32, i32, i32) {
    %c0_i32 = arith.constant 0 : i32
    %c0_i32_0 = arith.constant 0 : i32
    %c0_i32_1 = arith.constant 0 : i32
    %c0_i32_2 = arith.constant 0 : i32
    return %arg0, %c0_i32, %c0_i32_0, %c0_i32_1 : i32, i32, i32, i32
  }
}

module attributes {stable_mosaic.version = 11 : i64} {
  func.func @_conv3x3_kernel(%arg0: i32, %arg1: memref<1x18x16x96xbf16, #tpu.memory_space<vmem>>, %arg2: memref<1x18x16x96xbf16, #tpu.memory_space<vmem>>, %arg3: memref<3x96x32xbf16, #tpu.memory_space<vmem>>, %arg4: memref<3x96x32xbf16, #tpu.memory_space<vmem>>, %arg5: memref<1x32xf32, #tpu.memory_space<vmem>>, %arg6: memref<32x3xbf16, #tpu.memory_space<vmem>>, %arg7: memref<1x3xf32, #tpu.memory_space<vmem>>, %arg8: memref<1x16x16x3xf32, #tpu.memory_space<vmem>>) attributes {dimension_semantics = [#tpu.dimension_semantics<parallel>], iteration_bounds = array<i64: 2>, scalar_prefetch = 0 : i64, scratch_operands = 0 : i64, tpu.core_type = #tpu.core_type<tc>, window_params = [{transform_indices = @transform_0, window_bounds = array<i64: 1, 18, 16, 96>}, {transform_indices = @transform_1, window_bounds = array<i64: 1, 18, 16, 96>}, {pipeline_mode = #tpu.pipeline_mode<synchronous>, transform_indices = @transform_2, window_bounds = array<i64: 3, 96, 32>}, {pipeline_mode = #tpu.pipeline_mode<synchronous>, transform_indices = @transform_3, window_bounds = array<i64: 3, 96, 32>}, {pipeline_mode = #tpu.pipeline_mode<synchronous>, transform_indices = @transform_4, window_bounds = array<i64: 1, 32>}, {pipeline_mode = #tpu.pipeline_mode<synchronous>, transform_indices = @transform_5, window_bounds = array<i64: 32, 3>}, {pipeline_mode = #tpu.pipeline_mode<synchronous>, transform_indices = @transform_6, window_bounds = array<i64: 1, 3>}, {transform_indices = @transform_7, window_bounds = array<i64: 1, 16, 16, 3>}]} {
    %cst = arith.constant 0.000000e+00 : f32
    %0 = vector.broadcast %cst : f32 to vector<256x32xf32>
    %c0 = arith.constant 0 : index
    %c0_0 = arith.constant 0 : index
    %c0_1 = arith.constant 0 : index
    %c0_2 = arith.constant 0 : index
    %1 = vector.load %arg1[%c0, %c0_0, %c0_1, %c0_2] : memref<1x18x16x96xbf16, #tpu.memory_space<vmem>>, vector<1x18x16x96xbf16>
    %2 = vector.shape_cast %1 : vector<1x18x16x96xbf16> to vector<18x16x96xbf16>
    %3 = vector.extract_strided_slice %2 {offsets = [0, 0, 0], sizes = [16, 16, 96], strides = [1, 1, 1]} : vector<18x16x96xbf16> to vector<16x16x96xbf16>
    %4 = vector.shape_cast %3 : vector<16x16x96xbf16> to vector<256x96xbf16>
    %c0_3 = arith.constant 0 : index
    %c0_4 = arith.constant 0 : index
    %c0_5 = arith.constant 0 : index
    %5 = vector.load %arg3[%c0_3, %c0_4, %c0_5] : memref<3x96x32xbf16, #tpu.memory_space<vmem>>, vector<1x96x32xbf16>
    %6 = vector.shape_cast %5 : vector<1x96x32xbf16> to vector<96x32xbf16>
    %cst_6 = arith.constant dense<0.000000e+00> : vector<256x32xf32>
    %7 = tpu.matmul %4, %6, %cst_6 {dimension_numbers = #tpu.dot_dimension_numbers<[1], [0], [0], [1], [0, 0, 1, 1], [], []>} : vector<256x96xbf16>, vector<96x32xbf16>, vector<256x32xf32> -> vector<256x32xf32>
    %8 = arith.addf %0, %7 : vector<256x32xf32>
    %9 = vector.extract_strided_slice %2 {offsets = [1, 0, 0], sizes = [16, 16, 96], strides = [1, 1, 1]} : vector<18x16x96xbf16> to vector<16x16x96xbf16>
    %10 = vector.shape_cast %9 : vector<16x16x96xbf16> to vector<256x96xbf16>
    %c1 = arith.constant 1 : index
    %c0_7 = arith.constant 0 : index
    %c0_8 = arith.constant 0 : index
    %11 = vector.load %arg3[%c1, %c0_7, %c0_8] : memref<3x96x32xbf16, #tpu.memory_space<vmem>>, vector<1x96x32xbf16>
    %12 = vector.shape_cast %11 : vector<1x96x32xbf16> to vector<96x32xbf16>
    %cst_9 = arith.constant dense<0.000000e+00> : vector<256x32xf32>
    %13 = tpu.matmul %10, %12, %cst_9 {dimension_numbers = #tpu.dot_dimension_numbers<[1], [0], [0], [1], [0, 0, 1, 1], [], []>} : vector<256x96xbf16>, vector<96x32xbf16>, vector<256x32xf32> -> vector<256x32xf32>
    %14 = arith.addf %8, %13 : vector<256x32xf32>
    %15 = vector.extract_strided_slice %2 {offsets = [2, 0, 0], sizes = [16, 16, 96], strides = [1, 1, 1]} : vector<18x16x96xbf16> to vector<16x16x96xbf16>
    %16 = vector.shape_cast %15 : vector<16x16x96xbf16> to vector<256x96xbf16>
    %c2 = arith.constant 2 : index
    %c0_10 = arith.constant 0 : index
    %c0_11 = arith.constant 0 : index
    %17 = vector.load %arg3[%c2, %c0_10, %c0_11] : memref<3x96x32xbf16, #tpu.memory_space<vmem>>, vector<1x96x32xbf16>
    %18 = vector.shape_cast %17 : vector<1x96x32xbf16> to vector<96x32xbf16>
    %cst_12 = arith.constant dense<0.000000e+00> : vector<256x32xf32>
    %19 = tpu.matmul %16, %18, %cst_12 {dimension_numbers = #tpu.dot_dimension_numbers<[1], [0], [0], [1], [0, 0, 1, 1], [], []>} : vector<256x96xbf16>, vector<96x32xbf16>, vector<256x32xf32> -> vector<256x32xf32>
    %20 = arith.addf %14, %19 : vector<256x32xf32>
    %c0_13 = arith.constant 0 : index
    %c0_14 = arith.constant 0 : index
    %c0_15 = arith.constant 0 : index
    %c0_16 = arith.constant 0 : index
    %21 = vector.load %arg2[%c0_13, %c0_14, %c0_15, %c0_16] : memref<1x18x16x96xbf16, #tpu.memory_space<vmem>>, vector<1x18x16x96xbf16>
    %22 = vector.shape_cast %21 : vector<1x18x16x96xbf16> to vector<18x16x96xbf16>
    %23 = vector.extract_strided_slice %22 {offsets = [0, 0, 0], sizes = [16, 16, 96], strides = [1, 1, 1]} : vector<18x16x96xbf16> to vector<16x16x96xbf16>
    %24 = vector.shape_cast %23 : vector<16x16x96xbf16> to vector<256x96xbf16>
    %c0_17 = arith.constant 0 : index
    %c0_18 = arith.constant 0 : index
    %c0_19 = arith.constant 0 : index
    %25 = vector.load %arg4[%c0_17, %c0_18, %c0_19] : memref<3x96x32xbf16, #tpu.memory_space<vmem>>, vector<1x96x32xbf16>
    %26 = vector.shape_cast %25 : vector<1x96x32xbf16> to vector<96x32xbf16>
    %cst_20 = arith.constant dense<0.000000e+00> : vector<256x32xf32>
    %27 = tpu.matmul %24, %26, %cst_20 {dimension_numbers = #tpu.dot_dimension_numbers<[1], [0], [0], [1], [0, 0, 1, 1], [], []>} : vector<256x96xbf16>, vector<96x32xbf16>, vector<256x32xf32> -> vector<256x32xf32>
    %28 = arith.addf %20, %27 : vector<256x32xf32>
    %29 = vector.extract_strided_slice %22 {offsets = [1, 0, 0], sizes = [16, 16, 96], strides = [1, 1, 1]} : vector<18x16x96xbf16> to vector<16x16x96xbf16>
    %30 = vector.shape_cast %29 : vector<16x16x96xbf16> to vector<256x96xbf16>
    %c1_21 = arith.constant 1 : index
    %c0_22 = arith.constant 0 : index
    %c0_23 = arith.constant 0 : index
    %31 = vector.load %arg4[%c1_21, %c0_22, %c0_23] : memref<3x96x32xbf16, #tpu.memory_space<vmem>>, vector<1x96x32xbf16>
    %32 = vector.shape_cast %31 : vector<1x96x32xbf16> to vector<96x32xbf16>
    %cst_24 = arith.constant dense<0.000000e+00> : vector<256x32xf32>
    %33 = tpu.matmul %30, %32, %cst_24 {dimension_numbers = #tpu.dot_dimension_numbers<[1], [0], [0], [1], [0, 0, 1, 1], [], []>} : vector<256x96xbf16>, vector<96x32xbf16>, vector<256x32xf32> -> vector<256x32xf32>
    %34 = arith.addf %28, %33 : vector<256x32xf32>
    %35 = vector.extract_strided_slice %22 {offsets = [2, 0, 0], sizes = [16, 16, 96], strides = [1, 1, 1]} : vector<18x16x96xbf16> to vector<16x16x96xbf16>
    %36 = vector.shape_cast %35 : vector<16x16x96xbf16> to vector<256x96xbf16>
    %c2_25 = arith.constant 2 : index
    %c0_26 = arith.constant 0 : index
    %c0_27 = arith.constant 0 : index
    %37 = vector.load %arg4[%c2_25, %c0_26, %c0_27] : memref<3x96x32xbf16, #tpu.memory_space<vmem>>, vector<1x96x32xbf16>
    %38 = vector.shape_cast %37 : vector<1x96x32xbf16> to vector<96x32xbf16>
    %cst_28 = arith.constant dense<0.000000e+00> : vector<256x32xf32>
    %39 = tpu.matmul %36, %38, %cst_28 {dimension_numbers = #tpu.dot_dimension_numbers<[1], [0], [0], [1], [0, 0, 1, 1], [], []>} : vector<256x96xbf16>, vector<96x32xbf16>, vector<256x32xf32> -> vector<256x32xf32>
    %40 = arith.addf %34, %39 : vector<256x32xf32>
    %c0_29 = arith.constant 0 : index
    %c0_30 = arith.constant 0 : index
    %41 = vector.load %arg5[%c0_29, %c0_30] : memref<1x32xf32, #tpu.memory_space<vmem>>, vector<1x32xf32>
    %42 = vector.broadcast %41 : vector<1x32xf32> to vector<256x32xf32>
    %43 = arith.addf %40, %42 : vector<256x32xf32>
    %cst_31 = arith.constant 0.000000e+00 : f32
    %44 = vector.broadcast %cst_31 : f32 to vector<256x32xf32>
    %45 = arith.maximumf %43, %44 : vector<256x32xf32>
    %46 = arith.truncf %45 : vector<256x32xf32> to vector<256x32xbf16>
    %c0_32 = arith.constant 0 : index
    %c0_33 = arith.constant 0 : index
    %47 = vector.load %arg6[%c0_32, %c0_33] : memref<32x3xbf16, #tpu.memory_space<vmem>>, vector<32x3xbf16>
    %cst_34 = arith.constant dense<0.000000e+00> : vector<256x3xf32>
    %48 = tpu.matmul %46, %47, %cst_34 {dimension_numbers = #tpu.dot_dimension_numbers<[1], [0], [0], [1], [0, 0, 1, 1], [], []>} : vector<256x32xbf16>, vector<32x3xbf16>, vector<256x3xf32> -> vector<256x3xf32>
    %c0_35 = arith.constant 0 : index
    %c0_36 = arith.constant 0 : index
    %49 = vector.load %arg7[%c0_35, %c0_36] : memref<1x3xf32, #tpu.memory_space<vmem>>, vector<1x3xf32>
    %50 = vector.broadcast %49 : vector<1x3xf32> to vector<256x3xf32>
    %51 = arith.addf %48, %50 : vector<256x3xf32>
    %52 = vector.shape_cast %51 : vector<256x3xf32> to vector<16x16x3xf32>
    %c0_37 = arith.constant 0 : index
    %c0_38 = arith.constant 0 : index
    %c0_39 = arith.constant 0 : index
    %c0_40 = arith.constant 0 : index
    %53 = vector.load %arg8[%c0_37, %c0_38, %c0_39, %c0_40] : memref<1x16x16x3xf32, #tpu.memory_space<vmem>>, vector<1x16x16x3xf32>
    %54 = vector.shape_cast %53 : vector<1x16x16x3xf32> to vector<16x16x3xf32>
    %55 = vector.shape_cast %52 : vector<16x16x3xf32> to vector<1x16x16x3xf32>
    tpu.vector_store %arg8[%c0_37, %c0_38, %c0_39, %c0_40], %55 {strides = array<i32>} : memref<1x16x16x3xf32, #tpu.memory_space<vmem>>, vector<1x16x16x3xf32>,
    return
  }
  func.func @transform_0(%arg0: i32) -> (i32, i32, i32, i32) {
    %c0_i32 = arith.constant 0 : i32
    %c0_i32_0 = arith.constant 0 : i32
    %c0_i32_1 = arith.constant 0 : i32
    %c0_i32_2 = arith.constant 0 : i32
    return %arg0, %c0_i32, %c0_i32_0, %c0_i32_1 : i32, i32, i32, i32
  }
  func.func @transform_1(%arg0: i32) -> (i32, i32, i32, i32) {
    %c0_i32 = arith.constant 0 : i32
    %c0_i32_0 = arith.constant 0 : i32
    %c0_i32_1 = arith.constant 0 : i32
    %c0_i32_2 = arith.constant 0 : i32
    return %arg0, %c0_i32, %c0_i32_0, %c0_i32_1 : i32, i32, i32, i32
  }
  func.func @transform_2(%arg0: i32) -> (i32, i32, i32) {
    %c0_i32 = arith.constant 0 : i32
    %c0_i32_0 = arith.constant 0 : i32
    %c0_i32_1 = arith.constant 0 : i32
    %c0_i32_2 = arith.constant 0 : i32
    return %c0_i32, %c0_i32_0, %c0_i32_1 : i32, i32, i32
  }
  func.func @transform_3(%arg0: i32) -> (i32, i32, i32) {
    %c0_i32 = arith.constant 0 : i32
    %c0_i32_0 = arith.constant 0 : i32
    %c0_i32_1 = arith.constant 0 : i32
    %c0_i32_2 = arith.constant 0 : i32
    return %c0_i32, %c0_i32_0, %c0_i32_1 : i32, i32, i32
  }
  func.func @transform_4(%arg0: i32) -> (i32, i32) {
    %c0_i32 = arith.constant 0 : i32
    %c0_i32_0 = arith.constant 0 : i32
    %c0_i32_1 = arith.constant 0 : i32
    return %c0_i32, %c0_i32_0 : i32, i32
  }
  func.func @transform_5(%arg0: i32) -> (i32, i32) {
    %c0_i32 = arith.constant 0 : i32
    %c0_i32_0 = arith.constant 0 : i32
    %c0_i32_1 = arith.constant 0 : i32
    return %c0_i32, %c0_i32_0 : i32, i32
  }
  func.func @transform_6(%arg0: i32) -> (i32, i32) {
    %c0_i32 = arith.constant 0 : i32
    %c0_i32_0 = arith.constant 0 : i32
    %c0_i32_1 = arith.constant 0 : i32
    return %c0_i32, %c0_i32_0 : i32, i32
  }
  func.func @transform_7(%arg0: i32) -> (i32, i32, i32, i32) {
    %c0_i32 = arith.constant 0 : i32
    %c0_i32_0 = arith.constant 0 : i32
    %c0_i32_1 = arith.constant 0 : i32
    %c0_i32_2 = arith.constant 0 : i32
    return %arg0, %c0_i32, %c0_i32_0, %c0_i32_1 : i32, i32, i32, i32
  }
}

</mosaic_0001>

<llo_original>
// kernel: _lambda_.8
$region0: #{_lambda_.8}
  #allocation0 [shape = 'u32[]', space=smem, size = 0x4, offset = 0x4, fixed_abs, tag = 'smem constant byte address 0x4 - core index']
  #allocation1 [shape = 'u32[144,128]{1,0:T(1,128)}', space=vmem, size = 0x12000, scoped, tag = 'internal scratch']
  %s0 = inlined_call_operand.vmem [shape: bf16[32,48], index: 0, kind: input, shape index: {}]
  %s1 = inlined_call_operand.vmem [shape: bf16[48,32], index: 1, kind: input, shape index: {}]
  %s2 = inlined_call_operand.vmem [shape: f32[1,32], index: 2, kind: input, shape index: {}]
  %s3 = inlined_call_operand.vmem [shape: bf16[32,32], index: 3, kind: output, shape index: {}]
  %s4 = sld [smem:[#allocation0]]
  $region22: #{_lambda_.8} parent=0
    _
  %s6 = ssub.s32 1, %s4
  %s7 = scalar_select 0, %s6, %s4
  // Predicated region
  $region2: #{_lambda_.8} parent=0 // pred_check
    _
  $region3: #{_lambda_.8} parent=0 // pred_check_branch
    %9 = sbr.rel (0) target = $region5
  $region4: #{_lambda_.8} parent=0 // pred_region
    _
  $region5: #{_lambda_.8} parent=0 // pred_fallthru
    _
  // Predicated region
  $region6: #{_lambda_.8} parent=0 // pred_check
    _
  $region7: #{_lambda_.8} parent=0 // pred_check_branch
    %11 = sbr.rel (0) target = $region9
  $region8: #{_lambda_.8} parent=0 // pred_region
    _
  $region9: #{_lambda_.8} parent=0 // pred_fallthru
    _
  // Predicated region
  $region10: #{_lambda_.8} parent=0 // pred_check
    _
  $region11: #{_lambda_.8} parent=0 // pred_check_branch
    %13 = sbr.rel (0) target = $region13
  $region12: #{_lambda_.8} parent=0 // pred_region
    _
  $region13: #{_lambda_.8} parent=0 // pred_fallthru
    _
  %v15 = vld [vmem:[%s0] sm:$0xf]
  %v16 = vld [vmem:[%s0 + $0x4] sm:$0xf]
  %v17 = vld [vmem:[%s0 + $0x8] sm:$0xf]
  %v18 = vld [vmem:[%s0 + $0xc] sm:$0xf]
  %v19 = vld [vmem:[%s1] sm:$0xf]
  %v20 = vld [vmem:[%s1 + $0x4] sm:$0xf]
  %v21 = vld [vmem:[%s1 + $0x8] sm:$0xf]
  %v22 = vld [vmem:[%s1 + $0xc] sm:$0xf]
  %v23 = vld [vmem:[%s1 + $0x10] sm:$0xf]
  %v24 = vld [vmem:[%s1 + $0x14] sm:$0xf]
  %v25 = vld [vmem:[%s2] sm:$0x1]
  %v27 = vlaneseq
  %v28 = vshrl.u32 %v27, 7
  %v29 = vsub.s32 0, %v28
  %v30 = vrot.slane %v25, %v29
  %v36 = vunpack.c.l.b16 %v15
  %v37 = vunpack.c.l.b16 %v16
  %v38 = vunpack.c.l.b16 %v17
  %v39 = vunpack.c.l.b16 %v18
  %v40 = vpack.c.b16 %v37, %v36
  %v41 = vpack.c.b16 %v39, %v38
  %v48 = vunpack.c.l.b16 %v19
  %v49 = vunpack.c.l.b16 %v20
  %v50 = vunpack.c.l.b16 %v21
  %v51 = vunpack.c.l.b16 %v22
  %v52 = vunpack.c.l.b16 %v23
  %v53 = vunpack.c.l.b16 %v24
  %v54 = vpack.c.b16 %v49, %v48
  %v55 = vpack.c.b16 %v51, %v50
  %v56 = vpack.c.b16 %v53, %v52
  %vm60 = vcmask 392192
  %v62 = vsel %vm60, %v40, 0
  %v65 = vsel %vm60, %v41, 0
  %67 = vmatprep.subr.bf16.mxu0 0
  %68 = vmatpush1.bf16.msra.mxu0 0
  %69 = vmatprep.subr.bf16.mxu0 0
  %70 = vmatpush1.bf16.msra.mxu0 0
  %71 = vmatprep.subr.bf16.mxu0 0
  %72 = vmatpush1.bf16.msra.mxu0 0
  %73 = vmatprep.subr.bf16.mxu0 0
  %74 = vmatpush1.bf16.msra.mxu0 0
  %75 = vmatprep.subr.bf16.mxu0 0
  %76 = vmatpush1.bf16.msra.mxu0 0
  %77 = vmatprep.subr.bf16.mxu0 0
  %78 = vmatpush1.bf16.msra.mxu0 %v56
  %79 = vmatprep.subr.bf16.mxu0 0
  %80 = vmatpush1.bf16.msra.mxu0 %v55
  %81 = vmatprep.subr.bf16.mxu0 0
  %82 = vmatpush1.bf16.msra.mxu0 %v54
  %83 = vmatprep.subr.bf16.mxu0 0
  %84 = vmatpush2.bf16.msra.mxu0 0
  %85 = vmatprep.subr.bf16.mxu0 0
  %86 = vmatpush2.bf16.msra.mxu0 0
  %87 = vmatprep.subr.bf16.mxu0 0
  %88 = vmatpush2.bf16.msra.mxu0 0
  %89 = vmatprep.subr.bf16.mxu0 0
  %90 = vmatpush2.bf16.msra.mxu0 0
  %91 = vmatprep.subr.bf16.mxu0 0
  %92 = vmatpush2.bf16.msra.mxu0 0
  %93 = vmatprep.subr.bf16.mxu0 0
  %94 = vmatpush2.bf16.msra.mxu0 0
  %95 = vmatprep.subr.bf16.mxu0 0
  %96 = vmatpush2.bf16.msra.mxu0 0
  %97 = vmatprep.subr.bf16.mxu0 0
  %98 = vmatpush2.bf16.msra.mxu0 0
  %99 = vmatprep.mubr.bf16.mxu0 0
  %100 = vmatmul.mubr.bf16.gmra.mxu0 %v62
  %v101 = vpop.f32.mrf.mxu0
  %v102 = vadd.f32 %v30, %v101
  %v103 = vpop.f32.mrf.mxu0
  %v104 = vpop.f32.mrf.mxu0
  %v105 = vadd.f32 %v30, %v104
  %v106 = vpop.f32.mrf.mxu0
  %107 = vmatprep.mubr.bf16.mxu0 0
  %108 = vmatmul.mubr.bf16.gmra.mxu0 %v65
  %v109 = vpop.f32.mrf.mxu0
  %v110 = vadd.f32 %v30, %v109
  %v111 = vpop.f32.mrf.mxu0
  %v112 = vpop.f32.mrf.mxu0
  %v113 = vadd.f32 %v30, %v112
  %v114 = vpop.f32.mrf.mxu0
  %115 = vdwg.mxu0
  %v116 = vpack.c.bf16 %v105, %v102
  %v117 = vpack.c.bf16 %v113, %v110
  %v120 = vunpack.c.l.b16 %v116
  %v121 = vunpack.c.h.b16 %v116
  %v122 = vunpack.c.l.b16 %v117
  %v123 = vunpack.c.h.b16 %v117
  %v124 = vpack.c.b16 %v120, %v120
  %v125 = vpack.c.b16 %v121, %v121
  %v126 = vpack.c.b16 %v122, %v122
  %v127 = vpack.c.b16 %v123, %v123
  %vm132 = vcmask 257024
  %133 = vst.msk [vmem:[%s3] sm:$0xf] %vm132, %v124
  %134 = vst.msk [vmem:[%s3 + $0x4] sm:$0xf] %vm132, %v125
  %135 = vst.msk [vmem:[%s3 + $0x8] sm:$0xf] %vm132, %v126
  %136 = vst.msk [vmem:[%s3 + $0xc] sm:$0xf] %vm132, %v127
  // Predicated region
  $region14: #{_lambda_.8} parent=0 // pred_check
    _
  $region15: #{_lambda_.8} parent=0 // pred_check_branch
    %138 = sbr.rel (0) target = $region17
  $region16: #{_lambda_.8} parent=0 // pred_region
    _
  $region17: #{_lambda_.8} parent=0 // pred_fallthru
    _
  // Predicated region
  $region18: #{_lambda_.8} parent=0 // pred_check
    _
  $region19: #{_lambda_.8} parent=0 // pred_check_branch
    %140 = sbr.rel (0) target = $region21
  $region20: #{_lambda_.8} parent=0 // pred_region
    _
  $region21: #{_lambda_.8} parent=0 // pred_fallthru
    _

// kernel: _lambda_.9
$region0: #{_lambda_.9}
  #allocation0 [shape = 'u32[]', space=smem, size = 0x4, offset = 0x4, fixed_abs, tag = 'smem constant byte address 0x4 - core index']
  #allocation1 [shape = 'u32[144,128]{1,0:T(1,128)}', space=vmem, size = 0x12000, scoped, tag = 'internal scratch']
  #allocation2 [shape = 'bf16[32,32]{1,0:T(8,128)(2,1)}', space=vmem, size = 0x2000, scoped, tag = 'scratch operand']
  %s0 = inlined_call_operand.vmem [shape: bf16[32,32], index: 0, kind: input, shape index: {}]
  %s1 = inlined_call_operand.vmem [shape: bf16[4,32,32], index: 1, kind: input, shape index: {}]
  %s2 = inlined_call_operand.vmem [shape: f32[4,1,32], index: 2, kind: input, shape index: {}]
  %s3 = inlined_call_operand.vmem [shape: bf16[4,32,32], index: 3, kind: output, shape index: {}]
  %s4 = sld [smem:[#allocation0]]
  $region49: #{_lambda_.9} parent=0
    _
  %s6 = ssub.s32 1, %s4
  %s7 = scalar_select 0, %s6, %s4
  loop: start=0, step=1, limit=6
  $region2: #{_lambda_.9} parent=0 // loop_pre_header
    _
  $region3: #{_lambda_.9} parent=0 // loop_header
    %s9 = sphi 0, %s13
    %p10 = scmp.ge.s32.totalorder %s9, 6
    %s17 = sphi 0, %s17
    %s19 = sphi 0, %s17
    %s20 = sphi 0, %s19
    %s34 = sphi 0, %s20
    %s40 = sphi 0, %s42
    %s43 = sphi 0, %s40
    %s44 = sphi 0, %s43
    %s60 = sphi 0, %s44
    %s66 = sphi 0, %s68
    %s69 = sphi 0, %s66
    %s70 = sphi 0, %s69
    %s86 = sphi 0, %s70
    %s92 = sphi 0, %s94
    %s95 = sphi 0, %s92
    %s96 = sphi 0, %s95
    %s112 = sphi 0, %s96
  $region4: #{_lambda_.9} parent=0 // loop_header_branch
    %12 = sbr.rel (%p10) target = $region8
  $region5: #{_lambda_.9} parent=0 // loop_body
    %s14 = ssub.s32 %s9, 1
    %s15 = ssub.s32 %s9, 2
    %s16 = sadd.s32 %s9, 1
    %s18 = sadd.s32 %s17, 1
    %p21 = scmp.eq.s32.totalorder %s9, 3
    %p22 = scmp.ne.s32.totalorder %s17, %s19
    %p23 = scmp.eq.s32.totalorder %s9, 0
    %p24 = por %p22, %p23
    %p25 = scmp.ne.s32.totalorder %s17, %s19
    %p26 = scmp.eq.s32.totalorder %s14, 3
    %p27 = por %p25, %p26
    %p28 = scmp.ne.s32.totalorder %s19, %s20
    %p29 = scmp.eq.s32.totalorder %s14, 0
    %p30 = por %p28, %p29
    %p31 = scmp.ne.s32.totalorder %s19, %s20
    %p32 = scmp.eq.s32.totalorder %s15, 3
    %p33 = por %p31, %p32
    %p35 = scmp.ne.s32.totalorder %s20, %s34
    %p36 = scmp.eq.s32.totalorder %s15, 0
    %p37 = por %p35, %p36
    %s38 = ssub.s32 %s9, %s16
    %p39 = scmp.eq.s32.totalorder %s38, 0
    %s41 = sadd.s32 %s40, 1
    %s42 = scalar_select %p39, %s40, %s41
    %p45 = pneg %p39
    %p46 = scmp.eq.s32.totalorder %s9, 3
    %p47 = por %p45, %p46
    %p48 = scmp.ne.s32.totalorder %s40, %s43
    %p49 = scmp.eq.s32.totalorder %s9, 0
    %p50 = por %p48, %p49
    %p51 = scmp.ne.s32.totalorder %s40, %s43
    %p52 = scmp.eq.s32.totalorder %s14, 3
    %p53 = por %p51, %p52
    %p54 = scmp.ne.s32.totalorder %s43, %s44
    %p55 = scmp.eq.s32.totalorder %s14, 0
    %p56 = por %p54, %p55
    %p57 = scmp.ne.s32.totalorder %s43, %s44
    %p58 = scmp.eq.s32.totalorder %s15, 3
    %p59 = por %p57, %p58
    %p61 = scmp.ne.s32.totalorder %s44, %s60
    %p62 = scmp.eq.s32.totalorder %s15, 0
    %p63 = por %p61, %p62
    %s64 = ssub.s32 %s9, %s16
    %p65 = scmp.eq.s32.totalorder %s64, 0
    %s67 = sadd.s32 %s66, 1
    %s68 = scalar_select %p65, %s66, %s67
    %p71 = pneg %p65
    %p72 = scmp.eq.s32.totalorder %s9, 3
    %p73 = por %p71, %p72
    %p74 = scmp.ne.s32.totalorder %s66, %s69
    %p75 = scmp.eq.s32.totalorder %s9, 0
    %p76 = por %p74, %p75
    %p77 = scmp.ne.s32.totalorder %s66, %s69
    %p78 = scmp.eq.s32.totalorder %s14, 3
    %p79 = por %p77, %p78
    %p80 = scmp.ne.s32.totalorder %s69, %s70
    %p81 = scmp.eq.s32.totalorder %s14, 0
    %p82 = por %p80, %p81
    %p83 = scmp.ne.s32.totalorder %s69, %s70
    %p84 = scmp.eq.s32.totalorder %s15, 3
    %p85 = por %p83, %p84
    %p87 = scmp.ne.s32.totalorder %s70, %s86
    %p88 = scmp.eq.s32.totalorder %s15, 0
    %p89 = por %p87, %p88
    %s90 = ssub.s32 %s9, %s16
    %p91 = scmp.eq.s32.totalorder %s90, 0
    %s93 = sadd.s32 %s92, 1
    %s94 = scalar_select %p91, %s92, %s93
    %p97 = pneg %p91
    %p98 = scmp.eq.s32.totalorder %s9, 3
    %p99 = por %p97, %p98
    %p100 = scmp.ne.s32.totalorder %s92, %s95
    %p101 = scmp.eq.s32.totalorder %s9, 0
    %p102 = por %p100, %p101
    %p103 = scmp.ne.s32.totalorder %s92, %s95
    %p104 = scmp.eq.s32.totalorder %s14, 3
    %p105 = por %p103, %p104
    %p106 = scmp.ne.s32.totalorder %s95, %s96
    %p107 = scmp.eq.s32.totalorder %s14, 0
    %p108 = por %p106, %p107
    %p109 = scmp.ne.s32.totalorder %s95, %s96
    %p110 = scmp.eq.s32.totalorder %s15, 3
    %p111 = por %p109, %p110
    %p113 = scmp.ne.s32.totalorder %s96, %s112
    %p114 = scmp.eq.s32.totalorder %s15, 0
    %p115 = por %p113, %p114
    %p116 = scmp.le.s32.totalorder 1, %s9
    %p117 = scmp.lt.s32.totalorder %s9, 5
    %p118 = pnand %p116, %p117
    %p119 = pneg %p118
    // Predicated region
    $region9: #{_lambda_.9} parent=5 // pred_check
      _
    $region10: #{_lambda_.9} parent=5 // pred_check_branch
      %121 = sbr.rel (%p118) target = $region12
    $region11: #{_lambda_.9} parent=5 // pred_region
      %s122 = ssub.s32 %s9, 1
      // Predicated region
      $region13: #{_lambda_.9} parent=11 // pred_check
        %p123 = pneg %p30
      $region14: #{_lambda_.9} parent=11 // pred_check_branch
        %125 = sbr.rel (%p123) target = $region16
      $region15: #{_lambda_.9} parent=11 // pred_region
        _
      $region16: #{_lambda_.9} parent=11 // pred_fallthru
        _
    $region12: #{_lambda_.9} parent=5 // pred_fallthru
      _
    %p126 = scmp.lt.s32.totalorder %s9, 4
    // Predicated region
    $region17: #{_lambda_.9} parent=5 // pred_check
      %p127 = pneg %p126
    $region18: #{_lambda_.9} parent=5 // pred_check_branch
      %129 = sbr.rel (%p127) target = $region20
    $region19: #{_lambda_.9} parent=5 // pred_region
      // Predicated region
      $region21: #{_lambda_.9} parent=19 // pred_check
        %p130 = pneg %p50
      $region22: #{_lambda_.9} parent=19 // pred_check_branch
        %132 = sbr.rel (%p130) target = $region24
      $region23: #{_lambda_.9} parent=19 // pred_region
        %p133 = scmp.lt.s32.totalorder %s9, 3
        %s134 = scalar_select %p133, %s9, 3
        %s135 = smul.addr %s134, 4
        %s136 = smul.addr %s135, 4
        %s137 = scalar_lea.vmem %s1, %s136
      $region24: #{_lambda_.9} parent=19 // pred_fallthru
        _
      // Predicated region
      $region25: #{_lambda_.9} parent=19 // pred_check
        %p138 = pneg %p76
      $region26: #{_lambda_.9} parent=19 // pred_check_branch
        %140 = sbr.rel (%p138) target = $region28
      $region27: #{_lambda_.9} parent=19 // pred_region
        %p141 = scmp.lt.s32.totalorder %s9, 3
        %s142 = scalar_select %p141, %s9, 3
        %s143 = scalar_lea.vmem %s2, %s142
      $region28: #{_lambda_.9} parent=19 // pred_fallthru
        _
    $region20: #{_lambda_.9} parent=5 // pred_fallthru
      _
    %p144 = scmp.le.s32.totalorder 1, %s9
    %p145 = scmp.lt.s32.totalorder %s9, 5
    %p146 = pnand %p144, %p145
    %p147 = pneg %p146
    // Predicated region
    $region29: #{_lambda_.9} parent=5 // pred_check
      _
    $region30: #{_lambda_.9} parent=5 // pred_check_branch
      %149 = sbr.rel (%p146) target = $region32
    $region31: #{_lambda_.9} parent=5 // pred_region
      %s150 = ssub.s32 %s9, 1
      %p151 = pneg %p30
      %p152 = pneg %p27
      %p153 = scmp.lt.s32.totalorder %s14, 3
      %s154 = scalar_select %p153, %s14, 3
      %s155 = smul.addr %s154, 4
      %s156 = smul.addr %s155, 4
      %s157 = scalar_lea.vmem %s1, %s156
      %p158 = pneg %p56
      %p159 = pneg %p53
      %p160 = scmp.lt.s32.totalorder %s14, 3
      %s161 = scalar_select %p160, %s14, 3
      %s162 = scalar_lea.vmem %s2, %s161
      %p163 = pneg %p82
      %p164 = pneg %p79
      %p165 = pneg %p108
      %p166 = pneg %p105
      %p167 = scmp.lt.s32.totalorder %s14, 3
      %s168 = scalar_select %p167, %s14, 3
      %s169 = smul.addr %s168, 4
      %s170 = smul.addr %s169, 4
      %s171 = scalar_lea.vmem %s3, %s170
      %p172 = scmp.lt.s32.totalorder %s14, 3
      %s173 = scalar_select %p172, %s14, 3
      %s174 = smul.addr %s173, 4
      %s175 = smul.addr %s174, 4
      %s176 = scalar_lea.vmem %s1, %s175
      %p177 = scmp.lt.s32.totalorder %s14, 3
      %s178 = scalar_select %p177, %s14, 3
      %s179 = scalar_lea.vmem %s2, %s178
      %p180 = scmp.lt.s32.totalorder %s14, 3
      %s181 = scalar_select %p180, %s14, 3
      %s182 = smul.addr %s181, 4
      %s183 = smul.addr %s182, 4
      %s184 = scalar_lea.vmem %s3, %s183
      %p186 = scmp.eq.s32.totalorder %s14, 0
      // Predicated region
      $region33: #{_lambda_.9} parent=31 // pred_check
        %p187 = pneg %p186
      $region34: #{_lambda_.9} parent=31 // pred_check_branch
        %189 = sbr.rel (%p187) target = $region36
      $region35: #{_lambda_.9} parent=31 // pred_region
        %v190 = vld [vmem:[%s0] sm:$0xf]
        %v191 = vld [vmem:[%s0 + $0x4] sm:$0xf]
        %v192 = vld [vmem:[%s0 + $0x8] sm:$0xf]
        %v193 = vld [vmem:[%s0 + $0xc] sm:$0xf]
        %vm194 = vcmask 257024
        %195 = vst.msk [vmem:[#allocation2] sm:$0xf] %vm194, %v190
        %196 = vst.msk [vmem:[#allocation2 + $0x4] sm:$0xf] %vm194, %v191
        %197 = vst.msk [vmem:[#allocation2 + $0x8] sm:$0xf] %vm194, %v192
        %198 = vst.msk [vmem:[#allocation2 + $0xc] sm:$0xf] %vm194, %v193
      $region36: #{_lambda_.9} parent=31 // pred_fallthru
        _
      %v199 = vld [vmem:[#allocation2] sm:$0xf]
      %v200 = vld [vmem:[#allocation2 + $0x4] sm:$0xf]
      %v201 = vld [vmem:[#allocation2 + $0x8] sm:$0xf]
      %v202 = vld [vmem:[#allocation2 + $0xc] sm:$0xf]
      %v203 = vld [vmem:[%s176] sm:$0xf]
      %v204 = vld [vmem:[%s176 + $0x4] sm:$0xf]
      %v205 = vld [vmem:[%s176 + $0x8] sm:$0xf]
      %v206 = vld [vmem:[%s176 + $0xc] sm:$0xf]
      %v207 = vld [vmem:[%s179] sm:$0x1]
      %v209 = vlaneseq
      %v210 = vshrl.u32 %v209, 7
      %v211 = vsub.s32 0, %v210
      %v212 = vrot.slane %v207, %v211
      %v218 = vunpack.c.l.b16 %v199
      %v219 = vunpack.c.l.b16 %v200
      %v220 = vunpack.c.l.b16 %v201
      %v221 = vunpack.c.l.b16 %v202
      %v222 = vpack.c.b16 %v219, %v218
      %v223 = vpack.c.b16 %v221, %v220
      %v228 = vunpack.c.l.b16 %v203
      %v229 = vunpack.c.l.b16 %v204
      %v230 = vunpack.c.l.b16 %v205
      %v231 = vunpack.c.l.b16 %v206
      %v232 = vpack.c.b16 %v229, %v228
      %v233 = vpack.c.b16 %v231, %v230
      %vm236 = vcmask 261120
      %v238 = vsel %vm236, %v222, 0
      %v241 = vsel %vm236, %v223, 0
      %243 = vmatprep.subr.bf16.mxu0 0
      %244 = vmatpush1.bf16.msra.mxu0 0
      %245 = vmatprep.subr.bf16.mxu0 0
      %246 = vmatpush1.bf16.msra.mxu0 0
      %247 = vmatprep.subr.bf16.mxu0 0
      %248 = vmatpush1.bf16.msra.mxu0 0
      %249 = vmatprep.subr.bf16.mxu0 0
      %250 = vmatpush1.bf16.msra.mxu0 0
      %251 = vmatprep.subr.bf16.mxu0 0
      %252 = vmatpush1.bf16.msra.mxu0 0
      %253 = vmatprep.subr.bf16.mxu0 0
      %254 = vmatpush1.bf16.msra.mxu0 0
      %255 = vmatprep.subr.bf16.mxu0 0
      %256 = vmatpush1.bf16.msra.mxu0 %v233
      %257 = vmatprep.subr.bf16.mxu0 0
      %258 = vmatpush1.bf16.msra.mxu0 %v232
      %259 = vmatprep.subr.bf16.mxu0 0
      %260 = vmatpush2.bf16.msra.mxu0 0
      %261 = vmatprep.subr.bf16.mxu0 0
      %262 = vmatpush2.bf16.msra.mxu0 0
      %263 = vmatprep.subr.bf16.mxu0 0
      %264 = vmatpush2.bf16.msra.mxu0 0
      %265 = vmatprep.subr.bf16.mxu0 0
      %266 = vmatpush2.bf16.msra.mxu0 0
      %267 = vmatprep.subr.bf16.mxu0 0
      %268 = vmatpush2.bf16.msra.mxu0 0
      %269 = vmatprep.subr.bf16.mxu0 0
      %270 = vmatpush2.bf16.msra.mxu0 0
      %271 = vmatprep.subr.bf16.mxu0 0
      %272 = vmatpush2.bf16.msra.mxu0 0
      %273 = vmatprep.subr.bf16.mxu0 0
      %274 = vmatpush2.bf16.msra.mxu0 0
      %275 = vmatprep.mubr.bf16.mxu0 0
      %276 = vmatmul.mubr.bf16.gmra.mxu0 %v238
      %v277 = vpop.f32.mrf.mxu0
      %v278 = vadd.f32 %v212, %v277
      %v279 = vpop.f32.mrf.mxu0
      %v280 = vpop.f32.mrf.mxu0
      %v281 = vadd.f32 %v212, %v280
      %v282 = vpop.f32.mrf.mxu0
      %283 = vmatprep.mubr.bf16.mxu0 0
      %284 = vmatmul.mubr.bf16.gmra.mxu0 %v241
      %v285 = vpop.f32.mrf.mxu0
      %v286 = vadd.f32 %v212, %v285
      %v287 = vpop.f32.mrf.mxu0
      %v288 = vpop.f32.mrf.mxu0
      %v289 = vadd.f32 %v212, %v288
      %v290 = vpop.f32.mrf.mxu0
      %291 = vdwg.mxu0
      %v292 = vmax.f32 %v278, 0.0
      %v293 = vmax.f32 %v281, 0.0
      %v294 = vmax.f32 %v286, 0.0
      %v295 = vmax.f32 %v289, 0.0
      %v296 = vpack.c.bf16 %v293, %v292
      %v297 = vpack.c.bf16 %v295, %v294
      %v300 = vunpack.c.l.b16 %v296
      %v301 = vunpack.c.h.b16 %v296
      %v302 = vunpack.c.l.b16 %v297
      %v303 = vunpack.c.h.b16 %v297
      %v304 = vpack.c.b16 %v300, %v300
      %v305 = vpack.c.b16 %v301, %v301
      %v306 = vpack.c.b16 %v302, %v302
      %v307 = vpack.c.b16 %v303, %v303
      %vm312 = vcmask 257024
      %313 = vst.msk [vmem:[#allocation2] sm:$0xf] %vm312, %v304
      %314 = vst.msk [vmem:[#allocation2 + $0x4] sm:$0xf] %vm312, %v305
      %315 = vst.msk [vmem:[#allocation2 + $0x8] sm:$0xf] %vm312, %v306
      %316 = vst.msk [vmem:[#allocation2 + $0xc] sm:$0xf] %vm312, %v307
      %317 = vst.msk [vmem:[%s184] sm:$0xf] %vm312, %v304
      %318 = vst.msk [vmem:[%s184 + $0x4] sm:$0xf] %vm312, %v305
      %319 = vst.msk [vmem:[%s184 + $0x8] sm:$0xf] %vm312, %v306
      %320 = vst.msk [vmem:[%s184 + $0xc] sm:$0xf] %vm312, %v307
      %p321 = scmp.lt.s32.totalorder %s14, 3
      %s322 = scalar_select %p321, %s14, 3
      %s323 = smul.addr %s322, 4
      %s324 = smul.addr %s323, 4
      %s325 = scalar_lea.vmem %s3, %s324
      // Predicated region
      $region37: #{_lambda_.9} parent=31 // pred_check
        %p326 = pneg %p105
      $region38: #{_lambda_.9} parent=31 // pred_check_branch
        %328 = sbr.rel (%p326) target = $region40
      $region39: #{_lambda_.9} parent=31 // pred_region
        _
      $region40: #{_lambda_.9} parent=31 // pred_fallthru
        _
    $region32: #{_lambda_.9} parent=5 // pred_fallthru
      _
    %p329 = scmp.le.s32.totalorder 2, %s9
    // Predicated region
    $region41: #{_lambda_.9} parent=5 // pred_check
      %p330 = pneg %p329
    $region42: #{_lambda_.9} parent=5 // pred_check_branch
      %332 = sbr.rel (%p330) target = $region44
    $region43: #{_lambda_.9} parent=5 // pred_region
      %s333 = ssub.s32 %s9, 2
      // Predicated region
      $region45: #{_lambda_.9} parent=43 // pred_check
        %p334 = pneg %p111
      $region46: #{_lambda_.9} parent=43 // pred_check_branch
        %336 = sbr.rel (%p334) target = $region48
      $region47: #{_lambda_.9} parent=43 // pred_region
        %p337 = scmp.lt.s32.totalorder %s15, 3
        %s338 = scalar_select %p337, %s15, 3
        %s339 = smul.addr %s338, 4
        %s340 = smul.addr %s339, 4
        %s341 = scalar_lea.vmem %s3, %s340
      $region48: #{_lambda_.9} parent=43 // pred_fallthru
        _
    $region44: #{_lambda_.9} parent=5 // pred_fallthru
      _
  $region6: #{_lambda_.9} parent=0 // loop_footer
    %s13 = sadd.s32 1, %s9
  $region7: #{_lambda_.9} parent=0 // loop_footer_branch
    %8 = sbr.rel target = $region3
  $region8: #{_lambda_.9} parent=0 // loop_exit
    _

// kernel: _lambda_.11
$region0: #{_lambda_.11}
  #allocation0 [shape = 'u32[]', space=smem, size = 0x4, offset = 0x4, fixed_abs, tag = 'smem constant byte address 0x4 - core index']
  #allocation1 [shape = 'u32[144,128]{1,0:T(1,128)}', space=vmem, size = 0x12000, scoped, tag = 'internal scratch']
  %s0 = inlined_call_operand.vmem [shape: bf16[32,32], index: 0, kind: input, shape index: {}]
  %s1 = inlined_call_operand.vmem [shape: bf16[32,256], index: 1, kind: input, shape index: {}]
  %s2 = inlined_call_operand.vmem [shape: f32[1,256], index: 2, kind: input, shape index: {}]
  %s3 = inlined_call_operand.vmem [shape: bf16[32,256], index: 3, kind: output, shape index: {}]
  %s4 = sld [smem:[#allocation0]]
  $region22: #{_lambda_.11} parent=0
    _
  %s6 = ssub.s32 1, %s4
  %s7 = scalar_select 0, %s6, %s4
  // Predicated region
  $region2: #{_lambda_.11} parent=0 // pred_check
    _
  $region3: #{_lambda_.11} parent=0 // pred_check_branch
    %9 = sbr.rel (0) target = $region5
  $region4: #{_lambda_.11} parent=0 // pred_region
    _
  $region5: #{_lambda_.11} parent=0 // pred_fallthru
    _
  // Predicated region
  $region6: #{_lambda_.11} parent=0 // pred_check
    _
  $region7: #{_lambda_.11} parent=0 // pred_check_branch
    %11 = sbr.rel (0) target = $region9
  $region8: #{_lambda_.11} parent=0 // pred_region
    _
  $region9: #{_lambda_.11} parent=0 // pred_fallthru
    _
  // Predicated region
  $region10: #{_lambda_.11} parent=0 // pred_check
    _
  $region11: #{_lambda_.11} parent=0 // pred_check_branch
    %13 = sbr.rel (0) target = $region13
  $region12: #{_lambda_.11} parent=0 // pred_region
    _
  $region13: #{_lambda_.11} parent=0 // pred_fallthru
    _
  %v15 = vld [vmem:[%s0] sm:$0xf]
  %v16 = vld [vmem:[%s0 + $0x4] sm:$0xf]
  %v17 = vld [vmem:[%s0 + $0x8] sm:$0xf]
  %v18 = vld [vmem:[%s0 + $0xc] sm:$0xf]
  %v19 = vld [vmem:[%s1] sm:$0xff]
  %v20 = vld [vmem:[%s1 + $0x8] sm:$0xff]
  %v21 = vld [vmem:[%s1 + $0x10] sm:$0xff]
  %v22 = vld [vmem:[%s1 + $0x18] sm:$0xff]
  %v23 = vld [vmem:[%s2] sm:$0x3]
  %v25 = vlaneseq
  %v26 = vshrl.u32 %v25, 7
  %v27 = vsub.s32 0, %v26
  %v28 = vrot.slane %v23, %v27
  %v29 = vlaneseq
  %v30 = vshrl.u32 %v29, 7
  %v31 = vsub.s32 1, %v30
  %v32 = vrot.slane %v23, %v31
  %v39 = vunpack.c.l.b16 %v15
  %v40 = vunpack.c.l.b16 %v16
  %v41 = vunpack.c.l.b16 %v17
  %v42 = vunpack.c.l.b16 %v18
  %v43 = vpack.c.b16 %v40, %v39
  %v44 = vpack.c.b16 %v42, %v41
  %v49 = vunpack.c.l.b16 %v19
  %v50 = vunpack.c.h.b16 %v19
  %v51 = vunpack.c.l.b16 %v20
  %v52 = vunpack.c.h.b16 %v20
  %v53 = vunpack.c.l.b16 %v21
  %v54 = vunpack.c.h.b16 %v21
  %v55 = vunpack.c.l.b16 %v22
  %v56 = vunpack.c.h.b16 %v22
  %v57 = vpack.c.b16 %v51, %v49
  %v58 = vpack.c.b16 %v52, %v50
  %v59 = vpack.c.b16 %v55, %v53
  %v60 = vpack.c.b16 %v56, %v54
  %vm65 = vcmask 261120
  %v67 = vsel %vm65, %v43, 0
  %v70 = vsel %vm65, %v44, 0
  %72 = vmatprep.subr.bf16.mxu0 0
  %73 = vmatpush1.bf16.msra.mxu0 0
  %74 = vmatprep.subr.bf16.mxu0 0
  %75 = vmatpush1.bf16.msra.mxu0 0
  %76 = vmatprep.subr.bf16.mxu0 0
  %77 = vmatpush1.bf16.msra.mxu0 0
  %78 = vmatprep.subr.bf16.mxu0 0
  %79 = vmatpush1.bf16.msra.mxu0 0
  %80 = vmatprep.subr.bf16.mxu0 0
  %81 = vmatpush1.bf16.msra.mxu0 0
  %82 = vmatprep.subr.bf16.mxu0 0
  %83 = vmatpush1.bf16.msra.mxu0 0
  %84 = vmatprep.subr.bf16.mxu0 %v60
  %85 = vmatpush1.bf16.msra.mxu0 %v59
  %86 = vmatprep.subr.bf16.mxu0 %v58
  %87 = vmatpush1.bf16.msra.mxu0 %v57
  %88 = vmatprep.subr.bf16.mxu0 0
  %89 = vmatpush2.bf16.msra.mxu0 0
  %90 = vmatprep.subr.bf16.mxu0 0
  %91 = vmatpush2.bf16.msra.mxu0 0
  %92 = vmatprep.subr.bf16.mxu0 0
  %93 = vmatpush2.bf16.msra.mxu0 0
  %94 = vmatprep.subr.bf16.mxu0 0
  %95 = vmatpush2.bf16.msra.mxu0 0
  %96 = vmatprep.subr.bf16.mxu0 0
  %97 = vmatpush2.bf16.msra.mxu0 0
  %98 = vmatprep.subr.bf16.mxu0 0
  %99 = vmatpush2.bf16.msra.mxu0 0
  %100 = vmatprep.subr.bf16.mxu0 0
  %101 = vmatpush2.bf16.msra.mxu0 0
  %102 = vmatprep.subr.bf16.mxu0 0
  %103 = vmatpush2.bf16.msra.mxu0 0
  %104 = vmatprep.mubr.bf16.mxu0 0
  %105 = vmatmul.mubr.bf16.gmra.mxu0 %v67
  %v106 = vpop.f32.mrf.mxu0
  %v107 = vadd.f32 %v28, %v106
  %v108 = vpop.f32.mrf.mxu0
  %v109 = vadd.f32 %v32, %v108
  %v110 = vpop.f32.mrf.mxu0
  %v111 = vadd.f32 %v28, %v110
  %v112 = vpop.f32.mrf.mxu0
  %v113 = vadd.f32 %v32, %v112
  %114 = vmatprep.mubr.bf16.mxu0 0
  %115 = vmatmul.mubr.bf16.gmra.mxu0 %v70
  %v116 = vpop.f32.mrf.mxu0
  %v117 = vadd.f32 %v28, %v116
  %v118 = vpop.f32.mrf.mxu0
  %v119 = vadd.f32 %v32, %v118
  %v120 = vpop.f32.mrf.mxu0
  %v121 = vadd.f32 %v28, %v120
  %v122 = vpop.f32.mrf.mxu0
  %v123 = vadd.f32 %v32, %v122
  %124 = vdwg.mxu0
  %v125 = vpack.c.bf16 %v111, %v107
  %v126 = vpack.c.bf16 %v113, %v109
  %v127 = vpack.c.bf16 %v121, %v117
  %v128 = vpack.c.bf16 %v123, %v119
  %v133 = vunpack.c.l.b16 %v125
  %v134 = vunpack.c.l.b16 %v126
  %v135 = vunpack.c.h.b16 %v125
  %v136 = vunpack.c.h.b16 %v126
  %v137 = vunpack.c.l.b16 %v127
  %v138 = vunpack.c.l.b16 %v128
  %v139 = vunpack.c.h.b16 %v127
  %v140 = vunpack.c.h.b16 %v128
  %v141 = vpack.c.b16 %v134, %v133
  %v142 = vpack.c.b16 %v136, %v135
  %v143 = vpack.c.b16 %v138, %v137
  %v144 = vpack.c.b16 %v140, %v139
  %149 = vst [vmem:[%s3] sm:$0xff] %v141
  %150 = vst [vmem:[%s3 + $0x8] sm:$0xff] %v142
  %151 = vst [vmem:[%s3 + $0x10] sm:$0xff] %v143
  %152 = vst [vmem:[%s3 + $0x18] sm:$0xff] %v144
  // Predicated region
  $region14: #{_lambda_.11} parent=0 // pred_check
    _
  $region15: #{_lambda_.11} parent=0 // pred_check_branch
    %154 = sbr.rel (0) target = $region17
  $region16: #{_lambda_.11} parent=0 // pred_region
    _
  $region17: #{_lambda_.11} parent=0 // pred_fallthru
    _
  // Predicated region
  $region18: #{_lambda_.11} parent=0 // pred_check
    _
  $region19: #{_lambda_.11} parent=0 // pred_check_branch
    %156 = sbr.rel (0) target = $region21
  $region20: #{_lambda_.11} parent=0 // pred_region
    _
  $region21: #{_lambda_.11} parent=0 // pred_fallthru
    _

// kernel: tile.1
$region0: #{tile.1}
  #allocation0 [shape = 's32[1]{0}', space=sflag, size = 0x4, scoped, tag = 'scoped memory for tile.1']
  %s0 = inlined_call_operand.<no memory space> [shape: f32[], index: 0, kind: input, shape index: {}]
  %s1 = inlined_call_operand.vmem [shape: f32[1,128], index: 1, kind: output, shape index: {}]
  %v2 = vstv %s0
  %3 = vst [vmem:[%s1] sm:$0x1] %v2

// kernel: _lambda_.13
$region0: #{_lambda_.13}
  #allocation0 [shape = 'u32[]', space=smem, size = 0x4, offset = 0x4, fixed_abs, tag = 'smem constant byte address 0x4 - core index']
  #allocation1 [shape = 'u32[144,128]{1,0:T(1,128)}', space=vmem, size = 0x12000, scoped, tag = 'internal scratch']
  %s0 = inlined_call_operand.vmem [shape: bf16[128,64], index: 0, kind: input, shape index: {}]
  %s1 = inlined_call_operand.vmem [shape: bf16[64,128], index: 1, kind: input, shape index: {}]
  %s2 = inlined_call_operand.vmem [shape: f32[1,128], index: 2, kind: input, shape index: {}]
  %s3 = inlined_call_operand.vmem [shape: bf16[128,128], index: 3, kind: output, shape index: {}]
  %s4 = sld [smem:[#allocation0]]
  $region22: #{_lambda_.13} parent=0
    _
  %s6 = ssub.s32 1, %s4
  %s7 = scalar_select 0, %s6, %s4
  // Predicated region
  $region2: #{_lambda_.13} parent=0 // pred_check
    _
  $region3: #{_lambda_.13} parent=0 // pred_check_branch
    %9 = sbr.rel (0) target = $region5
  $region4: #{_lambda_.13} parent=0 // pred_region
    _
  $region5: #{_lambda_.13} parent=0 // pred_fallthru
    _
  // Predicated region
  $region6: #{_lambda_.13} parent=0 // pred_check
    _
  $region7: #{_lambda_.13} parent=0 // pred_check_branch
    %11 = sbr.rel (0) target = $region9
  $region8: #{_lambda_.13} parent=0 // pred_region
    _
  $region9: #{_lambda_.13} parent=0 // pred_fallthru
    _
  // Predicated region
  $region10: #{_lambda_.13} parent=0 // pred_check
    _
  $region11: #{_lambda_.13} parent=0 // pred_check_branch
    %13 = sbr.rel (0) target = $region13
  $region12: #{_lambda_.13} parent=0 // pred_region
    _
  $region13: #{_lambda_.13} parent=0 // pred_fallthru
    _
  %v15 = vld [vmem:[%s0] sm:$0xf]
  %v16 = vld [vmem:[%s0 + $0x4] sm:$0xf]
  %v17 = vld [vmem:[%s0 + $0x8] sm:$0xf]
  %v18 = vld [vmem:[%s0 + $0xc] sm:$0xf]
  %v19 = vld [vmem:[%s0 + $0x10] sm:$0xf]
  %v20 = vld [vmem:[%s0 + $0x14] sm:$0xf]
  %v21 = vld [vmem:[%s0 + $0x18] sm:$0xf]
  %v22 = vld [vmem:[%s0 + $0x1c] sm:$0xf]
  %v23 = vld [vmem:[%s0 + $0x20] sm:$0xf]
  %v24 = vld [vmem:[%s0 + $0x24] sm:$0xf]
  %v25 = vld [vmem:[%s0 + $0x28] sm:$0xf]
  %v26 = vld [vmem:[%s0 + $0x2c] sm:$0xf]
  %v27 = vld [vmem:[%s0 + $0x30] sm:$0xf]
  %v28 = vld [vmem:[%s0 + $0x34] sm:$0xf]
  %v29 = vld [vmem:[%s0 + $0x38] sm:$0xf]
  %v30 = vld [vmem:[%s0 + $0x3c] sm:$0xf]
  %v31 = vld [vmem:[%s1] sm:$0xf]
  %v32 = vld [vmem:[%s1 + $0x4] sm:$0xf]
  %v33 = vld [vmem:[%s1 + $0x8] sm:$0xf]
  %v34 = vld [vmem:[%s1 + $0xc] sm:$0xf]
  %v35 = vld [vmem:[%s1 + $0x10] sm:$0xf]
  %v36 = vld [vmem:[%s1 + $0x14] sm:$0xf]
  %v37 = vld [vmem:[%s1 + $0x18] sm:$0xf]
  %v38 = vld [vmem:[%s1 + $0x1c] sm:$0xf]
  %v39 = vld [vmem:[%s2] sm:$0x1]
  %v41 = vlaneseq
  %v42 = vshrl.u32 %v41, 7
  %v43 = vsub.s32 0, %v42
  %v44 = vrot.slane %v39, %v43
  %v62 = vunpack.c.l.b16 %v15
  %v63 = vunpack.c.l.b16 %v16
  %v64 = vunpack.c.l.b16 %v17
  %v65 = vunpack.c.l.b16 %v18
  %v66 = vunpack.c.l.b16 %v19
  %v67 = vunpack.c.l.b16 %v20
  %v68 = vunpack.c.l.b16 %v21
  %v69 = vunpack.c.l.b16 %v22
  %v70 = vunpack.c.l.b16 %v23
  %v71 = vunpack.c.l.b16 %v24
  %v72 = vunpack.c.l.b16 %v25
  %v73 = vunpack.c.l.b16 %v26
  %v74 = vunpack.c.l.b16 %v27
  %v75 = vunpack.c.l.b16 %v28
  %v76 = vunpack.c.l.b16 %v29
  %v77 = vunpack.c.l.b16 %v30
  %v78 = vpack.c.b16 %v63, %v62
  %v79 = vpack.c.b16 %v65, %v64
  %v80 = vpack.c.b16 %v67, %v66
  %v81 = vpack.c.b16 %v69, %v68
  %v82 = vpack.c.b16 %v71, %v70
  %v83 = vpack.c.b16 %v73, %v72
  %v84 = vpack.c.b16 %v75, %v74
  %v85 = vpack.c.b16 %v77, %v76
  %v94 = vunpack.c.l.b16 %v31
  %v95 = vunpack.c.l.b16 %v32
  %v96 = vunpack.c.l.b16 %v33
  %v97 = vunpack.c.l.b16 %v34
  %v98 = vunpack.c.l.b16 %v35
  %v99 = vunpack.c.l.b16 %v36
  %v100 = vunpack.c.l.b16 %v37
  %v101 = vunpack.c.l.b16 %v38
  %v102 = vpack.c.b16 %v95, %v94
  %v103 = vpack.c.b16 %v97, %v96
  %v104 = vpack.c.b16 %v99, %v98
  %v105 = vpack.c.b16 %v101, %v100
  %vm110 = vcmask 523264
  %v112 = vsel %vm110, %v78, 0
  %v115 = vsel %vm110, %v79, 0
  %v118 = vsel %vm110, %v80, 0
  %v121 = vsel %vm110, %v81, 0
  %v124 = vsel %vm110, %v82, 0
  %v127 = vsel %vm110, %v83, 0
  %v130 = vsel %vm110, %v84, 0
  %v133 = vsel %vm110, %v85, 0
  %135 = vmatprep.subr.bf16.mxu0 0
  %136 = vmatpush1.bf16.msra.mxu0 0
  %137 = vmatprep.subr.bf16.mxu0 0
  %138 = vmatpush1.bf16.msra.mxu0 0
  %139 = vmatprep.subr.bf16.mxu0 0
  %140 = vmatpush1.bf16.msra.mxu0 0
  %141 = vmatprep.subr.bf16.mxu0 0
  %142 = vmatpush1.bf16.msra.mxu0 0
  %143 = vmatprep.subr.bf16.mxu0 0
  %144 = vmatpush1.bf16.msra.mxu0 %v105
  %145 = vmatprep.subr.bf16.mxu0 0
  %146 = vmatpush1.bf16.msra.mxu0 %v104
  %147 = vmatprep.subr.bf16.mxu0 0
  %148 = vmatpush1.bf16.msra.mxu0 %v103
  %149 = vmatprep.subr.bf16.mxu0 0
  %150 = vmatpush1.bf16.msra.mxu0 %v102
  %151 = vmatprep.subr.bf16.mxu0 0
  %152 = vmatpush2.bf16.msra.mxu0 0
  %153 = vmatprep.subr.bf16.mxu0 0
  %154 = vmatpush2.bf16.msra.mxu0 0
  %155 = vmatprep.subr.bf16.mxu0 0
  %156 = vmatpush2.bf16.msra.mxu0 0
  %157 = vmatprep.subr.bf16.mxu0 0
  %158 = vmatpush2.bf16.msra.mxu0 0
  %159 = vmatprep.subr.bf16.mxu0 0
  %160 = vmatpush2.bf16.msra.mxu0 0
  %161 = vmatprep.subr.bf16.mxu0 0
  %162 = vmatpush2.bf16.msra.mxu0 0
  %163 = vmatprep.subr.bf16.mxu0 0
  %164 = vmatpush2.bf16.msra.mxu0 0
  %165 = vmatprep.subr.bf16.mxu0 0
  %166 = vmatpush2.bf16.msra.mxu0 0
  %167 = vmatprep.mubr.bf16.mxu0 0
  %168 = vmatmul.mubr.bf16.gmra.mxu0 %v112
  %v169 = vpop.f32.mrf.mxu0
  %v170 = vadd.f32 %v44, %v169
  %v171 = vpop.f32.mrf.mxu0
  %v172 = vpop.f32.mrf.mxu0
  %v173 = vadd.f32 %v44, %v172
  %v174 = vpop.f32.mrf.mxu0
  %175 = vmatprep.mubr.bf16.mxu0 0
  %176 = vmatmul.mubr.bf16.gmra.mxu0 %v115
  %v177 = vpop.f32.mrf.mxu0
  %v178 = vadd.f32 %v44, %v177
  %v179 = vpop.f32.mrf.mxu0
  %v180 = vpop.f32.mrf.mxu0
  %v181 = vadd.f32 %v44, %v180
  %v182 = vpop.f32.mrf.mxu0
  %183 = vmatprep.mubr.bf16.mxu0 0
  %184 = vmatmul.mubr.bf16.gmra.mxu0 %v118
  %v185 = vpop.f32.mrf.mxu0
  %v186 = vadd.f32 %v44, %v185
  %v187 = vpop.f32.mrf.mxu0
  %v188 = vpop.f32.mrf.mxu0
  %v189 = vadd.f32 %v44, %v188
  %v190 = vpop.f32.mrf.mxu0
  %191 = vmatprep.mubr.bf16.mxu0 0
  %192 = vmatmul.mubr.bf16.gmra.mxu0 %v121
  %v193 = vpop.f32.mrf.mxu0
  %v194 = vadd.f32 %v44, %v193
  %v195 = vpop.f32.mrf.mxu0
  %v196 = vpop.f32.mrf.mxu0
  %v197 = vadd.f32 %v44, %v196
  %v198 = vpop.f32.mrf.mxu0
  %199 = vmatprep.mubr.bf16.mxu0 0
  %200 = vmatmul.mubr.bf16.gmra.mxu0 %v124
  %v201 = vpop.f32.mrf.mxu0
  %v202 = vadd.f32 %v44, %v201
  %v203 = vpop.f32.mrf.mxu0
  %v204 = vpop.f32.mrf.mxu0
  %v205 = vadd.f32 %v44, %v204
  %v206 = vpop.f32.mrf.mxu0
  %207 = vmatprep.mubr.bf16.mxu0 0
  %208 = vmatmul.mubr.bf16.gmra.mxu0 %v127
  %v209 = vpop.f32.mrf.mxu0
  %v210 = vadd.f32 %v44, %v209
  %v211 = vpop.f32.mrf.mxu0
  %v212 = vpop.f32.mrf.mxu0
  %v213 = vadd.f32 %v44, %v212
  %v214 = vpop.f32.mrf.mxu0
  %215 = vmatprep.mubr.bf16.mxu0 0
  %216 = vmatmul.mubr.bf16.gmra.mxu0 %v130
  %v217 = vpop.f32.mrf.mxu0
  %v218 = vadd.f32 %v44, %v217
  %v219 = vpop.f32.mrf.mxu0
  %v220 = vpop.f32.mrf.mxu0
  %v221 = vadd.f32 %v44, %v220
  %v222 = vpop.f32.mrf.mxu0
  %223 = vmatprep.mubr.bf16.mxu0 0
  %224 = vmatmul.mubr.bf16.gmra.mxu0 %v133
  %v225 = vpop.f32.mrf.mxu0
  %v226 = vadd.f32 %v44, %v225
  %v227 = vpop.f32.mrf.mxu0
  %v228 = vpop.f32.mrf.mxu0
  %v229 = vadd.f32 %v44, %v228
  %v230 = vpop.f32.mrf.mxu0
  %231 = vdwg.mxu0
  %v232 = vpack.c.bf16 %v173, %v170
  %v233 = vpack.c.bf16 %v181, %v178
  %v234 = vpack.c.bf16 %v189, %v186
  %v235 = vpack.c.bf16 %v197, %v194
  %v236 = vpack.c.bf16 %v205, %v202
  %v237 = vpack.c.bf16 %v213, %v210
  %v238 = vpack.c.bf16 %v221, %v218
  %v239 = vpack.c.bf16 %v229, %v226
  %v248 = vunpack.c.l.b16 %v232
  %v249 = vunpack.c.h.b16 %v232
  %v250 = vunpack.c.l.b16 %v233
  %v251 = vunpack.c.h.b16 %v233
  %v252 = vunpack.c.l.b16 %v234
  %v253 = vunpack.c.h.b16 %v234
  %v254 = vunpack.c.l.b16 %v235
  %v255 = vunpack.c.h.b16 %v235
  %v256 = vunpack.c.l.b16 %v236
  %v257 = vunpack.c.h.b16 %v236
  %v258 = vunpack.c.l.b16 %v237
  %v259 = vunpack.c.h.b16 %v237
  %v260 = vunpack.c.l.b16 %v238
  %v261 = vunpack.c.h.b16 %v238
  %v262 = vunpack.c.l.b16 %v239
  %v263 = vunpack.c.h.b16 %v239
  %v264 = vpack.c.b16 %v248, %v248
  %v265 = vpack.c.b16 %v249, %v249
  %v266 = vpack.c.b16 %v250, %v250
  %v267 = vpack.c.b16 %v251, %v251
  %v268 = vpack.c.b16 %v252, %v252
  %v269 = vpack.c.b16 %v253, %v253
  %v270 = vpack.c.b16 %v254, %v254
  %v271 = vpack.c.b16 %v255, %v255
  %v272 = vpack.c.b16 %v256, %v256
  %v273 = vpack.c.b16 %v257, %v257
  %v274 = vpack.c.b16 %v258, %v258
  %v275 = vpack.c.b16 %v259, %v259
  %v276 = vpack.c.b16 %v260, %v260
  %v277 = vpack.c.b16 %v261, %v261
  %v278 = vpack.c.b16 %v262, %v262
  %v279 = vpack.c.b16 %v263, %v263
  %296 = vst [vmem:[%s3] sm:$0xf] %v264
  %297 = vst [vmem:[%s3 + $0x4] sm:$0xf] %v265
  %298 = vst [vmem:[%s3 + $0x8] sm:$0xf] %v266
  %299 = vst [vmem:[%s3 + $0xc] sm:$0xf] %v267
  %300 = vst [vmem:[%s3 + $0x10] sm:$0xf] %v268
  %301 = vst [vmem:[%s3 + $0x14] sm:$0xf] %v269
  %302 = vst [vmem:[%s3 + $0x18] sm:$0xf] %v270
  %303 = vst [vmem:[%s3 + $0x1c] sm:$0xf] %v271
  %304 = vst [vmem:[%s3 + $0x20] sm:$0xf] %v272
  %305 = vst [vmem:[%s3 + $0x24] sm:$0xf] %v273
  %306 = vst [vmem:[%s3 + $0x28] sm:$0xf] %v274
  %307 = vst [vmem:[%s3 + $0x2c] sm:$0xf] %v275
  %308 = vst [vmem:[%s3 + $0x30] sm:$0xf] %v276
  %309 = vst [vmem:[%s3 + $0x34] sm:$0xf] %v277
  %310 = vst [vmem:[%s3 + $0x38] sm:$0xf] %v278
  %311 = vst [vmem:[%s3 + $0x3c] sm:$0xf] %v279
  // Predicated region
  $region14: #{_lambda_.13} parent=0 // pred_check
    _
  $region15: #{_lambda_.13} parent=0 // pred_check_branch
    %313 = sbr.rel (0) target = $region17
  $region16: #{_lambda_.13} parent=0 // pred_region
    _
  $region17: #{_lambda_.13} parent=0 // pred_fallthru
    _
  // Predicated region
  $region18: #{_lambda_.13} parent=0 // pred_check
    _
  $region19: #{_lambda_.13} parent=0 // pred_check_branch
    %315 = sbr.rel (0) target = $region21
  $region20: #{_lambda_.13} parent=0 // pred_region
    _
  $region21: #{_lambda_.13} parent=0 // pred_fallthru
    _

// kernel: _lambda_.12
$region0: #{_lambda_.12}
  #allocation0 [shape = 'u32[]', space=smem, size = 0x4, offset = 0x4, fixed_abs, tag = 'smem constant byte address 0x4 - core index']
  #allocation1 [shape = 'u32[144,128]{1,0:T(1,128)}', space=vmem, size = 0x12000, scoped, tag = 'internal scratch']
  %s0 = inlined_call_operand.vmem [shape: bf16[2,10,8,192], index: 0, kind: input, shape index: {}]
  %s1 = inlined_call_operand.vmem [shape: bf16[2,10,8,192], index: 1, kind: input, shape index: {}]
  %s2 = inlined_call_operand.vmem [shape: bf16[3,192,64], index: 2, kind: input, shape index: {}]
  %s3 = inlined_call_operand.vmem [shape: bf16[3,192,64], index: 3, kind: input, shape index: {}]
  %s4 = inlined_call_operand.vmem [shape: f32[1,64], index: 4, kind: input, shape index: {}]
  %s5 = inlined_call_operand.vmem [shape: bf16[2,8,8,64], index: 5, kind: output, shape index: {}]
  %s6 = sld [smem:[#allocation0]]
  $region53: #{_lambda_.12} parent=0
    _
  %s8 = ssub.s32 1, %s6
  %s9 = scalar_select 0, %s8, %s6
  loop: start=0, step=1, limit=4
  $region2: #{_lambda_.12} parent=0 // loop_pre_header
    _
  $region3: #{_lambda_.12} parent=0 // loop_header
    %s11 = sphi 0, %s15
    %p12 = scmp.ge.s32.totalorder %s11, 4
    %s21 = sphi 0, %s23
    %s24 = sphi 0, %s21
    %s25 = sphi 0, %s24
    %s41 = sphi 0, %s25
    %s47 = sphi 0, %s49
    %s50 = sphi 0, %s47
    %s51 = sphi 0, %s50
    %s67 = sphi 0, %s51
    %s71 = sphi 0, %s71
    %s73 = sphi 0, %s71
    %s74 = sphi 0, %s73
    %s88 = sphi 0, %s74
    %s92 = sphi 0, %s92
    %s94 = sphi 0, %s92
    %s95 = sphi 0, %s94
    %s109 = sphi 0, %s95
    %s113 = sphi 0, %s113
    %s115 = sphi 0, %s113
    %s116 = sphi 0, %s115
    %s130 = sphi 0, %s116
    %s136 = sphi 0, %s138
    %s139 = sphi 0, %s136
    %s140 = sphi 0, %s139
    %s156 = sphi 0, %s140
  $region4: #{_lambda_.12} parent=0 // loop_header_branch
    %14 = sbr.rel (%p12) target = $region8
  $region5: #{_lambda_.12} parent=0 // loop_body
    %s16 = ssub.s32 %s11, 1
    %s17 = ssub.s32 %s11, 2
    %s18 = sadd.s32 %s11, 1
    %s19 = ssub.s32 %s11, %s18
    %p20 = scmp.eq.s32.totalorder %s19, 0
    %s22 = sadd.s32 %s21, 1
    %s23 = scalar_select %p20, %s21, %s22
    %p26 = pneg %p20
    %p27 = scmp.eq.s32.totalorder %s11, 1
    %p28 = por %p26, %p27
    %p29 = scmp.ne.s32.totalorder %s21, %s24
    %p30 = scmp.eq.s32.totalorder %s11, 0
    %p31 = por %p29, %p30
    %p32 = scmp.ne.s32.totalorder %s21, %s24
    %p33 = scmp.eq.s32.totalorder %s16, 1
    %p34 = por %p32, %p33
    %p35 = scmp.ne.s32.totalorder %s24, %s25
    %p36 = scmp.eq.s32.totalorder %s16, 0
    %p37 = por %p35, %p36
    %p38 = scmp.ne.s32.totalorder %s24, %s25
    %p39 = scmp.eq.s32.totalorder %s17, 1
    %p40 = por %p38, %p39
    %p42 = scmp.ne.s32.totalorder %s25, %s41
    %p43 = scmp.eq.s32.totalorder %s17, 0
    %p44 = por %p42, %p43
    %s45 = ssub.s32 %s11, %s18
    %p46 = scmp.eq.s32.totalorder %s45, 0
    %s48 = sadd.s32 %s47, 1
    %s49 = scalar_select %p46, %s47, %s48
    %p52 = pneg %p46
    %p53 = scmp.eq.s32.totalorder %s11, 1
    %p54 = por %p52, %p53
    %p55 = scmp.ne.s32.totalorder %s47, %s50
    %p56 = scmp.eq.s32.totalorder %s11, 0
    %p57 = por %p55, %p56
    %p58 = scmp.ne.s32.totalorder %s47, %s50
    %p59 = scmp.eq.s32.totalorder %s16, 1
    %p60 = por %p58, %p59
    %p61 = scmp.ne.s32.totalorder %s50, %s51
    %p62 = scmp.eq.s32.totalorder %s16, 0
    %p63 = por %p61, %p62
    %p64 = scmp.ne.s32.totalorder %s50, %s51
    %p65 = scmp.eq.s32.totalorder %s17, 1
    %p66 = por %p64, %p65
    %p68 = scmp.ne.s32.totalorder %s51, %s67
    %p69 = scmp.eq.s32.totalorder %s17, 0
    %p70 = por %p68, %p69
    %s72 = sadd.s32 %s71, 1
    %p75 = scmp.eq.s32.totalorder %s11, 1
    %p76 = scmp.ne.s32.totalorder %s71, %s73
    %p77 = scmp.eq.s32.totalorder %s11, 0
    %p78 = por %p76, %p77
    %p79 = scmp.ne.s32.totalorder %s71, %s73
    %p80 = scmp.eq.s32.totalorder %s16, 1
    %p81 = por %p79, %p80
    %p82 = scmp.ne.s32.totalorder %s73, %s74
    %p83 = scmp.eq.s32.totalorder %s16, 0
    %p84 = por %p82, %p83
    %p85 = scmp.ne.s32.totalorder %s73, %s74
    %p86 = scmp.eq.s32.totalorder %s17, 1
    %p87 = por %p85, %p86
    %p89 = scmp.ne.s32.totalorder %s74, %s88
    %p90 = scmp.eq.s32.totalorder %s17, 0
    %p91 = por %p89, %p90
    %s93 = sadd.s32 %s92, 1
    %p96 = scmp.eq.s32.totalorder %s11, 1
    %p97 = scmp.ne.s32.totalorder %s92, %s94
    %p98 = scmp.eq.s32.totalorder %s11, 0
    %p99 = por %p97, %p98
    %p100 = scmp.ne.s32.totalorder %s92, %s94
    %p101 = scmp.eq.s32.totalorder %s16, 1
    %p102 = por %p100, %p101
    %p103 = scmp.ne.s32.totalorder %s94, %s95
    %p104 = scmp.eq.s32.totalorder %s16, 0
    %p105 = por %p103, %p104
    %p106 = scmp.ne.s32.totalorder %s94, %s95
    %p107 = scmp.eq.s32.totalorder %s17, 1
    %p108 = por %p106, %p107
    %p110 = scmp.ne.s32.totalorder %s95, %s109
    %p111 = scmp.eq.s32.totalorder %s17, 0
    %p112 = por %p110, %p111
    %s114 = sadd.s32 %s113, 1
    %p117 = scmp.eq.s32.totalorder %s11, 1
    %p118 = scmp.ne.s32.totalorder %s113, %s115
    %p119 = scmp.eq.s32.totalorder %s11, 0
    %p120 = por %p118, %p119
    %p121 = scmp.ne.s32.totalorder %s113, %s115
    %p122 = scmp.eq.s32.totalorder %s16, 1
    %p123 = por %p121, %p122
    %p124 = scmp.ne.s32.totalorder %s115, %s116
    %p125 = scmp.eq.s32.totalorder %s16, 0
    %p126 = por %p124, %p125
    %p127 = scmp.ne.s32.totalorder %s115, %s116
    %p128 = scmp.eq.s32.totalorder %s17, 1
    %p129 = por %p127, %p128
    %p131 = scmp.ne.s32.totalorder %s116, %s130
    %p132 = scmp.eq.s32.totalorder %s17, 0
    %p133 = por %p131, %p132
    %s134 = ssub.s32 %s11, %s18
    %p135 = scmp.eq.s32.totalorder %s134, 0
    %s137 = sadd.s32 %s136, 1
    %s138 = scalar_select %p135, %s136, %s137
    %p141 = pneg %p135
    %p142 = scmp.eq.s32.totalorder %s11, 1
    %p143 = por %p141, %p142
    %p144 = scmp.ne.s32.totalorder %s136, %s139
    %p145 = scmp.eq.s32.totalorder %s11, 0
    %p146 = por %p144, %p145
    %p147 = scmp.ne.s32.totalorder %s136, %s139
    %p148 = scmp.eq.s32.totalorder %s16, 1
    %p149 = por %p147, %p148
    %p150 = scmp.ne.s32.totalorder %s139, %s140
    %p151 = scmp.eq.s32.totalorder %s16, 0
    %p152 = por %p150, %p151
    %p153 = scmp.ne.s32.totalorder %s139, %s140
    %p154 = scmp.eq.s32.totalorder %s17, 1
    %p155 = por %p153, %p154
    %p157 = scmp.ne.s32.totalorder %s140, %s156
    %p158 = scmp.eq.s32.totalorder %s17, 0
    %p159 = por %p157, %p158
    %p160 = scmp.le.s32.totalorder 1, %s11
    %p161 = scmp.lt.s32.totalorder %s11, 3
    %p162 = pnand %p160, %p161
    %p163 = pneg %p162
    // Predicated region
    $region9: #{_lambda_.12} parent=5 // pred_check
      _
    $region10: #{_lambda_.12} parent=5 // pred_check_branch
      %165 = sbr.rel (%p162) target = $region12
    $region11: #{_lambda_.12} parent=5 // pred_region
      %s166 = ssub.s32 %s11, 1
      // Predicated region
      $region13: #{_lambda_.12} parent=11 // pred_check
        %p167 = pneg %p84
      $region14: #{_lambda_.12} parent=11 // pred_check_branch
        %169 = sbr.rel (%p167) target = $region16
      $region15: #{_lambda_.12} parent=11 // pred_region
        _
      $region16: #{_lambda_.12} parent=11 // pred_fallthru
        _
      // Predicated region
      $region17: #{_lambda_.12} parent=11 // pred_check
        %p170 = pneg %p105
      $region18: #{_lambda_.12} parent=11 // pred_check_branch
        %172 = sbr.rel (%p170) target = $region20
      $region19: #{_lambda_.12} parent=11 // pred_region
        _
      $region20: #{_lambda_.12} parent=11 // pred_fallthru
        _
      // Predicated region
      $region21: #{_lambda_.12} parent=11 // pred_check
        %p173 = pneg %p126
      $region22: #{_lambda_.12} parent=11 // pred_check_branch
        %175 = sbr.rel (%p173) target = $region24
      $region23: #{_lambda_.12} parent=11 // pred_region
        _
      $region24: #{_lambda_.12} parent=11 // pred_fallthru
        _
    $region12: #{_lambda_.12} parent=5 // pred_fallthru
      _
    %p176 = scmp.lt.s32.totalorder %s11, 2
    // Predicated region
    $region25: #{_lambda_.12} parent=5 // pred_check
      %p177 = pneg %p176
    $region26: #{_lambda_.12} parent=5 // pred_check_branch
      %179 = sbr.rel (%p177) target = $region28
    $region27: #{_lambda_.12} parent=5 // pred_region
      // Predicated region
      $region29: #{_lambda_.12} parent=27 // pred_check
        %p180 = pneg %p31
      $region30: #{_lambda_.12} parent=27 // pred_check_branch
        %182 = sbr.rel (%p180) target = $region32
      $region31: #{_lambda_.12} parent=27 // pred_region
        %p183 = scmp.lt.s32.totalorder %s11, 1
        %s184 = scalar_select %p183, %s11, 1
        %s185 = smul.addr %s184, 20
        %s186 = smul.addr %s185, 4
        %s187 = scalar_lea.vmem %s0, %s186
      $region32: #{_lambda_.12} parent=27 // pred_fallthru
        _
      // Predicated region
      $region33: #{_lambda_.12} parent=27 // pred_check
        %p188 = pneg %p57
      $region34: #{_lambda_.12} parent=27 // pred_check_branch
        %190 = sbr.rel (%p188) target = $region36
      $region35: #{_lambda_.12} parent=27 // pred_region
        %p191 = scmp.lt.s32.totalorder %s11, 1
        %s192 = scalar_select %p191, %s11, 1
        %s193 = smul.addr %s192, 20
        %s194 = smul.addr %s193, 4
        %s195 = scalar_lea.vmem %s1, %s194
      $region36: #{_lambda_.12} parent=27 // pred_fallthru
        _
    $region28: #{_lambda_.12} parent=5 // pred_fallthru
      _
    %p196 = scmp.le.s32.totalorder 1, %s11
    %p197 = scmp.lt.s32.totalorder %s11, 3
    %p198 = pnand %p196, %p197
    %p199 = pneg %p198
    // Predicated region
    $region37: #{_lambda_.12} parent=5 // pred_check
      _
    $region38: #{_lambda_.12} parent=5 // pred_check_branch
      %201 = sbr.rel (%p198) target = $region40
    $region39: #{_lambda_.12} parent=5 // pred_region
      %s202 = ssub.s32 %s11, 1
      %p203 = scmp.lt.s32.totalorder %s16, 1
      %s204 = scalar_select %p203, %s16, 1
      %s205 = smul.addr %s204, 20
      %s206 = smul.addr %s205, 4
      %s207 = scalar_lea.vmem %s0, %s206
      %p208 = pneg %p37
      %p209 = pneg %p34
      %p210 = scmp.lt.s32.totalorder %s16, 1
      %s211 = scalar_select %p210, %s16, 1
      %s212 = smul.addr %s211, 20
      %s213 = smul.addr %s212, 4
      %s214 = scalar_lea.vmem %s1, %s213
      %p215 = pneg %p63
      %p216 = pneg %p60
      %p217 = pneg %p84
      %p218 = pneg %p81
      %p219 = pneg %p105
      %p220 = pneg %p102
      %p221 = pneg %p126
      %p222 = pneg %p123
      %p223 = pneg %p152
      %p224 = pneg %p149
      %p225 = scmp.lt.s32.totalorder %s16, 1
      %s226 = scalar_select %p225, %s16, 1
      %s227 = smul.addr %s226, 8
      %s228 = smul.addr %s227, 4
      %s229 = scalar_lea.vmem %s5, %s228
      %p230 = scmp.lt.s32.totalorder %s16, 1
      %s231 = scalar_select %p230, %s16, 1
      %s232 = smul.addr %s231, 20
      %s233 = smul.addr %s232, 4
      %s234 = scalar_lea.vmem %s0, %s233
      %p235 = scmp.lt.s32.totalorder %s16, 1
      %s236 = scalar_select %p235, %s16, 1
      %s237 = smul.addr %s236, 20
      %s238 = smul.addr %s237, 4
      %s239 = scalar_lea.vmem %s1, %s238
      %p240 = scmp.lt.s32.totalorder %s16, 1
      %s241 = scalar_select %p240, %s16, 1
      %s242 = smul.addr %s241, 8
      %s243 = smul.addr %s242, 4
      %s244 = scalar_lea.vmem %s5, %s243
      %v246 = vld [vmem:[%s234] sm:$0xff]
      %v247 = vld [vmem:[%s234 + $0x8] sm:$0xff]
      %v248 = vld [vmem:[%s234 + $0x10] sm:$0xff]
      %v249 = vld [vmem:[%s234 + $0x18] sm:$0xff]
      %v250 = vld [vmem:[%s234 + $0x20] sm:$0xff]
      %v251 = vld [vmem:[%s234 + $0x28] sm:$0xff]
      %v252 = vld [vmem:[%s234 + $0x30] sm:$0xff]
      %v253 = vld [vmem:[%s234 + $0x38] sm:$0xff]
      %v254 = vld [vmem:[%s234 + $0x40] sm:$0xff]
      %v255 = vld [vmem:[%s234 + $0x48] sm:$0xff]
      %v256 = vld [vmem:[%s2] sm:$0xf]
      %v257 = vld [vmem:[%s2 + $0x4] sm:$0xf]
      %v258 = vld [vmem:[%s2 + $0x8] sm:$0xf]
      %v259 = vld [vmem:[%s2 + $0xc] sm:$0xf]
      %v260 = vld [vmem:[%s2 + $0x10] sm:$0xf]
      %v261 = vld [vmem:[%s2 + $0x14] sm:$0xf]
      %v262 = vld [vmem:[%s2 + $0x18] sm:$0xf]
      %v263 = vld [vmem:[%s2 + $0x1c] sm:$0xf]
      %v264 = vld [vmem:[%s2 + $0x20] sm:$0xf]
      %v265 = vld [vmem:[%s2 + $0x24] sm:$0xf]
      %v266 = vld [vmem:[%s2 + $0x28] sm:$0xf]
      %v267 = vld [vmem:[%s2 + $0x2c] sm:$0xf]
      %v268 = vld [vmem:[%s2 + $0x30] sm:$0xf]
      %v269 = vld [vmem:[%s2 + $0x34] sm:$0xf]
      %v270 = vld [vmem:[%s2 + $0x38] sm:$0xf]
      %v271 = vld [vmem:[%s2 + $0x3c] sm:$0xf]
      %v272 = vld [vmem:[%s2 + $0x40] sm:$0xf]
      %v273 = vld [vmem:[%s2 + $0x44] sm:$0xf]
      %v274 = vld [vmem:[%s2 + $0x48] sm:$0xf]
      %v275 = vld [vmem:[%s2 + $0x4c] sm:$0xf]
      %v276 = vld [vmem:[%s2 + $0x50] sm:$0xf]
      %v277 = vld [vmem:[%s2 + $0x54] sm:$0xf]
      %v278 = vld [vmem:[%s2 + $0x58] sm:$0xf]
      %v279 = vld [vmem:[%s2 + $0x5c] sm:$0xf]
      %s280 = scalar_lea.vmem %s2, 96
      %v281 = vld [vmem:[%s280] sm:$0xf]
      %v282 = vld [vmem:[%s280 + $0x4] sm:$0xf]
      %v283 = vld [vmem:[%s280 + $0x8] sm:$0xf]
      %v284 = vld [vmem:[%s280 + $0xc] sm:$0xf]
      %v285 = vld [vmem:[%s280 + $0x10] sm:$0xf]
      %v286 = vld [vmem:[%s280 + $0x14] sm:$0xf]
      %v287 = vld [vmem:[%s280 + $0x18] sm:$0xf]
      %v288 = vld [vmem:[%s280 + $0x1c] sm:$0xf]
      %v289 = vld [vmem:[%s280 + $0x20] sm:$0xf]
      %v290 = vld [vmem:[%s280 + $0x24] sm:$0xf]
      %v291 = vld [vmem:[%s280 + $0x28] sm:$0xf]
      %v292 = vld [vmem:[%s280 + $0x2c] sm:$0xf]
      %v293 = vld [vmem:[%s280 + $0x30] sm:$0xf]
      %v294 = vld [vmem:[%s280 + $0x34] sm:$0xf]
      %v295 = vld [vmem:[%s280 + $0x38] sm:$0xf]
      %v296 = vld [vmem:[%s280 + $0x3c] sm:$0xf]
      %v297 = vld [vmem:[%s280 + $0x40] sm:$0xf]
      %v298 = vld [vmem:[%s280 + $0x44] sm:$0xf]
      %v299 = vld [vmem:[%s280 + $0x48] sm:$0xf]
      %v300 = vld [vmem:[%s280 + $0x4c] sm:$0xf]
      %v301 = vld [vmem:[%s280 + $0x50] sm:$0xf]
      %v302 = vld [vmem:[%s280 + $0x54] sm:$0xf]
      %v303 = vld [vmem:[%s280 + $0x58] sm:$0xf]
      %v304 = vld [vmem:[%s280 + $0x5c] sm:$0xf]
      %v313 = vunpack.c.l.b16 %v247
      %v314 = vunpack.c.h.b16 %v247
      %v315 = vunpack.c.l.b16 %v248
      %v316 = vunpack.c.h.b16 %v248
      %v317 = vunpack.c.l.b16 %v249
      %v318 = vunpack.c.h.b16 %v249
      %v319 = vunpack.c.l.b16 %v250
      %v320 = vunpack.c.h.b16 %v250
      %v321 = vunpack.c.l.b16 %v251
      %v322 = vunpack.c.h.b16 %v251
      %v323 = vunpack.c.l.b16 %v252
      %v324 = vunpack.c.h.b16 %v252
      %v325 = vunpack.c.l.b16 %v253
      %v326 = vunpack.c.h.b16 %v253
      %v327 = vunpack.c.l.b16 %v254
      %v328 = vunpack.c.h.b16 %v254
      %v329 = vpack.c.b16 %v315, %v313
      %v330 = vpack.c.b16 %v316, %v314
      %v331 = vpack.c.b16 %v319, %v317
      %v332 = vpack.c.b16 %v320, %v318
      %v333 = vpack.c.b16 %v323, %v321
      %v334 = vpack.c.b16 %v324, %v322
      %v335 = vpack.c.b16 %v327, %v325
      %v336 = vpack.c.b16 %v328, %v326
      %v365 = vunpack.c.l.b16 %v281
      %v366 = vunpack.c.l.b16 %v282
      %v367 = vunpack.c.l.b16 %v283
      %v368 = vunpack.c.l.b16 %v284
      %v369 = vunpack.c.l.b16 %v285
      %v370 = vunpack.c.l.b16 %v286
      %v371 = vunpack.c.l.b16 %v287
      %v372 = vunpack.c.l.b16 %v288
      %v373 = vunpack.c.l.b16 %v289
      %v374 = vunpack.c.l.b16 %v290
      %v375 = vunpack.c.l.b16 %v291
      %v376 = vunpack.c.l.b16 %v292
      %v377 = vunpack.c.l.b16 %v293
      %v378 = vunpack.c.l.b16 %v294
      %v379 = vunpack.c.l.b16 %v295
      %v380 = vunpack.c.l.b16 %v296
      %v381 = vunpack.c.l.b16 %v297
      %v382 = vunpack.c.l.b16 %v298
      %v383 = vunpack.c.l.b16 %v299
      %v384 = vunpack.c.l.b16 %v300
      %v385 = vunpack.c.l.b16 %v301
      %v386 = vunpack.c.l.b16 %v302
      %v387 = vunpack.c.l.b16 %v303
      %v388 = vunpack.c.l.b16 %v304
      %v389 = vpack.c.b16 %v366, %v365
      %v390 = vpack.c.b16 %v368, %v367
      %v391 = vpack.c.b16 %v370, %v369
      %v392 = vpack.c.b16 %v372, %v371
      %v393 = vpack.c.b16 %v374, %v373
      %v394 = vpack.c.b16 %v376, %v375
      %v395 = vpack.c.b16 %v378, %v377
      %v396 = vpack.c.b16 %v380, %v379
      %v397 = vpack.c.b16 %v382, %v381
      %v398 = vpack.c.b16 %v384, %v383
      %v399 = vpack.c.b16 %v386, %v385
      %v400 = vpack.c.b16 %v388, %v387
      %vm413 = vcmask 523264
      %v415 = vsel %vm413, %v330, 0
      %v418 = vsel %vm413, %v332, 0
      %v421 = vsel %vm413, %v334, 0
      %v424 = vsel %vm413, %v336, 0
      %426 = vmatprep.subr.bf16.mxu0 0
      %427 = vmatpush1.bf16.msra.mxu0 %v396
      %428 = vmatprep.subr.bf16.mxu0 0
      %429 = vmatpush1.bf16.msra.mxu0 %v395
      %430 = vmatprep.subr.bf16.mxu0 0
      %431 = vmatpush1.bf16.msra.mxu0 %v394
      %432 = vmatprep.subr.bf16.mxu0 0
      %433 = vmatpush1.bf16.msra.mxu0 %v393
      %434 = vmatprep.subr.bf16.mxu0 0
      %435 = vmatpush1.bf16.msra.mxu0 %v392
      %436 = vmatprep.subr.bf16.mxu0 0
      %437 = vmatpush1.bf16.msra.mxu0 %v391
      %438 = vmatprep.subr.bf16.mxu0 0
      %439 = vmatpush1.bf16.msra.mxu0 %v390
      %440 = vmatprep.subr.bf16.mxu0 0
      %441 = vmatpush1.bf16.msra.mxu0 %v389
      %442 = vmatprep.subr.bf16.mxu0 0
      %443 = vmatpush2.bf16.msra.mxu0 0
      %444 = vmatprep.subr.bf16.mxu0 0
      %445 = vmatpush2.bf16.msra.mxu0 0
      %446 = vmatprep.subr.bf16.mxu0 0
      %447 = vmatpush2.bf16.msra.mxu0 0
      %448 = vmatprep.subr.bf16.mxu0 0
      %449 = vmatpush2.bf16.msra.mxu0 0
      %450 = vmatprep.subr.bf16.mxu0 0
      %451 = vmatpush2.bf16.msra.mxu0 %v400
      %452 = vmatprep.subr.bf16.mxu0 0
      %453 = vmatpush2.bf16.msra.mxu0 %v399
      %454 = vmatprep.subr.bf16.mxu0 0
      %455 = vmatpush2.bf16.msra.mxu0 %v398
      %456 = vmatprep.subr.bf16.mxu0 0
      %457 = vmatpush2.bf16.msra.mxu0 %v397
      %458 = vmatprep.mubr.bf16.mxu0 %v415
      %459 = vmatmul.mubr.bf16.gmra.mxu0 %v329
      %v460 = vpop.f32.mrf.mxu0
      %v461 = vadd.f32 0.0, %v460
      %v462 = vpop.f32.mrf.mxu0
      %v463 = vpop.f32.mrf.mxu0
      %v464 = vadd.f32 0.0, %v463
      %v465 = vpop.f32.mrf.mxu0
      %466 = vmatprep.mubr.bf16.mxu0 %v418
      %467 = vmatmul.mubr.bf16.gmra.mxu0 %v331
      %v468 = vpop.f32.mrf.mxu0
      %v469 = vadd.f32 0.0, %v468
      %v470 = vpop.f32.mrf.mxu0
      %v471 = vpop.f32.mrf.mxu0
      %v472 = vadd.f32 0.0, %v471
      %v473 = vpop.f32.mrf.mxu0
      %474 = vmatprep.mubr.bf16.mxu0 %v421
      %475 = vmatmul.mubr.bf16.gmra.mxu0 %v333
      %v476 = vpop.f32.mrf.mxu0
      %v477 = vadd.f32 0.0, %v476
      %v478 = vpop.f32.mrf.mxu0
      %v479 = vpop.f32.mrf.mxu0
      %v480 = vadd.f32 0.0, %v479
      %v481 = vpop.f32.mrf.mxu0
      %482 = vmatprep.mubr.bf16.mxu0 %v424
      %483 = vmatmul.mubr.bf16.gmra.mxu0 %v335
      %v484 = vpop.f32.mrf.mxu0
      %v485 = vadd.f32 0.0, %v484
      %v486 = vpop.f32.mrf.mxu0
      %v487 = vpop.f32.mrf.mxu0
      %v488 = vadd.f32 0.0, %v487
      %v489 = vpop.f32.mrf.mxu0
      %490 = vdwg.mxu0
      %v492 = vunpack.c.l.b16 %v246
      %v493 = vunpack.c.h.b16 %v246
      %v494 = vpack.c.b16 %v313, %v492
      %v495 = vpack.c.b16 %v314, %v493
      %v496 = vpack.c.b16 %v317, %v315
      %v497 = vpack.c.b16 %v318, %v316
      %v498 = vpack.c.b16 %v321, %v319
      %v499 = vpack.c.b16 %v322, %v320
      %v500 = vpack.c.b16 %v325, %v323
      %v501 = vpack.c.b16 %v326, %v324
      %v530 = vunpack.c.l.b16 %v256
      %v531 = vunpack.c.l.b16 %v257
      %v532 = vunpack.c.l.b16 %v258
      %v533 = vunpack.c.l.b16 %v259
      %v534 = vunpack.c.l.b16 %v260
      %v535 = vunpack.c.l.b16 %v261
      %v536 = vunpack.c.l.b16 %v262
      %v537 = vunpack.c.l.b16 %v263
      %v538 = vunpack.c.l.b16 %v264
      %v539 = vunpack.c.l.b16 %v265
      %v540 = vunpack.c.l.b16 %v266
      %v541 = vunpack.c.l.b16 %v267
      %v542 = vunpack.c.l.b16 %v268
      %v543 = vunpack.c.l.b16 %v269
      %v544 = vunpack.c.l.b16 %v270
      %v545 = vunpack.c.l.b16 %v271
      %v546 = vunpack.c.l.b16 %v272
      %v547 = vunpack.c.l.b16 %v273
      %v548 = vunpack.c.l.b16 %v274
      %v549 = vunpack.c.l.b16 %v275
      %v550 = vunpack.c.l.b16 %v276
      %v551 = vunpack.c.l.b16 %v277
      %v552 = vunpack.c.l.b16 %v278
      %v553 = vunpack.c.l.b16 %v279
      %v554 = vpack.c.b16 %v531, %v530
      %v555 = vpack.c.b16 %v533, %v532
      %v556 = vpack.c.b16 %v535, %v534
      %v557 = vpack.c.b16 %v537, %v536
      %v558 = vpack.c.b16 %v539, %v538
      %v559 = vpack.c.b16 %v541, %v540
      %v560 = vpack.c.b16 %v543, %v542
      %v561 = vpack.c.b16 %v545, %v544
      %v562 = vpack.c.b16 %v547, %v546
      %v563 = vpack.c.b16 %v549, %v548
      %v564 = vpack.c.b16 %v551, %v550
      %v565 = vpack.c.b16 %v553, %v552
      %v579 = vsel %vm413, %v495, 0
      %v582 = vsel %vm413, %v497, 0
      %v585 = vsel %vm413, %v499, 0
      %v588 = vsel %vm413, %v501, 0
      %590 = vmatprep.subr.bf16.mxu0 0
      %591 = vmatpush1.bf16.msra.mxu0 %v561
      %592 = vmatprep.subr.bf16.mxu0 0
      %593 = vmatpush1.bf16.msra.mxu0 %v560
      %594 = vmatprep.subr.bf16.mxu0 0
      %595 = vmatpush1.bf16.msra.mxu0 %v559
      %596 = vmatprep.subr.bf16.mxu0 0
      %597 = vmatpush1.bf16.msra.mxu0 %v558
      %598 = vmatprep.subr.bf16.mxu0 0
      %599 = vmatpush1.bf16.msra.mxu0 %v557
      %600 = vmatprep.subr.bf16.mxu0 0
      %601 = vmatpush1.bf16.msra.mxu0 %v556
      %602 = vmatprep.subr.bf16.mxu0 0
      %603 = vmatpush1.bf16.msra.mxu0 %v555
      %604 = vmatprep.subr.bf16.mxu0 0
      %605 = vmatpush1.bf16.msra.mxu0 %v554
      %606 = vmatprep.subr.bf16.mxu0 0
      %607 = vmatpush2.bf16.msra.mxu0 0
      %608 = vmatprep.subr.bf16.mxu0 0
      %609 = vmatpush2.bf16.msra.mxu0 0
      %610 = vmatprep.subr.bf16.mxu0 0
      %611 = vmatpush2.bf16.msra.mxu0 0
      %612 = vmatprep.subr.bf16.mxu0 0
      %613 = vmatpush2.bf16.msra.mxu0 0
      %614 = vmatprep.subr.bf16.mxu0 0
      %615 = vmatpush2.bf16.msra.mxu0 %v565
      %616 = vmatprep.subr.bf16.mxu0 0
      %617 = vmatpush2.bf16.msra.mxu0 %v564
      %618 = vmatprep.subr.bf16.mxu0 0
      %619 = vmatpush2.bf16.msra.mxu0 %v563
      %620 = vmatprep.subr.bf16.mxu0 0
      %621 = vmatpush2.bf16.msra.mxu0 %v562
      %622 = vmatprep.mubr.bf16.mxu0 %v579
      %623 = vmatmul.mubr.bf16.gmra.mxu0 %v494
      %v624 = vpop.f32.mrf.mxu0
      %v625 = vadd.f32 %v461, %v624
      %v626 = vpop.f32.mrf.mxu0
      %v627 = vpop.f32.mrf.mxu0
      %v628 = vadd.f32 %v464, %v627
      %v629 = vpop.f32.mrf.mxu0
      %630 = vmatprep.mubr.bf16.mxu0 %v582
      %631 = vmatmul.mubr.bf16.gmra.mxu0 %v496
      %v632 = vpop.f32.mrf.mxu0
      %v633 = vadd.f32 %v469, %v632
      %v634 = vpop.f32.mrf.mxu0
      %v635 = vpop.f32.mrf.mxu0
      %v636 = vadd.f32 %v472, %v635
      %v637 = vpop.f32.mrf.mxu0
      %638 = vmatprep.mubr.bf16.mxu0 %v585
      %639 = vmatmul.mubr.bf16.gmra.mxu0 %v498
      %v640 = vpop.f32.mrf.mxu0
      %v641 = vadd.f32 %v477, %v640
      %v642 = vpop.f32.mrf.mxu0
      %v643 = vpop.f32.mrf.mxu0
      %v644 = vadd.f32 %v480, %v643
      %v645 = vpop.f32.mrf.mxu0
      %646 = vmatprep.mubr.bf16.mxu0 %v588
      %647 = vmatmul.mubr.bf16.gmra.mxu0 %v500
      %v648 = vpop.f32.mrf.mxu0
      %v649 = vadd.f32 %v485, %v648
      %v650 = vpop.f32.mrf.mxu0
      %v651 = vpop.f32.mrf.mxu0
      %v652 = vadd.f32 %v488, %v651
      %v653 = vpop.f32.mrf.mxu0
      %654 = vdwg.mxu0
      %s655 = scalar_lea.vmem %s2, 192
      %v656 = vld [vmem:[%s655] sm:$0xf]
      %v657 = vld [vmem:[%s655 + $0x4] sm:$0xf]
      %v658 = vld [vmem:[%s655 + $0x8] sm:$0xf]
      %v659 = vld [vmem:[%s655 + $0xc] sm:$0xf]
      %v660 = vld [vmem:[%s655 + $0x10] sm:$0xf]
      %v661 = vld [vmem:[%s655 + $0x14] sm:$0xf]
      %v662 = vld [vmem:[%s655 + $0x18] sm:$0xf]
      %v663 = vld [vmem:[%s655 + $0x1c] sm:$0xf]
      %v664 = vld [vmem:[%s655 + $0x20] sm:$0xf]
      %v665 = vld [vmem:[%s655 + $0x24] sm:$0xf]
      %v666 = vld [vmem:[%s655 + $0x28] sm:$0xf]
      %v667 = vld [vmem:[%s655 + $0x2c] sm:$0xf]
      %v668 = vld [vmem:[%s655 + $0x30] sm:$0xf]
      %v669 = vld [vmem:[%s655 + $0x34] sm:$0xf]
      %v670 = vld [vmem:[%s655 + $0x38] sm:$0xf]
      %v671 = vld [vmem:[%s655 + $0x3c] sm:$0xf]
      %v672 = vld [vmem:[%s655 + $0x40] sm:$0xf]
      %v673 = vld [vmem:[%s655 + $0x44] sm:$0xf]
      %v674 = vld [vmem:[%s655 + $0x48] sm:$0xf]
      %v675 = vld [vmem:[%s655 + $0x4c] sm:$0xf]
      %v676 = vld [vmem:[%s655 + $0x50] sm:$0xf]
      %v677 = vld [vmem:[%s655 + $0x54] sm:$0xf]
      %v678 = vld [vmem:[%s655 + $0x58] sm:$0xf]
      %v679 = vld [vmem:[%s655 + $0x5c] sm:$0xf]
      %v681 = vunpack.c.l.b16 %v255
      %v682 = vunpack.c.h.b16 %v255
      %v683 = vpack.c.b16 %v681, %v327
      %v684 = vpack.c.b16 %v682, %v328
      %v710 = vunpack.c.l.b16 %v656
      %v711 = vunpack.c.l.b16 %v657
      %v712 = vunpack.c.l.b16 %v658
      %v713 = vunpack.c.l.b16 %v659
      %v714 = vunpack.c.l.b16 %v660
      %v715 = vunpack.c.l.b16 %v661
      %v716 = vunpack.c.l.b16 %v662
      %v717 = vunpack.c.l.b16 %v663
      %v718 = vunpack.c.l.b16 %v664
      %v719 = vunpack.c.l.b16 %v665
      %v720 = vunpack.c.l.b16 %v666
      %v721 = vunpack.c.l.b16 %v667
      %v722 = vunpack.c.l.b16 %v668
      %v723 = vunpack.c.l.b16 %v669
      %v724 = vunpack.c.l.b16 %v670
      %v725 = vunpack.c.l.b16 %v671
      %v726 = vunpack.c.l.b16 %v672
      %v727 = vunpack.c.l.b16 %v673
      %v728 = vunpack.c.l.b16 %v674
      %v729 = vunpack.c.l.b16 %v675
      %v730 = vunpack.c.l.b16 %v676
      %v731 = vunpack.c.l.b16 %v677
      %v732 = vunpack.c.l.b16 %v678
      %v733 = vunpack.c.l.b16 %v679
      %v734 = vpack.c.b16 %v711, %v710
      %v735 = vpack.c.b16 %v713, %v712
      %v736 = vpack.c.b16 %v715, %v714
      %v737 = vpack.c.b16 %v717, %v716
      %v738 = vpack.c.b16 %v719, %v718
      %v739 = vpack.c.b16 %v721, %v720
      %v740 = vpack.c.b16 %v723, %v722
      %v741 = vpack.c.b16 %v725, %v724
      %v742 = vpack.c.b16 %v727, %v726
      %v743 = vpack.c.b16 %v729, %v728
      %v744 = vpack.c.b16 %v731, %v730
      %v745 = vpack.c.b16 %v733, %v732
      %v759 = vsel %vm413, %v684, 0
      %761 = vmatprep.subr.bf16.mxu0 0
      %762 = vmatpush1.bf16.msra.mxu0 %v741
      %763 = vmatprep.subr.bf16.mxu0 0
      %764 = vmatpush1.bf16.msra.mxu0 %v740
      %765 = vmatprep.subr.bf16.mxu0 0
      %766 = vmatpush1.bf16.msra.mxu0 %v739
      %767 = vmatprep.subr.bf16.mxu0 0
      %768 = vmatpush1.bf16.msra.mxu0 %v738
      %769 = vmatprep.subr.bf16.mxu0 0
      %770 = vmatpush1.bf16.msra.mxu0 %v737
      %771 = vmatprep.subr.bf16.mxu0 0
      %772 = vmatpush1.bf16.msra.mxu0 %v736
      %773 = vmatprep.subr.bf16.mxu0 0
      %774 = vmatpush1.bf16.msra.mxu0 %v735
      %775 = vmatprep.subr.bf16.mxu0 0
      %776 = vmatpush1.bf16.msra.mxu0 %v734
      %777 = vmatprep.subr.bf16.mxu0 0
      %778 = vmatpush2.bf16.msra.mxu0 0
      %779 = vmatprep.subr.bf16.mxu0 0
      %780 = vmatpush2.bf16.msra.mxu0 0
      %781 = vmatprep.subr.bf16.mxu0 0
      %782 = vmatpush2.bf16.msra.mxu0 0
      %783 = vmatprep.subr.bf16.mxu0 0
      %784 = vmatpush2.bf16.msra.mxu0 0
      %785 = vmatprep.subr.bf16.mxu0 0
      %786 = vmatpush2.bf16.msra.mxu0 %v745
      %787 = vmatprep.subr.bf16.mxu0 0
      %788 = vmatpush2.bf16.msra.mxu0 %v744
      %789 = vmatprep.subr.bf16.mxu0 0
      %790 = vmatpush2.bf16.msra.mxu0 %v743
      %791 = vmatprep.subr.bf16.mxu0 0
      %792 = vmatpush2.bf16.msra.mxu0 %v742
      %793 = vmatprep.mubr.bf16.mxu0 %v582
      %794 = vmatmul.mubr.bf16.gmra.mxu0 %v496
      %v795 = vpop.f32.mrf.mxu0
      %v796 = vadd.f32 0.0, %v795
      %v797 = vpop.f32.mrf.mxu0
      %v798 = vpop.f32.mrf.mxu0
      %v799 = vadd.f32 0.0, %v798
      %v800 = vpop.f32.mrf.mxu0
      %801 = vmatprep.mubr.bf16.mxu0 %v585
      %802 = vmatmul.mubr.bf16.gmra.mxu0 %v498
      %v803 = vpop.f32.mrf.mxu0
      %v804 = vadd.f32 0.0, %v803
      %v805 = vpop.f32.mrf.mxu0
      %v806 = vpop.f32.mrf.mxu0
      %v807 = vadd.f32 0.0, %v806
      %v808 = vpop.f32.mrf.mxu0
      %809 = vmatprep.mubr.bf16.mxu0 %v588
      %810 = vmatmul.mubr.bf16.gmra.mxu0 %v500
      %v811 = vpop.f32.mrf.mxu0
      %v812 = vadd.f32 0.0, %v811
      %v813 = vpop.f32.mrf.mxu0
      %v814 = vpop.f32.mrf.mxu0
      %v815 = vadd.f32 0.0, %v814
      %v816 = vpop.f32.mrf.mxu0
      %817 = vmatprep.mubr.bf16.mxu0 %v759
      %818 = vmatmul.mubr.bf16.gmra.mxu0 %v683
      %v819 = vpop.f32.mrf.mxu0
      %v820 = vadd.f32 0.0, %v819
      %v821 = vpop.f32.mrf.mxu0
      %v822 = vpop.f32.mrf.mxu0
      %v823 = vadd.f32 0.0, %v822
      %v824 = vpop.f32.mrf.mxu0
      %825 = vdwg.mxu0
      %v826 = vadd.f32 %v625, %v796
      %v827 = vadd.f32 %v628, %v799
      %v828 = vadd.f32 %v633, %v804
      %v829 = vadd.f32 %v636, %v807
      %v830 = vadd.f32 %v641, %v812
      %v831 = vadd.f32 %v644, %v815
      %v832 = vadd.f32 %v649, %v820
      %v833 = vadd.f32 %v652, %v823
      %v834 = vld [vmem:[%s239] sm:$0xff]
      %v835 = vld [vmem:[%s239 + $0x8] sm:$0xff]
      %v836 = vld [vmem:[%s239 + $0x10] sm:$0xff]
      %v837 = vld [vmem:[%s239 + $0x18] sm:$0xff]
      %v838 = vld [vmem:[%s239 + $0x20] sm:$0xff]
      %v839 = vld [vmem:[%s239 + $0x28] sm:$0xff]
      %v840 = vld [vmem:[%s239 + $0x30] sm:$0xff]
      %v841 = vld [vmem:[%s239 + $0x38] sm:$0xff]
      %v842 = vld [vmem:[%s239 + $0x40] sm:$0xff]
      %v843 = vld [vmem:[%s239 + $0x48] sm:$0xff]
      %v844 = vld [vmem:[%s3] sm:$0xf]
      %v845 = vld [vmem:[%s3 + $0x4] sm:$0xf]
      %v846 = vld [vmem:[%s3 + $0x8] sm:$0xf]
      %v847 = vld [vmem:[%s3 + $0xc] sm:$0xf]
      %v848 = vld [vmem:[%s3 + $0x10] sm:$0xf]
      %v849 = vld [vmem:[%s3 + $0x14] sm:$0xf]
      %v850 = vld [vmem:[%s3 + $0x18] sm:$0xf]
      %v851 = vld [vmem:[%s3 + $0x1c] sm:$0xf]
      %v852 = vld [vmem:[%s3 + $0x20] sm:$0xf]
      %v853 = vld [vmem:[%s3 + $0x24] sm:$0xf]
      %v854 = vld [vmem:[%s3 + $0x28] sm:$0xf]
      %v855 = vld [vmem:[%s3 + $0x2c] sm:$0xf]
      %v856 = vld [vmem:[%s3 + $0x30] sm:$0xf]
      %v857 = vld [vmem:[%s3 + $0x34] sm:$0xf]
      %v858 = vld [vmem:[%s3 + $0x38] sm:$0xf]
      %v859 = vld [vmem:[%s3 + $0x3c] sm:$0xf]
      %v860 = vld [vmem:[%s3 + $0x40] sm:$0xf]
      %v861 = vld [vmem:[%s3 + $0x44] sm:$0xf]
      %v862 = vld [vmem:[%s3 + $0x48] sm:$0xf]
      %v863 = vld [vmem:[%s3 + $0x4c] sm:$0xf]
      %v864 = vld [vmem:[%s3 + $0x50] sm:$0xf]
      %v865 = vld [vmem:[%s3 + $0x54] sm:$0xf]
      %v866 = vld [vmem:[%s3 + $0x58] sm:$0xf]
      %v867 = vld [vmem:[%s3 + $0x5c] sm:$0xf]
      %v876 = vunpack.c.l.b16 %v834
      %v877 = vunpack.c.h.b16 %v834
      %v878 = vunpack.c.l.b16 %v835
      %v879 = vunpack.c.h.b16 %v835
      %v880 = vunpack.c.l.b16 %v836
      %v881 = vunpack.c.h.b16 %v836
      %v882 = vunpack.c.l.b16 %v837
      %v883 = vunpack.c.h.b16 %v837
      %v884 = vunpack.c.l.b16 %v838
      %v885 = vunpack.c.h.b16 %v838
      %v886 = vunpack.c.l.b16 %v839
      %v887 = vunpack.c.h.b16 %v839
      %v888 = vunpack.c.l.b16 %v840
      %v889 = vunpack.c.h.b16 %v840
      %v890 = vunpack.c.l.b16 %v841
      %v891 = vunpack.c.h.b16 %v841
      %v892 = vpack.c.b16 %v878, %v876
      %v893 = vpack.c.b16 %v879, %v877
      %v894 = vpack.c.b16 %v882, %v880
      %v895 = vpack.c.b16 %v883, %v881
      %v896 = vpack.c.b16 %v886, %v884
      %v897 = vpack.c.b16 %v887, %v885
      %v898 = vpack.c.b16 %v890, %v888
      %v899 = vpack.c.b16 %v891, %v889
      %v928 = vunpack.c.l.b16 %v844
      %v929 = vunpack.c.l.b16 %v845
      %v930 = vunpack.c.l.b16 %v846
      %v931 = vunpack.c.l.b16 %v847
      %v932 = vunpack.c.l.b16 %v848
      %v933 = vunpack.c.l.b16 %v849
      %v934 = vunpack.c.l.b16 %v850
      %v935 = vunpack.c.l.b16 %v851
      %v936 = vunpack.c.l.b16 %v852
      %v937 = vunpack.c.l.b16 %v853
      %v938 = vunpack.c.l.b16 %v854
      %v939 = vunpack.c.l.b16 %v855
      %v940 = vunpack.c.l.b16 %v856
      %v941 = vunpack.c.l.b16 %v857
      %v942 = vunpack.c.l.b16 %v858
      %v943 = vunpack.c.l.b16 %v859
      %v944 = vunpack.c.l.b16 %v860
      %v945 = vunpack.c.l.b16 %v861
      %v946 = vunpack.c.l.b16 %v862
      %v947 = vunpack.c.l.b16 %v863
      %v948 = vunpack.c.l.b16 %v864
      %v949 = vunpack.c.l.b16 %v865
      %v950 = vunpack.c.l.b16 %v866
      %v951 = vunpack.c.l.b16 %v867
      %v952 = vpack.c.b16 %v929, %v928
      %v953 = vpack.c.b16 %v931, %v930
      %v954 = vpack.c.b16 %v933, %v932
      %v955 = vpack.c.b16 %v935, %v934
      %v956 = vpack.c.b16 %v937, %v936
      %v957 = vpack.c.b16 %v939, %v938
      %v958 = vpack.c.b16 %v941, %v940
      %v959 = vpack.c.b16 %v943, %v942
      %v960 = vpack.c.b16 %v945, %v944
      %v961 = vpack.c.b16 %v947, %v946
      %v962 = vpack.c.b16 %v949, %v948
      %v963 = vpack.c.b16 %v951, %v950
      %v977 = vsel %vm413, %v893, 0
      %v980 = vsel %vm413, %v895, 0
      %v983 = vsel %vm413, %v897, 0
      %v986 = vsel %vm413, %v899, 0
      %988 = vmatprep.subr.bf16.mxu0 0
      %989 = vmatpush1.bf16.msra.mxu0 %v959
      %990 = vmatprep.subr.bf16.mxu0 0
      %991 = vmatpush1.bf16.msra.mxu0 %v958
      %992 = vmatprep.subr.bf16.mxu0 0
      %993 = vmatpush1.bf16.msra.mxu0 %v957
      %994 = vmatprep.subr.bf16.mxu0 0
      %995 = vmatpush1.bf16.msra.mxu0 %v956
      %996 = vmatprep.subr.bf16.mxu0 0
      %997 = vmatpush1.bf16.msra.mxu0 %v955
      %998 = vmatprep.subr.bf16.mxu0 0
      %999 = vmatpush1.bf16.msra.mxu0 %v954
      %1000 = vmatprep.subr.bf16.mxu0 0
      %1001 = vmatpush1.bf16.msra.mxu0 %v953
      %1002 = vmatprep.subr.bf16.mxu0 0
      %1003 = vmatpush1.bf16.msra.mxu0 %v952
      %1004 = vmatprep.subr.bf16.mxu0 0
      %1005 = vmatpush2.bf16.msra.mxu0 0
      %1006 = vmatprep.subr.bf16.mxu0 0
      %1007 = vmatpush2.bf16.msra.mxu0 0
      %1008 = vmatprep.subr.bf16.mxu0 0
      %1009 = vmatpush2.bf16.msra.mxu0 0
      %1010 = vmatprep.subr.bf16.mxu0 0
      %1011 = vmatpush2.bf16.msra.mxu0 0
      %1012 = vmatprep.subr.bf16.mxu0 0
      %1013 = vmatpush2.bf16.msra.mxu0 %v963
      %1014 = vmatprep.subr.bf16.mxu0 0
      %1015 = vmatpush2.bf16.msra.mxu0 %v962
      %1016 = vmatprep.subr.bf16.mxu0 0
      %1017 = vmatpush2.bf16.msra.mxu0 %v961
      %1018 = vmatprep.subr.bf16.mxu0 0
      %1019 = vmatpush2.bf16.msra.mxu0 %v960
      %1020 = vmatprep.mubr.bf16.mxu0 %v977
      %1021 = vmatmul.mubr.bf16.gmra.mxu0 %v892
      %v1022 = vpop.f32.mrf.mxu0
      %v1023 = vadd.f32 0.0, %v1022
      %v1024 = vpop.f32.mrf.mxu0
      %v1025 = vpop.f32.mrf.mxu0
      %v1026 = vadd.f32 0.0, %v1025
      %v1027 = vpop.f32.mrf.mxu0
      %1028 = vmatprep.mubr.bf16.mxu0 %v980
      %1029 = vmatmul.mubr.bf16.gmra.mxu0 %v894
      %v1030 = vpop.f32.mrf.mxu0
      %v1031 = vadd.f32 0.0, %v1030
      %v1032 = vpop.f32.mrf.mxu0
      %v1033 = vpop.f32.mrf.mxu0
      %v1034 = vadd.f32 0.0, %v1033
      %v1035 = vpop.f32.mrf.mxu0
      %1036 = vmatprep.mubr.bf16.mxu0 %v983
      %1037 = vmatmul.mubr.bf16.gmra.mxu0 %v896
      %v1038 = vpop.f32.mrf.mxu0
      %v1039 = vadd.f32 0.0, %v1038
      %v1040 = vpop.f32.mrf.mxu0
      %v1041 = vpop.f32.mrf.mxu0
      %v1042 = vadd.f32 0.0, %v1041
      %v1043 = vpop.f32.mrf.mxu0
      %1044 = vmatprep.mubr.bf16.mxu0 %v986
      %1045 = vmatmul.mubr.bf16.gmra.mxu0 %v898
      %v1046 = vpop.f32.mrf.mxu0
      %v1047 = vadd.f32 0.0, %v1046
      %v1048 = vpop.f32.mrf.mxu0
      %v1049 = vpop.f32.mrf.mxu0
      %v1050 = vadd.f32 0.0, %v1049
      %v1051 = vpop.f32.mrf.mxu0
      %1052 = vdwg.mxu0
      %v1053 = vadd.f32 %v826, %v1023
      %v1054 = vadd.f32 %v827, %v1026
      %v1055 = vadd.f32 %v828, %v1031
      %v1056 = vadd.f32 %v829, %v1034
      %v1057 = vadd.f32 %v830, %v1039
      %v1058 = vadd.f32 %v831, %v1042
      %v1059 = vadd.f32 %v832, %v1047
      %v1060 = vadd.f32 %v833, %v1050
      %s1061 = scalar_lea.vmem %s3, 96
      %v1062 = vld [vmem:[%s1061] sm:$0xf]
      %v1063 = vld [vmem:[%s1061 + $0x4] sm:$0xf]
      %v1064 = vld [vmem:[%s1061 + $0x8] sm:$0xf]
      %v1065 = vld [vmem:[%s1061 + $0xc] sm:$0xf]
      %v1066 = vld [vmem:[%s1061 + $0x10] sm:$0xf]
      %v1067 = vld [vmem:[%s1061 + $0x14] sm:$0xf]
      %v1068 = vld [vmem:[%s1061 + $0x18] sm:$0xf]
      %v1069 = vld [vmem:[%s1061 + $0x1c] sm:$0xf]
      %v1070 = vld [vmem:[%s1061 + $0x20] sm:$0xf]
      %v1071 = vld [vmem:[%s1061 + $0x24] sm:$0xf]
      %v1072 = vld [vmem:[%s1061 + $0x28] sm:$0xf]
      %v1073 = vld [vmem:[%s1061 + $0x2c] sm:$0xf]
      %v1074 = vld [vmem:[%s1061 + $0x30] sm:$0xf]
      %v1075 = vld [vmem:[%s1061 + $0x34] sm:$0xf]
      %v1076 = vld [vmem:[%s1061 + $0x38] sm:$0xf]
      %v1077 = vld [vmem:[%s1061 + $0x3c] sm:$0xf]
      %v1078 = vld [vmem:[%s1061 + $0x40] sm:$0xf]
      %v1079 = vld [vmem:[%s1061 + $0x44] sm:$0xf]
      %v1080 = vld [vmem:[%s1061 + $0x48] sm:$0xf]
      %v1081 = vld [vmem:[%s1061 + $0x4c] sm:$0xf]
      %v1082 = vld [vmem:[%s1061 + $0x50] sm:$0xf]
      %v1083 = vld [vmem:[%s1061 + $0x54] sm:$0xf]
      %v1084 = vld [vmem:[%s1061 + $0x58] sm:$0xf]
      %v1085 = vld [vmem:[%s1061 + $0x5c] sm:$0xf]
      %v1087 = vunpack.c.l.b16 %v842
      %v1088 = vunpack.c.h.b16 %v842
      %v1089 = vpack.c.b16 %v880, %v878
      %v1090 = vpack.c.b16 %v881, %v879
      %v1091 = vpack.c.b16 %v884, %v882
      %v1092 = vpack.c.b16 %v885, %v883
      %v1093 = vpack.c.b16 %v888, %v886
      %v1094 = vpack.c.b16 %v889, %v887
      %v1095 = vpack.c.b16 %v1087, %v890
      %v1096 = vpack.c.b16 %v1088, %v891
      %v1125 = vunpack.c.l.b16 %v1062
      %v1126 = vunpack.c.l.b16 %v1063
      %v1127 = vunpack.c.l.b16 %v1064
      %v1128 = vunpack.c.l.b16 %v1065
      %v1129 = vunpack.c.l.b16 %v1066
      %v1130 = vunpack.c.l.b16 %v1067
      %v1131 = vunpack.c.l.b16 %v1068
      %v1132 = vunpack.c.l.b16 %v1069
      %v1133 = vunpack.c.l.b16 %v1070
      %v1134 = vunpack.c.l.b16 %v1071
      %v1135 = vunpack.c.l.b16 %v1072
      %v1136 = vunpack.c.l.b16 %v1073
      %v1137 = vunpack.c.l.b16 %v1074
      %v1138 = vunpack.c.l.b16 %v1075
      %v1139 = vunpack.c.l.b16 %v1076
      %v1140 = vunpack.c.l.b16 %v1077
      %v1141 = vunpack.c.l.b16 %v1078
      %v1142 = vunpack.c.l.b16 %v1079
      %v1143 = vunpack.c.l.b16 %v1080
      %v1144 = vunpack.c.l.b16 %v1081
      %v1145 = vunpack.c.l.b16 %v1082
      %v1146 = vunpack.c.l.b16 %v1083
      %v1147 = vunpack.c.l.b16 %v1084
      %v1148 = vunpack.c.l.b16 %v1085
      %v1149 = vpack.c.b16 %v1126, %v1125
      %v1150 = vpack.c.b16 %v1128, %v1127
      %v1151 = vpack.c.b16 %v1130, %v1129
      %v1152 = vpack.c.b16 %v1132, %v1131
      %v1153 = vpack.c.b16 %v1134, %v1133
      %v1154 = vpack.c.b16 %v1136, %v1135
      %v1155 = vpack.c.b16 %v1138, %v1137
      %v1156 = vpack.c.b16 %v1140, %v1139
      %v1157 = vpack.c.b16 %v1142, %v1141
      %v1158 = vpack.c.b16 %v1144, %v1143
      %v1159 = vpack.c.b16 %v1146, %v1145
      %v1160 = vpack.c.b16 %v1148, %v1147
      %v1174 = vsel %vm413, %v1090, 0
      %v1177 = vsel %vm413, %v1092, 0
      %v1180 = vsel %vm413, %v1094, 0
      %v1183 = vsel %vm413, %v1096, 0
      %1185 = vmatprep.subr.bf16.mxu0 0
      %1186 = vmatpush1.bf16.msra.mxu0 %v1156
      %1187 = vmatprep.subr.bf16.mxu0 0
      %1188 = vmatpush1.bf16.msra.mxu0 %v1155
      %1189 = vmatprep.subr.bf16.mxu0 0
      %1190 = vmatpush1.bf16.msra.mxu0 %v1154
      %1191 = vmatprep.subr.bf16.mxu0 0
      %1192 = vmatpush1.bf16.msra.mxu0 %v1153
      %1193 = vmatprep.subr.bf16.mxu0 0
      %1194 = vmatpush1.bf16.msra.mxu0 %v1152
      %1195 = vmatprep.subr.bf16.mxu0 0
      %1196 = vmatpush1.bf16.msra.mxu0 %v1151
      %1197 = vmatprep.subr.bf16.mxu0 0
      %1198 = vmatpush1.bf16.msra.mxu0 %v1150
      %1199 = vmatprep.subr.bf16.mxu0 0
      %1200 = vmatpush1.bf16.msra.mxu0 %v1149
      %1201 = vmatprep.subr.bf16.mxu0 0
      %1202 = vmatpush2.bf16.msra.mxu0 0
      %1203 = vmatprep.subr.bf16.mxu0 0
      %1204 = vmatpush2.bf16.msra.mxu0 0
      %1205 = vmatprep.subr.bf16.mxu0 0
      %1206 = vmatpush2.bf16.msra.mxu0 0
      %1207 = vmatprep.subr.bf16.mxu0 0
      %1208 = vmatpush2.bf16.msra.mxu0 0
      %1209 = vmatprep.subr.bf16.mxu0 0
      %1210 = vmatpush2.bf16.msra.mxu0 %v1160
      %1211 = vmatprep.subr.bf16.mxu0 0
      %1212 = vmatpush2.bf16.msra.mxu0 %v1159
      %1213 = vmatprep.subr.bf16.mxu0 0
      %1214 = vmatpush2.bf16.msra.mxu0 %v1158
      %1215 = vmatprep.subr.bf16.mxu0 0
      %1216 = vmatpush2.bf16.msra.mxu0 %v1157
      %1217 = vmatprep.mubr.bf16.mxu0 %v1174
      %1218 = vmatmul.mubr.bf16.gmra.mxu0 %v1089
      %v1219 = vpop.f32.mrf.mxu0
      %v1220 = vadd.f32 0.0, %v1219
      %v1221 = vpop.f32.mrf.mxu0
      %v1222 = vpop.f32.mrf.mxu0
      %v1223 = vadd.f32 0.0, %v1222
      %v1224 = vpop.f32.mrf.mxu0
      %1225 = vmatprep.mubr.bf16.mxu0 %v1177
      %1226 = vmatmul.mubr.bf16.gmra.mxu0 %v1091
      %v1227 = vpop.f32.mrf.mxu0
      %v1228 = vadd.f32 0.0, %v1227
      %v1229 = vpop.f32.mrf.mxu0
      %v1230 = vpop.f32.mrf.mxu0
      %v1231 = vadd.f32 0.0, %v1230
      %v1232 = vpop.f32.mrf.mxu0
      %1233 = vmatprep.mubr.bf16.mxu0 %v1180
      %1234 = vmatmul.mubr.bf16.gmra.mxu0 %v1093
      %v1235 = vpop.f32.mrf.mxu0
      %v1236 = vadd.f32 0.0, %v1235
      %v1237 = vpop.f32.mrf.mxu0
      %v1238 = vpop.f32.mrf.mxu0
      %v1239 = vadd.f32 0.0, %v1238
      %v1240 = vpop.f32.mrf.mxu0
      %1241 = vmatprep.mubr.bf16.mxu0 %v1183
      %1242 = vmatmul.mubr.bf16.gmra.mxu0 %v1095
      %v1243 = vpop.f32.mrf.mxu0
      %v1244 = vadd.f32 0.0, %v1243
      %v1245 = vpop.f32.mrf.mxu0
      %v1246 = vpop.f32.mrf.mxu0
      %v1247 = vadd.f32 0.0, %v1246
      %v1248 = vpop.f32.mrf.mxu0
      %1249 = vdwg.mxu0
      %v1250 = vadd.f32 %v1053, %v1220
      %v1251 = vadd.f32 %v1054, %v1223
      %v1252 = vadd.f32 %v1055, %v1228
      %v1253 = vadd.f32 %v1056, %v1231
      %v1254 = vadd.f32 %v1057, %v1236
      %v1255 = vadd.f32 %v1058, %v1239
      %v1256 = vadd.f32 %v1059, %v1244
      %v1257 = vadd.f32 %v1060, %v1247
      %s1258 = scalar_lea.vmem %s3, 192
      %v1259 = vld [vmem:[%s1258] sm:$0xf]
      %v1260 = vld [vmem:[%s1258 + $0x4] sm:$0xf]
      %v1261 = vld [vmem:[%s1258 + $0x8] sm:$0xf]
      %v1262 = vld [vmem:[%s1258 + $0xc] sm:$0xf]
      %v1263 = vld [vmem:[%s1258 + $0x10] sm:$0xf]
      %v1264 = vld [vmem:[%s1258 + $0x14] sm:$0xf]
      %v1265 = vld [vmem:[%s1258 + $0x18] sm:$0xf]
      %v1266 = vld [vmem:[%s1258 + $0x1c] sm:$0xf]
      %v1267 = vld [vmem:[%s1258 + $0x20] sm:$0xf]
      %v1268 = vld [vmem:[%s1258 + $0x24] sm:$0xf]
      %v1269 = vld [vmem:[%s1258 + $0x28] sm:$0xf]
      %v1270 = vld [vmem:[%s1258 + $0x2c] sm:$0xf]
      %v1271 = vld [vmem:[%s1258 + $0x30] sm:$0xf]
      %v1272 = vld [vmem:[%s1258 + $0x34] sm:$0xf]
      %v1273 = vld [vmem:[%s1258 + $0x38] sm:$0xf]
      %v1274 = vld [vmem:[%s1258 + $0x3c] sm:$0xf]
      %v1275 = vld [vmem:[%s1258 + $0x40] sm:$0xf]
      %v1276 = vld [vmem:[%s1258 + $0x44] sm:$0xf]
      %v1277 = vld [vmem:[%s1258 + $0x48] sm:$0xf]
      %v1278 = vld [vmem:[%s1258 + $0x4c] sm:$0xf]
      %v1279 = vld [vmem:[%s1258 + $0x50] sm:$0xf]
      %v1280 = vld [vmem:[%s1258 + $0x54] sm:$0xf]
      %v1281 = vld [vmem:[%s1258 + $0x58] sm:$0xf]
      %v1282 = vld [vmem:[%s1258 + $0x5c] sm:$0xf]
      %v1284 = vunpack.c.l.b16 %v843
      %v1285 = vunpack.c.h.b16 %v843
      %v1286 = vpack.c.b16 %v1284, %v1087
      %v1287 = vpack.c.b16 %v1285, %v1088
      %v1313 = vunpack.c.l.b16 %v1259
      %v1314 = vunpack.c.l.b16 %v1260
      %v1315 = vunpack.c.l.b16 %v1261
      %v1316 = vunpack.c.l.b16 %v1262
      %v1317 = vunpack.c.l.b16 %v1263
      %v1318 = vunpack.c.l.b16 %v1264
      %v1319 = vunpack.c.l.b16 %v1265
      %v1320 = vunpack.c.l.b16 %v1266
      %v1321 = vunpack.c.l.b16 %v1267
      %v1322 = vunpack.c.l.b16 %v1268
      %v1323 = vunpack.c.l.b16 %v1269
      %v1324 = vunpack.c.l.b16 %v1270
      %v1325 = vunpack.c.l.b16 %v1271
      %v1326 = vunpack.c.l.b16 %v1272
      %v1327 = vunpack.c.l.b16 %v1273
      %v1328 = vunpack.c.l.b16 %v1274
      %v1329 = vunpack.c.l.b16 %v1275
      %v1330 = vunpack.c.l.b16 %v1276
      %v1331 = vunpack.c.l.b16 %v1277
      %v1332 = vunpack.c.l.b16 %v1278
      %v1333 = vunpack.c.l.b16 %v1279
      %v1334 = vunpack.c.l.b16 %v1280
      %v1335 = vunpack.c.l.b16 %v1281
      %v1336 = vunpack.c.l.b16 %v1282
      %v1337 = vpack.c.b16 %v1314, %v1313
      %v1338 = vpack.c.b16 %v1316, %v1315
      %v1339 = vpack.c.b16 %v1318, %v1317
      %v1340 = vpack.c.b16 %v1320, %v1319
      %v1341 = vpack.c.b16 %v1322, %v1321
      %v1342 = vpack.c.b16 %v1324, %v1323
      %v1343 = vpack.c.b16 %v1326, %v1325
      %v1344 = vpack.c.b16 %v1328, %v1327
      %v1345 = vpack.c.b16 %v1330, %v1329
      %v1346 = vpack.c.b16 %v1332, %v1331
      %v1347 = vpack.c.b16 %v1334, %v1333
      %v1348 = vpack.c.b16 %v1336, %v1335
      %v1362 = vsel %vm413, %v1287, 0
      %1364 = vmatprep.subr.bf16.mxu0 0
      %1365 = vmatpush1.bf16.msra.mxu0 %v1344
      %1366 = vmatprep.subr.bf16.mxu0 0
      %1367 = vmatpush1.bf16.msra.mxu0 %v1343
      %1368 = vmatprep.subr.bf16.mxu0 0
      %1369 = vmatpush1.bf16.msra.mxu0 %v1342
      %1370 = vmatprep.subr.bf16.mxu0 0
      %1371 = vmatpush1.bf16.msra.mxu0 %v1341
      %1372 = vmatprep.subr.bf16.mxu0 0
      %1373 = vmatpush1.bf16.msra.mxu0 %v1340
      %1374 = vmatprep.subr.bf16.mxu0 0
      %1375 = vmatpush1.bf16.msra.mxu0 %v1339
      %1376 = vmatprep.subr.bf16.mxu0 0
      %1377 = vmatpush1.bf16.msra.mxu0 %v1338
      %1378 = vmatprep.subr.bf16.mxu0 0
      %1379 = vmatpush1.bf16.msra.mxu0 %v1337
      %1380 = vmatprep.subr.bf16.mxu0 0
      %1381 = vmatpush2.bf16.msra.mxu0 0
      %1382 = vmatprep.subr.bf16.mxu0 0
      %1383 = vmatpush2.bf16.msra.mxu0 0
      %1384 = vmatprep.subr.bf16.mxu0 0
      %1385 = vmatpush2.bf16.msra.mxu0 0
      %1386 = vmatprep.subr.bf16.mxu0 0
      %1387 = vmatpush2.bf16.msra.mxu0 0
      %1388 = vmatprep.subr.bf16.mxu0 0
      %1389 = vmatpush2.bf16.msra.mxu0 %v1348
      %1390 = vmatprep.subr.bf16.mxu0 0
      %1391 = vmatpush2.bf16.msra.mxu0 %v1347
      %1392 = vmatprep.subr.bf16.mxu0 0
      %1393 = vmatpush2.bf16.msra.mxu0 %v1346
      %1394 = vmatprep.subr.bf16.mxu0 0
      %1395 = vmatpush2.bf16.msra.mxu0 %v1345
      %1396 = vmatprep.mubr.bf16.mxu0 %v980
      %1397 = vmatmul.mubr.bf16.gmra.mxu0 %v894
      %v1398 = vpop.f32.mrf.mxu0
      %v1399 = vadd.f32 0.0, %v1398
      %v1400 = vpop.f32.mrf.mxu0
      %v1401 = vpop.f32.mrf.mxu0
      %v1402 = vadd.f32 0.0, %v1401
      %v1403 = vpop.f32.mrf.mxu0
      %1404 = vmatprep.mubr.bf16.mxu0 %v983
      %1405 = vmatmul.mubr.bf16.gmra.mxu0 %v896
      %v1406 = vpop.f32.mrf.mxu0
      %v1407 = vadd.f32 0.0, %v1406
      %v1408 = vpop.f32.mrf.mxu0
      %v1409 = vpop.f32.mrf.mxu0
      %v1410 = vadd.f32 0.0, %v1409
      %v1411 = vpop.f32.mrf.mxu0
      %1412 = vmatprep.mubr.bf16.mxu0 %v986
      %1413 = vmatmul.mubr.bf16.gmra.mxu0 %v898
      %v1414 = vpop.f32.mrf.mxu0
      %v1415 = vadd.f32 0.0, %v1414
      %v1416 = vpop.f32.mrf.mxu0
      %v1417 = vpop.f32.mrf.mxu0
      %v1418 = vadd.f32 0.0, %v1417
      %v1419 = vpop.f32.mrf.mxu0
      %1420 = vmatprep.mubr.bf16.mxu0 %v1362
      %1421 = vmatmul.mubr.bf16.gmra.mxu0 %v1286
      %v1422 = vpop.f32.mrf.mxu0
      %v1423 = vadd.f32 0.0, %v1422
      %v1424 = vpop.f32.mrf.mxu0
      %v1425 = vpop.f32.mrf.mxu0
      %v1426 = vadd.f32 0.0, %v1425
      %v1427 = vpop.f32.mrf.mxu0
      %1428 = vdwg.mxu0
      %v1429 = vadd.f32 %v1250, %v1399
      %v1430 = vadd.f32 %v1251, %v1402
      %v1431 = vadd.f32 %v1252, %v1407
      %v1432 = vadd.f32 %v1253, %v1410
      %v1433 = vadd.f32 %v1254, %v1415
      %v1434 = vadd.f32 %v1255, %v1418
      %v1435 = vadd.f32 %v1256, %v1423
      %v1436 = vadd.f32 %v1257, %v1426
      %v1437 = vld [vmem:[%s4] sm:$0x1]
      %v1439 = vlaneseq
      %v1440 = vshrl.u32 %v1439, 7
      %v1441 = vsub.s32 0, %v1440
      %v1442 = vrot.slane %v1437, %v1441
      %v1444 = vadd.f32 %v1429, %v1442
      %v1445 = vadd.f32 %v1430, %v1442
      %v1446 = vadd.f32 %v1431, %v1442
      %v1447 = vadd.f32 %v1432, %v1442
      %v1448 = vadd.f32 %v1433, %v1442
      %v1449 = vadd.f32 %v1434, %v1442
      %v1450 = vadd.f32 %v1435, %v1442
      %v1451 = vadd.f32 %v1436, %v1442
      %v1452 = vmax.f32 %v1444, 0.0
      %v1453 = vmax.f32 %v1445, 0.0
      %v1454 = vmax.f32 %v1446, 0.0
      %v1455 = vmax.f32 %v1447, 0.0
      %v1456 = vmax.f32 %v1448, 0.0
      %v1457 = vmax.f32 %v1449, 0.0
      %v1458 = vmax.f32 %v1450, 0.0
      %v1459 = vmax.f32 %v1451, 0.0
      %v1460 = vpack.c.bf16 %v1452, %v1452
      %v1461 = vpack.c.bf16 %v1453, %v1453
      %v1462 = vpack.c.bf16 %v1454, %v1454
      %v1463 = vpack.c.bf16 %v1455, %v1455
      %v1464 = vpack.c.bf16 %v1456, %v1456
      %v1465 = vpack.c.bf16 %v1457, %v1457
      %v1466 = vpack.c.bf16 %v1458, %v1458
      %v1467 = vpack.c.bf16 %v1459, %v1459
      %vm1468 = vcmask 519168
      %1469 = vst.msk [vmem:[%s244] sm:$0xf] %vm1468, %v1460
      %1470 = vst.msk [vmem:[%s244 + $0x4] sm:$0xf] %vm1468, %v1461
      %1471 = vst.msk [vmem:[%s244 + $0x8] sm:$0xf] %vm1468, %v1462
      %1472 = vst.msk [vmem:[%s244 + $0xc] sm:$0xf] %vm1468, %v1463
      %1473 = vst.msk [vmem:[%s244 + $0x10] sm:$0xf] %vm1468, %v1464
      %1474 = vst.msk [vmem:[%s244 + $0x14] sm:$0xf] %vm1468, %v1465
      %1475 = vst.msk [vmem:[%s244 + $0x18] sm:$0xf] %vm1468, %v1466
      %1476 = vst.msk [vmem:[%s244 + $0x1c] sm:$0xf] %vm1468, %v1467
      %p1477 = scmp.lt.s32.totalorder %s16, 1
      %s1478 = scalar_select %p1477, %s16, 1
      %s1479 = smul.addr %s1478, 8
      %s1480 = smul.addr %s1479, 4
      %s1481 = scalar_lea.vmem %s5, %s1480
      // Predicated region
      $region41: #{_lambda_.12} parent=39 // pred_check
        %p1482 = pneg %p149
      $region42: #{_lambda_.12} parent=39 // pred_check_branch
        %1484 = sbr.rel (%p1482) target = $region44
      $region43: #{_lambda_.12} parent=39 // pred_region
        _
      $region44: #{_lambda_.12} parent=39 // pred_fallthru
        _
    $region40: #{_lambda_.12} parent=5 // pred_fallthru
      _
    %p1485 = scmp.le.s32.totalorder 2, %s11
    // Predicated region
    $region45: #{_lambda_.12} parent=5 // pred_check
      %p1486 = pneg %p1485
    $region46: #{_lambda_.12} parent=5 // pred_check_branch
      %1488 = sbr.rel (%p1486) target = $region48
    $region47: #{_lambda_.12} parent=5 // pred_region
      %s1489 = ssub.s32 %s11, 2
      // Predicated region
      $region49: #{_lambda_.12} parent=47 // pred_check
        %p1490 = pneg %p155
      $region50: #{_lambda_.12} parent=47 // pred_check_branch
        %1492 = sbr.rel (%p1490) target = $region52
      $region51: #{_lambda_.12} parent=47 // pred_region
        %p1493 = scmp.lt.s32.totalorder %s17, 1
        %s1494 = scalar_select %p1493, %s17, 1
        %s1495 = smul.addr %s1494, 8
        %s1496 = smul.addr %s1495, 4
        %s1497 = scalar_lea.vmem %s5, %s1496
      $region52: #{_lambda_.12} parent=47 // pred_fallthru
        _
    $region48: #{_lambda_.12} parent=5 // pred_fallthru
      _
  $region6: #{_lambda_.12} parent=0 // loop_footer
    %s15 = sadd.s32 1, %s11
  $region7: #{_lambda_.12} parent=0 // loop_footer_branch
    %10 = sbr.rel target = $region3
  $region8: #{_lambda_.12} parent=0 // loop_exit
    _

// kernel: _lambda_.14
$region0: #{_lambda_.14}
  #allocation0 [shape = 'u32[]', space=smem, size = 0x4, offset = 0x4, fixed_abs, tag = 'smem constant byte address 0x4 - core index']
  #allocation1 [shape = 'u32[144,128]{1,0:T(1,128)}', space=vmem, size = 0x12000, scoped, tag = 'internal scratch']
  %s0 = inlined_call_operand.vmem [shape: bf16[2,18,16,9], index: 0, kind: input, shape index: {}]
  %s1 = inlined_call_operand.vmem [shape: bf16[3,9,32], index: 1, kind: input, shape index: {}]
  %s2 = inlined_call_operand.vmem [shape: f32[1,32], index: 2, kind: input, shape index: {}]
  %s3 = inlined_call_operand.vmem [shape: bf16[2,16,16,32], index: 3, kind: output, shape index: {}]
  %s4 = sld [smem:[#allocation0]]
  $region45: #{_lambda_.14} parent=0
    _
  %s6 = ssub.s32 1, %s4
  %s7 = scalar_select 0, %s6, %s4
  loop: start=0, step=1, limit=4
  $region2: #{_lambda_.14} parent=0 // loop_pre_header
    _
  $region3: #{_lambda_.14} parent=0 // loop_header
    %s9 = sphi 0, %s13
    %p10 = scmp.ge.s32.totalorder %s9, 4
    %s19 = sphi 0, %s21
    %s22 = sphi 0, %s19
    %s23 = sphi 0, %s22
    %s39 = sphi 0, %s23
    %s43 = sphi 0, %s43
    %s45 = sphi 0, %s43
    %s46 = sphi 0, %s45
    %s60 = sphi 0, %s46
    %s64 = sphi 0, %s64
    %s66 = sphi 0, %s64
    %s67 = sphi 0, %s66
    %s81 = sphi 0, %s67
    %s87 = sphi 0, %s89
    %s90 = sphi 0, %s87
    %s91 = sphi 0, %s90
    %s107 = sphi 0, %s91
  $region4: #{_lambda_.14} parent=0 // loop_header_branch
    %12 = sbr.rel (%p10) target = $region8
  $region5: #{_lambda_.14} parent=0 // loop_body
    %s14 = ssub.s32 %s9, 1
    %s15 = ssub.s32 %s9, 2
    %s16 = sadd.s32 %s9, 1
    %s17 = ssub.s32 %s9, %s16
    %p18 = scmp.eq.s32.totalorder %s17, 0
    %s20 = sadd.s32 %s19, 1
    %s21 = scalar_select %p18, %s19, %s20
    %p24 = pneg %p18
    %p25 = scmp.eq.s32.totalorder %s9, 1
    %p26 = por %p24, %p25
    %p27 = scmp.ne.s32.totalorder %s19, %s22
    %p28 = scmp.eq.s32.totalorder %s9, 0
    %p29 = por %p27, %p28
    %p30 = scmp.ne.s32.totalorder %s19, %s22
    %p31 = scmp.eq.s32.totalorder %s14, 1
    %p32 = por %p30, %p31
    %p33 = scmp.ne.s32.totalorder %s22, %s23
    %p34 = scmp.eq.s32.totalorder %s14, 0
    %p35 = por %p33, %p34
    %p36 = scmp.ne.s32.totalorder %s22, %s23
    %p37 = scmp.eq.s32.totalorder %s15, 1
    %p38 = por %p36, %p37
    %p40 = scmp.ne.s32.totalorder %s23, %s39
    %p41 = scmp.eq.s32.totalorder %s15, 0
    %p42 = por %p40, %p41
    %s44 = sadd.s32 %s43, 1
    %p47 = scmp.eq.s32.totalorder %s9, 1
    %p48 = scmp.ne.s32.totalorder %s43, %s45
    %p49 = scmp.eq.s32.totalorder %s9, 0
    %p50 = por %p48, %p49
    %p51 = scmp.ne.s32.totalorder %s43, %s45
    %p52 = scmp.eq.s32.totalorder %s14, 1
    %p53 = por %p51, %p52
    %p54 = scmp.ne.s32.totalorder %s45, %s46
    %p55 = scmp.eq.s32.totalorder %s14, 0
    %p56 = por %p54, %p55
    %p57 = scmp.ne.s32.totalorder %s45, %s46
    %p58 = scmp.eq.s32.totalorder %s15, 1
    %p59 = por %p57, %p58
    %p61 = scmp.ne.s32.totalorder %s46, %s60
    %p62 = scmp.eq.s32.totalorder %s15, 0
    %p63 = por %p61, %p62
    %s65 = sadd.s32 %s64, 1
    %p68 = scmp.eq.s32.totalorder %s9, 1
    %p69 = scmp.ne.s32.totalorder %s64, %s66
    %p70 = scmp.eq.s32.totalorder %s9, 0
    %p71 = por %p69, %p70
    %p72 = scmp.ne.s32.totalorder %s64, %s66
    %p73 = scmp.eq.s32.totalorder %s14, 1
    %p74 = por %p72, %p73
    %p75 = scmp.ne.s32.totalorder %s66, %s67
    %p76 = scmp.eq.s32.totalorder %s14, 0
    %p77 = por %p75, %p76
    %p78 = scmp.ne.s32.totalorder %s66, %s67
    %p79 = scmp.eq.s32.totalorder %s15, 1
    %p80 = por %p78, %p79
    %p82 = scmp.ne.s32.totalorder %s67, %s81
    %p83 = scmp.eq.s32.totalorder %s15, 0
    %p84 = por %p82, %p83
    %s85 = ssub.s32 %s9, %s16
    %p86 = scmp.eq.s32.totalorder %s85, 0
    %s88 = sadd.s32 %s87, 1
    %s89 = scalar_select %p86, %s87, %s88
    %p92 = pneg %p86
    %p93 = scmp.eq.s32.totalorder %s9, 1
    %p94 = por %p92, %p93
    %p95 = scmp.ne.s32.totalorder %s87, %s90
    %p96 = scmp.eq.s32.totalorder %s9, 0
    %p97 = por %p95, %p96
    %p98 = scmp.ne.s32.totalorder %s87, %s90
    %p99 = scmp.eq.s32.totalorder %s14, 1
    %p100 = por %p98, %p99
    %p101 = scmp.ne.s32.totalorder %s90, %s91
    %p102 = scmp.eq.s32.totalorder %s14, 0
    %p103 = por %p101, %p102
    %p104 = scmp.ne.s32.totalorder %s90, %s91
    %p105 = scmp.eq.s32.totalorder %s15, 1
    %p106 = por %p104, %p105
    %p108 = scmp.ne.s32.totalorder %s91, %s107
    %p109 = scmp.eq.s32.totalorder %s15, 0
    %p110 = por %p108, %p109
    %p111 = scmp.le.s32.totalorder 1, %s9
    %p112 = scmp.lt.s32.totalorder %s9, 3
    %p113 = pnand %p111, %p112
    %p114 = pneg %p113
    // Predicated region
    $region9: #{_lambda_.14} parent=5 // pred_check
      _
    $region10: #{_lambda_.14} parent=5 // pred_check_branch
      %116 = sbr.rel (%p113) target = $region12
    $region11: #{_lambda_.14} parent=5 // pred_region
      %s117 = ssub.s32 %s9, 1
      // Predicated region
      $region13: #{_lambda_.14} parent=11 // pred_check
        %p118 = pneg %p56
      $region14: #{_lambda_.14} parent=11 // pred_check_branch
        %120 = sbr.rel (%p118) target = $region16
      $region15: #{_lambda_.14} parent=11 // pred_region
        _
      $region16: #{_lambda_.14} parent=11 // pred_fallthru
        _
      // Predicated region
      $region17: #{_lambda_.14} parent=11 // pred_check
        %p121 = pneg %p77
      $region18: #{_lambda_.14} parent=11 // pred_check_branch
        %123 = sbr.rel (%p121) target = $region20
      $region19: #{_lambda_.14} parent=11 // pred_region
        _
      $region20: #{_lambda_.14} parent=11 // pred_fallthru
        _
    $region12: #{_lambda_.14} parent=5 // pred_fallthru
      _
    %p124 = scmp.lt.s32.totalorder %s9, 2
    // Predicated region
    $region21: #{_lambda_.14} parent=5 // pred_check
      %p125 = pneg %p124
    $region22: #{_lambda_.14} parent=5 // pred_check_branch
      %127 = sbr.rel (%p125) target = $region24
    $region23: #{_lambda_.14} parent=5 // pred_region
      // Predicated region
      $region25: #{_lambda_.14} parent=23 // pred_check
        %p128 = pneg %p29
      $region26: #{_lambda_.14} parent=23 // pred_check_branch
        %130 = sbr.rel (%p128) target = $region28
      $region27: #{_lambda_.14} parent=23 // pred_region
        %p131 = scmp.lt.s32.totalorder %s9, 1
        %s132 = scalar_select %p131, %s9, 1
        %s133 = smul.addr %s132, 36
        %s134 = smul.addr %s133, 4
        %s135 = scalar_lea.vmem %s0, %s134
      $region28: #{_lambda_.14} parent=23 // pred_fallthru
        _
    $region24: #{_lambda_.14} parent=5 // pred_fallthru
      _
    %p136 = scmp.le.s32.totalorder 1, %s9
    %p137 = scmp.lt.s32.totalorder %s9, 3
    %p138 = pnand %p136, %p137
    %p139 = pneg %p138
    // Predicated region
    $region29: #{_lambda_.14} parent=5 // pred_check
      _
    $region30: #{_lambda_.14} parent=5 // pred_check_branch
      %141 = sbr.rel (%p138) target = $region32
    $region31: #{_lambda_.14} parent=5 // pred_region
      %s142 = ssub.s32 %s9, 1
      %p143 = scmp.lt.s32.totalorder %s14, 1
      %s144 = scalar_select %p143, %s14, 1
      %s145 = smul.addr %s144, 36
      %s146 = smul.addr %s145, 4
      %s147 = scalar_lea.vmem %s0, %s146
      %p148 = pneg %p35
      %p149 = pneg %p32
      %p150 = pneg %p56
      %p151 = pneg %p53
      %p152 = pneg %p77
      %p153 = pneg %p74
      %p154 = pneg %p103
      %p155 = pneg %p100
      %p156 = scmp.lt.s32.totalorder %s14, 1
      %s157 = scalar_select %p156, %s14, 1
      %s158 = smul.addr %s157, 32
      %s159 = smul.addr %s158, 4
      %s160 = scalar_lea.vmem %s3, %s159
      %p161 = scmp.lt.s32.totalorder %s14, 1
      %s162 = scalar_select %p161, %s14, 1
      %s163 = smul.addr %s162, 36
      %s164 = smul.addr %s163, 4
      %s165 = scalar_lea.vmem %s0, %s164
      %p166 = scmp.lt.s32.totalorder %s14, 1
      %s167 = scalar_select %p166, %s14, 1
      %s168 = smul.addr %s167, 32
      %s169 = smul.addr %s168, 4
      %s170 = scalar_lea.vmem %s3, %s169
      %v172 = vld [vmem:[%s165] sm:$0xf]
      %v173 = vld [vmem:[%s165 + $0x4] sm:$0xf]
      %v174 = vld [vmem:[%s165 + $0x8] sm:$0xf]
      %v175 = vld [vmem:[%s165 + $0xc] sm:$0xf]
      %v176 = vld [vmem:[%s165 + $0x10] sm:$0xf]
      %v177 = vld [vmem:[%s165 + $0x14] sm:$0xf]
      %v178 = vld [vmem:[%s165 + $0x18] sm:$0xf]
      %v179 = vld [vmem:[%s165 + $0x1c] sm:$0xf]
      %v180 = vld [vmem:[%s165 + $0x20] sm:$0xf]
      %v181 = vld [vmem:[%s165 + $0x24] sm:$0xf]
      %v182 = vld [vmem:[%s165 + $0x28] sm:$0xf]
      %v183 = vld [vmem:[%s165 + $0x2c] sm:$0xf]
      %v184 = vld [vmem:[%s165 + $0x30] sm:$0xf]
      %v185 = vld [vmem:[%s165 + $0x34] sm:$0xf]
      %v186 = vld [vmem:[%s165 + $0x38] sm:$0xf]
      %v187 = vld [vmem:[%s165 + $0x3c] sm:$0xf]
      %v188 = vld [vmem:[%s165 + $0x40] sm:$0xf]
      %v189 = vld [vmem:[%s165 + $0x44] sm:$0xf]
      %v190 = vld [vmem:[%s165 + $0x48] sm:$0xf]
      %v191 = vld [vmem:[%s165 + $0x4c] sm:$0xf]
      %v192 = vld [vmem:[%s165 + $0x50] sm:$0xf]
      %v193 = vld [vmem:[%s165 + $0x54] sm:$0xf]
      %v194 = vld [vmem:[%s165 + $0x58] sm:$0xf]
      %v195 = vld [vmem:[%s165 + $0x5c] sm:$0xf]
      %v196 = vld [vmem:[%s165 + $0x60] sm:$0xf]
      %v197 = vld [vmem:[%s165 + $0x64] sm:$0xf]
      %v198 = vld [vmem:[%s165 + $0x68] sm:$0xf]
      %v199 = vld [vmem:[%s165 + $0x6c] sm:$0xf]
      %v200 = vld [vmem:[%s165 + $0x70] sm:$0xf]
      %v201 = vld [vmem:[%s165 + $0x74] sm:$0xf]
      %v202 = vld [vmem:[%s165 + $0x78] sm:$0xf]
      %v203 = vld [vmem:[%s165 + $0x7c] sm:$0xf]
      %v204 = vld [vmem:[%s165 + $0x80] sm:$0xf]
      %v205 = vld [vmem:[%s165 + $0x84] sm:$0xf]
      %v206 = vld [vmem:[%s165 + $0x88] sm:$0xf]
      %v207 = vld [vmem:[%s165 + $0x8c] sm:$0xf]
      %v208 = vld [vmem:[%s1] sm:$0xf]
      %v209 = vld [vmem:[%s1 + $0x4] sm:$0x1]
      %s210 = scalar_lea.vmem %s1, 8
      %v211 = vld [vmem:[%s210] sm:$0xf]
      %v212 = vld [vmem:[%s210 + $0x4] sm:$0x1]
      %v245 = vunpack.c.l.b16 %v174
      %v246 = vunpack.c.l.b16 %v175
      %v247 = vunpack.c.l.b16 %v176
      %v248 = vunpack.c.l.b16 %v177
      %v249 = vunpack.c.l.b16 %v178
      %v250 = vunpack.c.l.b16 %v179
      %v251 = vunpack.c.l.b16 %v180
      %v252 = vunpack.c.l.b16 %v181
      %v253 = vunpack.c.l.b16 %v182
      %v254 = vunpack.c.l.b16 %v183
      %v255 = vunpack.c.l.b16 %v184
      %v256 = vunpack.c.l.b16 %v185
      %v257 = vunpack.c.l.b16 %v186
      %v258 = vunpack.c.l.b16 %v187
      %v259 = vunpack.c.l.b16 %v188
      %v260 = vunpack.c.l.b16 %v189
      %v261 = vunpack.c.l.b16 %v190
      %v262 = vunpack.c.l.b16 %v191
      %v263 = vunpack.c.l.b16 %v192
      %v264 = vunpack.c.l.b16 %v193
      %v265 = vunpack.c.l.b16 %v194
      %v266 = vunpack.c.l.b16 %v195
      %v267 = vunpack.c.l.b16 %v196
      %v268 = vunpack.c.l.b16 %v197
      %v269 = vunpack.c.l.b16 %v198
      %v270 = vunpack.c.l.b16 %v199
      %v271 = vunpack.c.l.b16 %v200
      %v272 = vunpack.c.l.b16 %v201
      %v273 = vunpack.c.l.b16 %v202
      %v274 = vunpack.c.l.b16 %v203
      %v275 = vunpack.c.l.b16 %v204
      %v276 = vunpack.c.l.b16 %v205
      %v277 = vpack.c.b16 %v246, %v245
      %v278 = vpack.c.b16 %v248, %v247
      %v279 = vpack.c.b16 %v250, %v249
      %v280 = vpack.c.b16 %v252, %v251
      %v281 = vpack.c.b16 %v254, %v253
      %v282 = vpack.c.b16 %v256, %v255
      %v283 = vpack.c.b16 %v258, %v257
      %v284 = vpack.c.b16 %v260, %v259
      %v285 = vpack.c.b16 %v262, %v261
      %v286 = vpack.c.b16 %v264, %v263
      %v287 = vpack.c.b16 %v266, %v265
      %v288 = vpack.c.b16 %v268, %v267
      %v289 = vpack.c.b16 %v270, %v269
      %v290 = vpack.c.b16 %v272, %v271
      %v291 = vpack.c.b16 %v274, %v273
      %v292 = vpack.c.b16 %v276, %v275
      %v295 = vunpack.c.l.b16 %v211
      %v296 = vunpack.c.l.b16 %v212
      %v297 = vpack.c.b16 %v296, %v295
      %vm298 = vcmask 72704
      %v300 = vsel %vm298, %v277, 0
      %v303 = vsel %vm298, %v278, 0
      %v306 = vsel %vm298, %v279, 0
      %v309 = vsel %vm298, %v280, 0
      %v312 = vsel %vm298, %v281, 0
      %v315 = vsel %vm298, %v282, 0
      %v318 = vsel %vm298, %v283, 0
      %v321 = vsel %vm298, %v284, 0
      %v324 = vsel %vm298, %v285, 0
      %v327 = vsel %vm298, %v286, 0
      %v330 = vsel %vm298, %v287, 0
      %v333 = vsel %vm298, %v288, 0
      %v336 = vsel %vm298, %v289, 0
      %v339 = vsel %vm298, %v290, 0
      %v342 = vsel %vm298, %v291, 0
      %v345 = vsel %vm298, %v292, 0
      %vm347 = vcmask 1043456
      %vm348 = vcmask 1044480
      %v349 = vsel %vm347, 4294967295, 65535
      %v350 = vsel %vm348, %v349, 0
      %v352 = vand.u32 %v297, %v350
      %354 = vmatprep.subr.bf16.mxu0 0
      %355 = vmatpush1.bf16.msra.mxu0 0
      %356 = vmatprep.subr.bf16.mxu0 0
      %357 = vmatpush1.bf16.msra.mxu0 0
      %358 = vmatprep.subr.bf16.mxu0 0
      %359 = vmatpush1.bf16.msra.mxu0 0
      %360 = vmatprep.subr.bf16.mxu0 0
      %361 = vmatpush1.bf16.msra.mxu0 0
      %362 = vmatprep.subr.bf16.mxu0 0
      %363 = vmatpush1.bf16.msra.mxu0 0
      %364 = vmatprep.subr.bf16.mxu0 0
      %365 = vmatpush1.bf16.msra.mxu0 0
      %366 = vmatprep.subr.bf16.mxu0 0
      %367 = vmatpush1.bf16.msra.mxu0 0
      %368 = vmatprep.subr.bf16.mxu0 0
      %369 = vmatpush1.bf16.msra.mxu0 %v352
      %370 = vmatprep.subr.bf16.mxu0 0
      %371 = vmatpush2.bf16.msra.mxu0 0
      %372 = vmatprep.subr.bf16.mxu0 0
      %373 = vmatpush2.bf16.msra.mxu0 0
      %374 = vmatprep.subr.bf16.mxu0 0
      %375 = vmatpush2.bf16.msra.mxu0 0
      %376 = vmatprep.subr.bf16.mxu0 0
      %377 = vmatpush2.bf16.msra.mxu0 0
      %378 = vmatprep.subr.bf16.mxu0 0
      %379 = vmatpush2.bf16.msra.mxu0 0
      %380 = vmatprep.subr.bf16.mxu0 0
      %381 = vmatpush2.bf16.msra.mxu0 0
      %382 = vmatprep.subr.bf16.mxu0 0
      %383 = vmatpush2.bf16.msra.mxu0 0
      %384 = vmatprep.subr.bf16.mxu0 0
      %385 = vmatpush2.bf16.msra.mxu0 0
      %386 = vmatprep.mubr.bf16.mxu0 0
      %387 = vmatmul.mubr.bf16.gmra.mxu0 %v300
      %v388 = vpop.f32.mrf.mxu0
      %v389 = vadd.f32 0.0, %v388
      %v390 = vpop.f32.mrf.mxu0
      %v391 = vpop.f32.mrf.mxu0
      %v392 = vadd.f32 0.0, %v391
      %v393 = vpop.f32.mrf.mxu0
      %394 = vmatprep.mubr.bf16.mxu0 0
      %395 = vmatmul.mubr.bf16.gmra.mxu0 %v303
      %v396 = vpop.f32.mrf.mxu0
      %v397 = vadd.f32 0.0, %v396
      %v398 = vpop.f32.mrf.mxu0
      %v399 = vpop.f32.mrf.mxu0
      %v400 = vadd.f32 0.0, %v399
      %v401 = vpop.f32.mrf.mxu0
      %402 = vmatprep.mubr.bf16.mxu0 0
      %403 = vmatmul.mubr.bf16.gmra.mxu0 %v306
      %v404 = vpop.f32.mrf.mxu0
      %v405 = vadd.f32 0.0, %v404
      %v406 = vpop.f32.mrf.mxu0
      %v407 = vpop.f32.mrf.mxu0
      %v408 = vadd.f32 0.0, %v407
      %v409 = vpop.f32.mrf.mxu0
      %410 = vmatprep.mubr.bf16.mxu0 0
      %411 = vmatmul.mubr.bf16.gmra.mxu0 %v309
      %v412 = vpop.f32.mrf.mxu0
      %v413 = vadd.f32 0.0, %v412
      %v414 = vpop.f32.mrf.mxu0
      %v415 = vpop.f32.mrf.mxu0
      %v416 = vadd.f32 0.0, %v415
      %v417 = vpop.f32.mrf.mxu0
      %418 = vmatprep.mubr.bf16.mxu0 0
      %419 = vmatmul.mubr.bf16.gmra.mxu0 %v312
      %v420 = vpop.f32.mrf.mxu0
      %v421 = vadd.f32 0.0, %v420
      %v422 = vpop.f32.mrf.mxu0
      %v423 = vpop.f32.mrf.mxu0
      %v424 = vadd.f32 0.0, %v423
      %v425 = vpop.f32.mrf.mxu0
      %426 = vmatprep.mubr.bf16.mxu0 0
      %427 = vmatmul.mubr.bf16.gmra.mxu0 %v315
      %v428 = vpop.f32.mrf.mxu0
      %v429 = vadd.f32 0.0, %v428
      %v430 = vpop.f32.mrf.mxu0
      %v431 = vpop.f32.mrf.mxu0
      %v432 = vadd.f32 0.0, %v431
      %v433 = vpop.f32.mrf.mxu0
      %434 = vmatprep.mubr.bf16.mxu0 0
      %435 = vmatmul.mubr.bf16.gmra.mxu0 %v318
      %v436 = vpop.f32.mrf.mxu0
      %v437 = vadd.f32 0.0, %v436
      %v438 = vpop.f32.mrf.mxu0
      %v439 = vpop.f32.mrf.mxu0
      %v440 = vadd.f32 0.0, %v439
      %v441 = vpop.f32.mrf.mxu0
      %442 = vmatprep.mubr.bf16.mxu0 0
      %443 = vmatmul.mubr.bf16.gmra.mxu0 %v321
      %v444 = vpop.f32.mrf.mxu0
      %v445 = vadd.f32 0.0, %v444
      %v446 = vpop.f32.mrf.mxu0
      %v447 = vpop.f32.mrf.mxu0
      %v448 = vadd.f32 0.0, %v447
      %v449 = vpop.f32.mrf.mxu0
      %450 = vmatprep.mubr.bf16.mxu0 0
      %451 = vmatmul.mubr.bf16.gmra.mxu0 %v324
      %v452 = vpop.f32.mrf.mxu0
      %v453 = vadd.f32 0.0, %v452
      %v454 = vpop.f32.mrf.mxu0
      %v455 = vpop.f32.mrf.mxu0
      %v456 = vadd.f32 0.0, %v455
      %v457 = vpop.f32.mrf.mxu0
      %458 = vmatprep.mubr.bf16.mxu0 0
      %459 = vmatmul.mubr.bf16.gmra.mxu0 %v327
      %v460 = vpop.f32.mrf.mxu0
      %v461 = vadd.f32 0.0, %v460
      %v462 = vpop.f32.mrf.mxu0
      %v463 = vpop.f32.mrf.mxu0
      %v464 = vadd.f32 0.0, %v463
      %v465 = vpop.f32.mrf.mxu0
      %466 = vmatprep.mubr.bf16.mxu0 0
      %467 = vmatmul.mubr.bf16.gmra.mxu0 %v330
      %v468 = vpop.f32.mrf.mxu0
      %v469 = vadd.f32 0.0, %v468
      %v470 = vpop.f32.mrf.mxu0
      %v471 = vpop.f32.mrf.mxu0
      %v472 = vadd.f32 0.0, %v471
      %v473 = vpop.f32.mrf.mxu0
      %474 = vmatprep.mubr.bf16.mxu0 0
      %475 = vmatmul.mubr.bf16.gmra.mxu0 %v333
      %v476 = vpop.f32.mrf.mxu0
      %v477 = vadd.f32 0.0, %v476
      %v478 = vpop.f32.mrf.mxu0
      %v479 = vpop.f32.mrf.mxu0
      %v480 = vadd.f32 0.0, %v479
      %v481 = vpop.f32.mrf.mxu0
      %482 = vmatprep.mubr.bf16.mxu0 0
      %483 = vmatmul.mubr.bf16.gmra.mxu0 %v336
      %v484 = vpop.f32.mrf.mxu0
      %v485 = vadd.f32 0.0, %v484
      %v486 = vpop.f32.mrf.mxu0
      %v487 = vpop.f32.mrf.mxu0
      %v488 = vadd.f32 0.0, %v487
      %v489 = vpop.f32.mrf.mxu0
      %490 = vmatprep.mubr.bf16.mxu0 0
      %491 = vmatmul.mubr.bf16.gmra.mxu0 %v339
      %v492 = vpop.f32.mrf.mxu0
      %v493 = vadd.f32 0.0, %v492
      %v494 = vpop.f32.mrf.mxu0
      %v495 = vpop.f32.mrf.mxu0
      %v496 = vadd.f32 0.0, %v495
      %v497 = vpop.f32.mrf.mxu0
      %498 = vmatprep.mubr.bf16.mxu0 0
      %499 = vmatmul.mubr.bf16.gmra.mxu0 %v342
      %v500 = vpop.f32.mrf.mxu0
      %v501 = vadd.f32 0.0, %v500
      %v502 = vpop.f32.mrf.mxu0
      %v503 = vpop.f32.mrf.mxu0
      %v504 = vadd.f32 0.0, %v503
      %v505 = vpop.f32.mrf.mxu0
      %506 = vmatprep.mubr.bf16.mxu0 0
      %507 = vmatmul.mubr.bf16.gmra.mxu0 %v345
      %v508 = vpop.f32.mrf.mxu0
      %v509 = vadd.f32 0.0, %v508
      %v510 = vpop.f32.mrf.mxu0
      %v511 = vpop.f32.mrf.mxu0
      %v512 = vadd.f32 0.0, %v511
      %v513 = vpop.f32.mrf.mxu0
      %514 = vdwg.mxu0
      %v517 = vunpack.c.l.b16 %v172
      %v518 = vunpack.c.l.b16 %v173
      %v519 = vpack.c.b16 %v518, %v517
      %v522 = vunpack.c.l.b16 %v208
      %v523 = vunpack.c.l.b16 %v209
      %v524 = vpack.c.b16 %v523, %v522
      %v526 = vsel %vm298, %v519, 0
      %v529 = vand.u32 %v524, %v350
      %531 = vmatprep.subr.bf16.mxu0 0
      %532 = vmatpush1.bf16.msra.mxu0 0
      %533 = vmatprep.subr.bf16.mxu0 0
      %534 = vmatpush1.bf16.msra.mxu0 0
      %535 = vmatprep.subr.bf16.mxu0 0
      %536 = vmatpush1.bf16.msra.mxu0 0
      %537 = vmatprep.subr.bf16.mxu0 0
      %538 = vmatpush1.bf16.msra.mxu0 0
      %539 = vmatprep.subr.bf16.mxu0 0
      %540 = vmatpush1.bf16.msra.mxu0 0
      %541 = vmatprep.subr.bf16.mxu0 0
      %542 = vmatpush1.bf16.msra.mxu0 0
      %543 = vmatprep.subr.bf16.mxu0 0
      %544 = vmatpush1.bf16.msra.mxu0 0
      %545 = vmatprep.subr.bf16.mxu0 0
      %546 = vmatpush1.bf16.msra.mxu0 %v529
      %547 = vmatprep.subr.bf16.mxu0 0
      %548 = vmatpush2.bf16.msra.mxu0 0
      %549 = vmatprep.subr.bf16.mxu0 0
      %550 = vmatpush2.bf16.msra.mxu0 0
      %551 = vmatprep.subr.bf16.mxu0 0
      %552 = vmatpush2.bf16.msra.mxu0 0
      %553 = vmatprep.subr.bf16.mxu0 0
      %554 = vmatpush2.bf16.msra.mxu0 0
      %555 = vmatprep.subr.bf16.mxu0 0
      %556 = vmatpush2.bf16.msra.mxu0 0
      %557 = vmatprep.subr.bf16.mxu0 0
      %558 = vmatpush2.bf16.msra.mxu0 0
      %559 = vmatprep.subr.bf16.mxu0 0
      %560 = vmatpush2.bf16.msra.mxu0 0
      %561 = vmatprep.subr.bf16.mxu0 0
      %562 = vmatpush2.bf16.msra.mxu0 0
      %563 = vmatprep.mubr.bf16.mxu0 0
      %564 = vmatmul.mubr.bf16.gmra.mxu0 %v526
      %v565 = vpop.f32.mrf.mxu0
      %v566 = vadd.f32 %v389, %v565
      %v567 = vpop.f32.mrf.mxu0
      %v568 = vpop.f32.mrf.mxu0
      %v569 = vadd.f32 %v392, %v568
      %v570 = vpop.f32.mrf.mxu0
      %571 = vmatprep.mubr.bf16.mxu0 0
      %572 = vmatmul.mubr.bf16.gmra.mxu0 %v300
      %v573 = vpop.f32.mrf.mxu0
      %v574 = vadd.f32 %v397, %v573
      %v575 = vpop.f32.mrf.mxu0
      %v576 = vpop.f32.mrf.mxu0
      %v577 = vadd.f32 %v400, %v576
      %v578 = vpop.f32.mrf.mxu0
      %579 = vmatprep.mubr.bf16.mxu0 0
      %580 = vmatmul.mubr.bf16.gmra.mxu0 %v303
      %v581 = vpop.f32.mrf.mxu0
      %v582 = vadd.f32 %v405, %v581
      %v583 = vpop.f32.mrf.mxu0
      %v584 = vpop.f32.mrf.mxu0
      %v585 = vadd.f32 %v408, %v584
      %v586 = vpop.f32.mrf.mxu0
      %587 = vmatprep.mubr.bf16.mxu0 0
      %588 = vmatmul.mubr.bf16.gmra.mxu0 %v306
      %v589 = vpop.f32.mrf.mxu0
      %v590 = vadd.f32 %v413, %v589
      %v591 = vpop.f32.mrf.mxu0
      %v592 = vpop.f32.mrf.mxu0
      %v593 = vadd.f32 %v416, %v592
      %v594 = vpop.f32.mrf.mxu0
      %595 = vmatprep.mubr.bf16.mxu0 0
      %596 = vmatmul.mubr.bf16.gmra.mxu0 %v309
      %v597 = vpop.f32.mrf.mxu0
      %v598 = vadd.f32 %v421, %v597
      %v599 = vpop.f32.mrf.mxu0
      %v600 = vpop.f32.mrf.mxu0
      %v601 = vadd.f32 %v424, %v600
      %v602 = vpop.f32.mrf.mxu0
      %603 = vmatprep.mubr.bf16.mxu0 0
      %604 = vmatmul.mubr.bf16.gmra.mxu0 %v312
      %v605 = vpop.f32.mrf.mxu0
      %v606 = vadd.f32 %v429, %v605
      %v607 = vpop.f32.mrf.mxu0
      %v608 = vpop.f32.mrf.mxu0
      %v609 = vadd.f32 %v432, %v608
      %v610 = vpop.f32.mrf.mxu0
      %611 = vmatprep.mubr.bf16.mxu0 0
      %612 = vmatmul.mubr.bf16.gmra.mxu0 %v315
      %v613 = vpop.f32.mrf.mxu0
      %v614 = vadd.f32 %v437, %v613
      %v615 = vpop.f32.mrf.mxu0
      %v616 = vpop.f32.mrf.mxu0
      %v617 = vadd.f32 %v440, %v616
      %v618 = vpop.f32.mrf.mxu0
      %619 = vmatprep.mubr.bf16.mxu0 0
      %620 = vmatmul.mubr.bf16.gmra.mxu0 %v318
      %v621 = vpop.f32.mrf.mxu0
      %v622 = vadd.f32 %v445, %v621
      %v623 = vpop.f32.mrf.mxu0
      %v624 = vpop.f32.mrf.mxu0
      %v625 = vadd.f32 %v448, %v624
      %v626 = vpop.f32.mrf.mxu0
      %627 = vmatprep.mubr.bf16.mxu0 0
      %628 = vmatmul.mubr.bf16.gmra.mxu0 %v321
      %v629 = vpop.f32.mrf.mxu0
      %v630 = vadd.f32 %v453, %v629
      %v631 = vpop.f32.mrf.mxu0
      %v632 = vpop.f32.mrf.mxu0
      %v633 = vadd.f32 %v456, %v632
      %v634 = vpop.f32.mrf.mxu0
      %635 = vmatprep.mubr.bf16.mxu0 0
      %636 = vmatmul.mubr.bf16.gmra.mxu0 %v324
      %v637 = vpop.f32.mrf.mxu0
      %v638 = vadd.f32 %v461, %v637
      %v639 = vpop.f32.mrf.mxu0
      %v640 = vpop.f32.mrf.mxu0
      %v641 = vadd.f32 %v464, %v640
      %v642 = vpop.f32.mrf.mxu0
      %643 = vmatprep.mubr.bf16.mxu0 0
      %644 = vmatmul.mubr.bf16.gmra.mxu0 %v327
      %v645 = vpop.f32.mrf.mxu0
      %v646 = vadd.f32 %v469, %v645
      %v647 = vpop.f32.mrf.mxu0
      %v648 = vpop.f32.mrf.mxu0
      %v649 = vadd.f32 %v472, %v648
      %v650 = vpop.f32.mrf.mxu0
      %651 = vmatprep.mubr.bf16.mxu0 0
      %652 = vmatmul.mubr.bf16.gmra.mxu0 %v330
      %v653 = vpop.f32.mrf.mxu0
      %v654 = vadd.f32 %v477, %v653
      %v655 = vpop.f32.mrf.mxu0
      %v656 = vpop.f32.mrf.mxu0
      %v657 = vadd.f32 %v480, %v656
      %v658 = vpop.f32.mrf.mxu0
      %659 = vmatprep.mubr.bf16.mxu0 0
      %660 = vmatmul.mubr.bf16.gmra.mxu0 %v333
      %v661 = vpop.f32.mrf.mxu0
      %v662 = vadd.f32 %v485, %v661
      %v663 = vpop.f32.mrf.mxu0
      %v664 = vpop.f32.mrf.mxu0
      %v665 = vadd.f32 %v488, %v664
      %v666 = vpop.f32.mrf.mxu0
      %667 = vmatprep.mubr.bf16.mxu0 0
      %668 = vmatmul.mubr.bf16.gmra.mxu0 %v336
      %v669 = vpop.f32.mrf.mxu0
      %v670 = vadd.f32 %v493, %v669
      %v671 = vpop.f32.mrf.mxu0
      %v672 = vpop.f32.mrf.mxu0
      %v673 = vadd.f32 %v496, %v672
      %v674 = vpop.f32.mrf.mxu0
      %675 = vmatprep.mubr.bf16.mxu0 0
      %676 = vmatmul.mubr.bf16.gmra.mxu0 %v339
      %v677 = vpop.f32.mrf.mxu0
      %v678 = vadd.f32 %v501, %v677
      %v679 = vpop.f32.mrf.mxu0
      %v680 = vpop.f32.mrf.mxu0
      %v681 = vadd.f32 %v504, %v680
      %v682 = vpop.f32.mrf.mxu0
      %683 = vmatprep.mubr.bf16.mxu0 0
      %684 = vmatmul.mubr.bf16.gmra.mxu0 %v342
      %v685 = vpop.f32.mrf.mxu0
      %v686 = vadd.f32 %v509, %v685
      %v687 = vpop.f32.mrf.mxu0
      %v688 = vpop.f32.mrf.mxu0
      %v689 = vadd.f32 %v512, %v688
      %v690 = vpop.f32.mrf.mxu0
      %691 = vdwg.mxu0
      %s692 = scalar_lea.vmem %s1, 16
      %v693 = vld [vmem:[%s692] sm:$0xf]
      %v694 = vld [vmem:[%s692 + $0x4] sm:$0x1]
      %v697 = vunpack.c.l.b16 %v206
      %v698 = vunpack.c.l.b16 %v207
      %v699 = vpack.c.b16 %v698, %v697
      %v702 = vunpack.c.l.b16 %v693
      %v703 = vunpack.c.l.b16 %v694
      %v704 = vpack.c.b16 %v703, %v702
      %v706 = vsel %vm298, %v699, 0
      %v709 = vand.u32 %v704, %v350
      %711 = vmatprep.subr.bf16.mxu0 0
      %712 = vmatpush1.bf16.msra.mxu0 0
      %713 = vmatprep.subr.bf16.mxu0 0
      %714 = vmatpush1.bf16.msra.mxu0 0
      %715 = vmatprep.subr.bf16.mxu0 0
      %716 = vmatpush1.bf16.msra.mxu0 0
      %717 = vmatprep.subr.bf16.mxu0 0
      %718 = vmatpush1.bf16.msra.mxu0 0
      %719 = vmatprep.subr.bf16.mxu0 0
      %720 = vmatpush1.bf16.msra.mxu0 0
      %721 = vmatprep.subr.bf16.mxu0 0
      %722 = vmatpush1.bf16.msra.mxu0 0
      %723 = vmatprep.subr.bf16.mxu0 0
      %724 = vmatpush1.bf16.msra.mxu0 0
      %725 = vmatprep.subr.bf16.mxu0 0
      %726 = vmatpush1.bf16.msra.mxu0 %v709
      %727 = vmatprep.subr.bf16.mxu0 0
      %728 = vmatpush2.bf16.msra.mxu0 0
      %729 = vmatprep.subr.bf16.mxu0 0
      %730 = vmatpush2.bf16.msra.mxu0 0
      %731 = vmatprep.subr.bf16.mxu0 0
      %732 = vmatpush2.bf16.msra.mxu0 0
      %733 = vmatprep.subr.bf16.mxu0 0
      %734 = vmatpush2.bf16.msra.mxu0 0
      %735 = vmatprep.subr.bf16.mxu0 0
      %736 = vmatpush2.bf16.msra.mxu0 0
      %737 = vmatprep.subr.bf16.mxu0 0
      %738 = vmatpush2.bf16.msra.mxu0 0
      %739 = vmatprep.subr.bf16.mxu0 0
      %740 = vmatpush2.bf16.msra.mxu0 0
      %741 = vmatprep.subr.bf16.mxu0 0
      %742 = vmatpush2.bf16.msra.mxu0 0
      %743 = vmatprep.mubr.bf16.mxu0 0
      %744 = vmatmul.mubr.bf16.gmra.mxu0 %v303
      %v745 = vpop.f32.mrf.mxu0
      %v746 = vadd.f32 0.0, %v745
      %v747 = vpop.f32.mrf.mxu0
      %v748 = vpop.f32.mrf.mxu0
      %v749 = vadd.f32 0.0, %v748
      %v750 = vpop.f32.mrf.mxu0
      %751 = vmatprep.mubr.bf16.mxu0 0
      %752 = vmatmul.mubr.bf16.gmra.mxu0 %v306
      %v753 = vpop.f32.mrf.mxu0
      %v754 = vadd.f32 0.0, %v753
      %v755 = vpop.f32.mrf.mxu0
      %v756 = vpop.f32.mrf.mxu0
      %v757 = vadd.f32 0.0, %v756
      %v758 = vpop.f32.mrf.mxu0
      %759 = vmatprep.mubr.bf16.mxu0 0
      %760 = vmatmul.mubr.bf16.gmra.mxu0 %v309
      %v761 = vpop.f32.mrf.mxu0
      %v762 = vadd.f32 0.0, %v761
      %v763 = vpop.f32.mrf.mxu0
      %v764 = vpop.f32.mrf.mxu0
      %v765 = vadd.f32 0.0, %v764
      %v766 = vpop.f32.mrf.mxu0
      %767 = vmatprep.mubr.bf16.mxu0 0
      %768 = vmatmul.mubr.bf16.gmra.mxu0 %v312
      %v769 = vpop.f32.mrf.mxu0
      %v770 = vadd.f32 0.0, %v769
      %v771 = vpop.f32.mrf.mxu0
      %v772 = vpop.f32.mrf.mxu0
      %v773 = vadd.f32 0.0, %v772
      %v774 = vpop.f32.mrf.mxu0
      %775 = vmatprep.mubr.bf16.mxu0 0
      %776 = vmatmul.mubr.bf16.gmra.mxu0 %v315
      %v777 = vpop.f32.mrf.mxu0
      %v778 = vadd.f32 0.0, %v777
      %v779 = vpop.f32.mrf.mxu0
      %v780 = vpop.f32.mrf.mxu0
      %v781 = vadd.f32 0.0, %v780
      %v782 = vpop.f32.mrf.mxu0
      %783 = vmatprep.mubr.bf16.mxu0 0
      %784 = vmatmul.mubr.bf16.gmra.mxu0 %v318
      %v785 = vpop.f32.mrf.mxu0
      %v786 = vadd.f32 0.0, %v785
      %v787 = vpop.f32.mrf.mxu0
      %v788 = vpop.f32.mrf.mxu0
      %v789 = vadd.f32 0.0, %v788
      %v790 = vpop.f32.mrf.mxu0
      %791 = vmatprep.mubr.bf16.mxu0 0
      %792 = vmatmul.mubr.bf16.gmra.mxu0 %v321
      %v793 = vpop.f32.mrf.mxu0
      %v794 = vadd.f32 0.0, %v793
      %v795 = vpop.f32.mrf.mxu0
      %v796 = vpop.f32.mrf.mxu0
      %v797 = vadd.f32 0.0, %v796
      %v798 = vpop.f32.mrf.mxu0
      %799 = vmatprep.mubr.bf16.mxu0 0
      %800 = vmatmul.mubr.bf16.gmra.mxu0 %v324
      %v801 = vpop.f32.mrf.mxu0
      %v802 = vadd.f32 0.0, %v801
      %v803 = vpop.f32.mrf.mxu0
      %v804 = vpop.f32.mrf.mxu0
      %v805 = vadd.f32 0.0, %v804
      %v806 = vpop.f32.mrf.mxu0
      %807 = vmatprep.mubr.bf16.mxu0 0
      %808 = vmatmul.mubr.bf16.gmra.mxu0 %v327
      %v809 = vpop.f32.mrf.mxu0
      %v810 = vadd.f32 0.0, %v809
      %v811 = vpop.f32.mrf.mxu0
      %v812 = vpop.f32.mrf.mxu0
      %v813 = vadd.f32 0.0, %v812
      %v814 = vpop.f32.mrf.mxu0
      %815 = vmatprep.mubr.bf16.mxu0 0
      %816 = vmatmul.mubr.bf16.gmra.mxu0 %v330
      %v817 = vpop.f32.mrf.mxu0
      %v818 = vadd.f32 0.0, %v817
      %v819 = vpop.f32.mrf.mxu0
      %v820 = vpop.f32.mrf.mxu0
      %v821 = vadd.f32 0.0, %v820
      %v822 = vpop.f32.mrf.mxu0
      %823 = vmatprep.mubr.bf16.mxu0 0
      %824 = vmatmul.mubr.bf16.gmra.mxu0 %v333
      %v825 = vpop.f32.mrf.mxu0
      %v826 = vadd.f32 0.0, %v825
      %v827 = vpop.f32.mrf.mxu0
      %v828 = vpop.f32.mrf.mxu0
      %v829 = vadd.f32 0.0, %v828
      %v830 = vpop.f32.mrf.mxu0
      %831 = vmatprep.mubr.bf16.mxu0 0
      %832 = vmatmul.mubr.bf16.gmra.mxu0 %v336
      %v833 = vpop.f32.mrf.mxu0
      %v834 = vadd.f32 0.0, %v833
      %v835 = vpop.f32.mrf.mxu0
      %v836 = vpop.f32.mrf.mxu0
      %v837 = vadd.f32 0.0, %v836
      %v838 = vpop.f32.mrf.mxu0
      %839 = vmatprep.mubr.bf16.mxu0 0
      %840 = vmatmul.mubr.bf16.gmra.mxu0 %v339
      %v841 = vpop.f32.mrf.mxu0
      %v842 = vadd.f32 0.0, %v841
      %v843 = vpop.f32.mrf.mxu0
      %v844 = vpop.f32.mrf.mxu0
      %v845 = vadd.f32 0.0, %v844
      %v846 = vpop.f32.mrf.mxu0
      %847 = vmatprep.mubr.bf16.mxu0 0
      %848 = vmatmul.mubr.bf16.gmra.mxu0 %v342
      %v849 = vpop.f32.mrf.mxu0
      %v850 = vadd.f32 0.0, %v849
      %v851 = vpop.f32.mrf.mxu0
      %v852 = vpop.f32.mrf.mxu0
      %v853 = vadd.f32 0.0, %v852
      %v854 = vpop.f32.mrf.mxu0
      %855 = vmatprep.mubr.bf16.mxu0 0
      %856 = vmatmul.mubr.bf16.gmra.mxu0 %v345
      %v857 = vpop.f32.mrf.mxu0
      %v858 = vadd.f32 0.0, %v857
      %v859 = vpop.f32.mrf.mxu0
      %v860 = vpop.f32.mrf.mxu0
      %v861 = vadd.f32 0.0, %v860
      %v862 = vpop.f32.mrf.mxu0
      %863 = vmatprep.mubr.bf16.mxu0 0
      %864 = vmatmul.mubr.bf16.gmra.mxu0 %v706
      %v865 = vpop.f32.mrf.mxu0
      %v866 = vadd.f32 0.0, %v865
      %v867 = vpop.f32.mrf.mxu0
      %v868 = vpop.f32.mrf.mxu0
      %v869 = vadd.f32 0.0, %v868
      %v870 = vpop.f32.mrf.mxu0
      %871 = vdwg.mxu0
      %v872 = vadd.f32 %v566, %v746
      %v873 = vadd.f32 %v569, %v749
      %v874 = vadd.f32 %v574, %v754
      %v875 = vadd.f32 %v577, %v757
      %v876 = vadd.f32 %v582, %v762
      %v877 = vadd.f32 %v585, %v765
      %v878 = vadd.f32 %v590, %v770
      %v879 = vadd.f32 %v593, %v773
      %v880 = vadd.f32 %v598, %v778
      %v881 = vadd.f32 %v601, %v781
      %v882 = vadd.f32 %v606, %v786
      %v883 = vadd.f32 %v609, %v789
      %v884 = vadd.f32 %v614, %v794
      %v885 = vadd.f32 %v617, %v797
      %v886 = vadd.f32 %v622, %v802
      %v887 = vadd.f32 %v625, %v805
      %v888 = vadd.f32 %v630, %v810
      %v889 = vadd.f32 %v633, %v813
      %v890 = vadd.f32 %v638, %v818
      %v891 = vadd.f32 %v641, %v821
      %v892 = vadd.f32 %v646, %v826
      %v893 = vadd.f32 %v649, %v829
      %v894 = vadd.f32 %v654, %v834
      %v895 = vadd.f32 %v657, %v837
      %v896 = vadd.f32 %v662, %v842
      %v897 = vadd.f32 %v665, %v845
      %v898 = vadd.f32 %v670, %v850
      %v899 = vadd.f32 %v673, %v853
      %v900 = vadd.f32 %v678, %v858
      %v901 = vadd.f32 %v681, %v861
      %v902 = vadd.f32 %v686, %v866
      %v903 = vadd.f32 %v689, %v869
      %v904 = vld [vmem:[%s2] sm:$0x1]
      %v906 = vlaneseq
      %v907 = vshrl.u32 %v906, 7
      %v908 = vsub.s32 0, %v907
      %v909 = vrot.slane %v904, %v908
      %v911 = vadd.f32 %v872, %v909
      %v912 = vadd.f32 %v873, %v909
      %v913 = vadd.f32 %v874, %v909
      %v914 = vadd.f32 %v875, %v909
      %v915 = vadd.f32 %v876, %v909
      %v916 = vadd.f32 %v877, %v909
      %v917 = vadd.f32 %v878, %v909
      %v918 = vadd.f32 %v879, %v909
      %v919 = vadd.f32 %v880, %v909
      %v920 = vadd.f32 %v881, %v909
      %v921 = vadd.f32 %v882, %v909
      %v922 = vadd.f32 %v883, %v909
      %v923 = vadd.f32 %v884, %v909
      %v924 = vadd.f32 %v885, %v909
      %v925 = vadd.f32 %v886, %v909
      %v926 = vadd.f32 %v887, %v909
      %v927 = vadd.f32 %v888, %v909
      %v928 = vadd.f32 %v889, %v909
      %v929 = vadd.f32 %v890, %v909
      %v930 = vadd.f32 %v891, %v909
      %v931 = vadd.f32 %v892, %v909
      %v932 = vadd.f32 %v893, %v909
      %v933 = vadd.f32 %v894, %v909
      %v934 = vadd.f32 %v895, %v909
      %v935 = vadd.f32 %v896, %v909
      %v936 = vadd.f32 %v897, %v909
      %v937 = vadd.f32 %v898, %v909
      %v938 = vadd.f32 %v899, %v909
      %v939 = vadd.f32 %v900, %v909
      %v940 = vadd.f32 %v901, %v909
      %v941 = vadd.f32 %v902, %v909
      %v942 = vadd.f32 %v903, %v909
      %v943 = vmax.f32 %v911, 0.0
      %v944 = vmax.f32 %v912, 0.0
      %v945 = vmax.f32 %v913, 0.0
      %v946 = vmax.f32 %v914, 0.0
      %v947 = vmax.f32 %v915, 0.0
      %v948 = vmax.f32 %v916, 0.0
      %v949 = vmax.f32 %v917, 0.0
      %v950 = vmax.f32 %v918, 0.0
      %v951 = vmax.f32 %v919, 0.0
      %v952 = vmax.f32 %v920, 0.0
      %v953 = vmax.f32 %v921, 0.0
      %v954 = vmax.f32 %v922, 0.0
      %v955 = vmax.f32 %v923, 0.0
      %v956 = vmax.f32 %v924, 0.0
      %v957 = vmax.f32 %v925, 0.0
      %v958 = vmax.f32 %v926, 0.0
      %v959 = vmax.f32 %v927, 0.0
      %v960 = vmax.f32 %v928, 0.0
      %v961 = vmax.f32 %v929, 0.0
      %v962 = vmax.f32 %v930, 0.0
      %v963 = vmax.f32 %v931, 0.0
      %v964 = vmax.f32 %v932, 0.0
      %v965 = vmax.f32 %v933, 0.0
      %v966 = vmax.f32 %v934, 0.0
      %v967 = vmax.f32 %v935, 0.0
      %v968 = vmax.f32 %v936, 0.0
      %v969 = vmax.f32 %v937, 0.0
      %v970 = vmax.f32 %v938, 0.0
      %v971 = vmax.f32 %v939, 0.0
      %v972 = vmax.f32 %v940, 0.0
      %v973 = vmax.f32 %v941, 0.0
      %v974 = vmax.f32 %v942, 0.0
      %v975 = vpack.c.bf16 %v944, %v943
      %v976 = vpack.c.bf16 %v946, %v945
      %v977 = vpack.c.bf16 %v948, %v947
      %v978 = vpack.c.bf16 %v950, %v949
      %v979 = vpack.c.bf16 %v952, %v951
      %v980 = vpack.c.bf16 %v954, %v953
      %v981 = vpack.c.bf16 %v956, %v955
      %v982 = vpack.c.bf16 %v958, %v957
      %v983 = vpack.c.bf16 %v960, %v959
      %v984 = vpack.c.bf16 %v962, %v961
      %v985 = vpack.c.bf16 %v964, %v963
      %v986 = vpack.c.bf16 %v966, %v965
      %v987 = vpack.c.bf16 %v968, %v967
      %v988 = vpack.c.bf16 %v970, %v969
      %v989 = vpack.c.bf16 %v972, %v971
      %v990 = vpack.c.bf16 %v974, %v973
      %v1007 = vunpack.c.l.b16 %v975
      %v1008 = vunpack.c.h.b16 %v975
      %v1009 = vunpack.c.l.b16 %v976
      %v1010 = vunpack.c.h.b16 %v976
      %v1011 = vunpack.c.l.b16 %v977
      %v1012 = vunpack.c.h.b16 %v977
      %v1013 = vunpack.c.l.b16 %v978
      %v1014 = vunpack.c.h.b16 %v978
      %v1015 = vunpack.c.l.b16 %v979
      %v1016 = vunpack.c.h.b16 %v979
      %v1017 = vunpack.c.l.b16 %v980
      %v1018 = vunpack.c.h.b16 %v980
      %v1019 = vunpack.c.l.b16 %v981
      %v1020 = vunpack.c.h.b16 %v981
      %v1021 = vunpack.c.l.b16 %v982
      %v1022 = vunpack.c.h.b16 %v982
      %v1023 = vunpack.c.l.b16 %v983
      %v1024 = vunpack.c.h.b16 %v983
      %v1025 = vunpack.c.l.b16 %v984
      %v1026 = vunpack.c.h.b16 %v984
      %v1027 = vunpack.c.l.b16 %v985
      %v1028 = vunpack.c.h.b16 %v985
      %v1029 = vunpack.c.l.b16 %v986
      %v1030 = vunpack.c.h.b16 %v986
      %v1031 = vunpack.c.l.b16 %v987
      %v1032 = vunpack.c.h.b16 %v987
      %v1033 = vunpack.c.l.b16 %v988
      %v1034 = vunpack.c.h.b16 %v988
      %v1035 = vunpack.c.l.b16 %v989
      %v1036 = vunpack.c.h.b16 %v989
      %v1037 = vunpack.c.l.b16 %v990
      %v1038 = vunpack.c.h.b16 %v990
      %v1039 = vpack.c.b16 %v1007, %v1007
      %v1040 = vpack.c.b16 %v1008, %v1008
      %v1041 = vpack.c.b16 %v1009, %v1009
      %v1042 = vpack.c.b16 %v1010, %v1010
      %v1043 = vpack.c.b16 %v1011, %v1011
      %v1044 = vpack.c.b16 %v1012, %v1012
      %v1045 = vpack.c.b16 %v1013, %v1013
      %v1046 = vpack.c.b16 %v1014, %v1014
      %v1047 = vpack.c.b16 %v1015, %v1015
      %v1048 = vpack.c.b16 %v1016, %v1016
      %v1049 = vpack.c.b16 %v1017, %v1017
      %v1050 = vpack.c.b16 %v1018, %v1018
      %v1051 = vpack.c.b16 %v1019, %v1019
      %v1052 = vpack.c.b16 %v1020, %v1020
      %v1053 = vpack.c.b16 %v1021, %v1021
      %v1054 = vpack.c.b16 %v1022, %v1022
      %v1055 = vpack.c.b16 %v1023, %v1023
      %v1056 = vpack.c.b16 %v1024, %v1024
      %v1057 = vpack.c.b16 %v1025, %v1025
      %v1058 = vpack.c.b16 %v1026, %v1026
      %v1059 = vpack.c.b16 %v1027, %v1027
      %v1060 = vpack.c.b16 %v1028, %v1028
      %v1061 = vpack.c.b16 %v1029, %v1029
      %v1062 = vpack.c.b16 %v1030, %v1030
      %v1063 = vpack.c.b16 %v1031, %v1031
      %v1064 = vpack.c.b16 %v1032, %v1032
      %v1065 = vpack.c.b16 %v1033, %v1033
      %v1066 = vpack.c.b16 %v1034, %v1034
      %v1067 = vpack.c.b16 %v1035, %v1035
      %v1068 = vpack.c.b16 %v1036, %v1036
      %v1069 = vpack.c.b16 %v1037, %v1037
      %v1070 = vpack.c.b16 %v1038, %v1038
      %vm1103 = vcmask 257024
      %1104 = vst.msk [vmem:[%s170] sm:$0xf] %vm1103, %v1039
      %1105 = vst.msk [vmem:[%s170 + $0x4] sm:$0xf] %vm1103, %v1040
      %1106 = vst.msk [vmem:[%s170 + $0x8] sm:$0xf] %vm1103, %v1041
      %1107 = vst.msk [vmem:[%s170 + $0xc] sm:$0xf] %vm1103, %v1042
      %1108 = vst.msk [vmem:[%s170 + $0x10] sm:$0xf] %vm1103, %v1043
      %1109 = vst.msk [vmem:[%s170 + $0x14] sm:$0xf] %vm1103, %v1044
      %1110 = vst.msk [vmem:[%s170 + $0x18] sm:$0xf] %vm1103, %v1045
      %1111 = vst.msk [vmem:[%s170 + $0x1c] sm:$0xf] %vm1103, %v1046
      %1112 = vst.msk [vmem:[%s170 + $0x20] sm:$0xf] %vm1103, %v1047
      %1113 = vst.msk [vmem:[%s170 + $0x24] sm:$0xf] %vm1103, %v1048
      %1114 = vst.msk [vmem:[%s170 + $0x28] sm:$0xf] %vm1103, %v1049
      %1115 = vst.msk [vmem:[%s170 + $0x2c] sm:$0xf] %vm1103, %v1050
      %1116 = vst.msk [vmem:[%s170 + $0x30] sm:$0xf] %vm1103, %v1051
      %1117 = vst.msk [vmem:[%s170 + $0x34] sm:$0xf] %vm1103, %v1052
      %1118 = vst.msk [vmem:[%s170 + $0x38] sm:$0xf] %vm1103, %v1053
      %1119 = vst.msk [vmem:[%s170 + $0x3c] sm:$0xf] %vm1103, %v1054
      %1120 = vst.msk [vmem:[%s170 + $0x40] sm:$0xf] %vm1103, %v1055
      %1121 = vst.msk [vmem:[%s170 + $0x44] sm:$0xf] %vm1103, %v1056
      %1122 = vst.msk [vmem:[%s170 + $0x48] sm:$0xf] %vm1103, %v1057
      %1123 = vst.msk [vmem:[%s170 + $0x4c] sm:$0xf] %vm1103, %v1058
      %1124 = vst.msk [vmem:[%s170 + $0x50] sm:$0xf] %vm1103, %v1059
      %1125 = vst.msk [vmem:[%s170 + $0x54] sm:$0xf] %vm1103, %v1060
      %1126 = vst.msk [vmem:[%s170 + $0x58] sm:$0xf] %vm1103, %v1061
      %1127 = vst.msk [vmem:[%s170 + $0x5c] sm:$0xf] %vm1103, %v1062
      %1128 = vst.msk [vmem:[%s170 + $0x60] sm:$0xf] %vm1103, %v1063
      %1129 = vst.msk [vmem:[%s170 + $0x64] sm:$0xf] %vm1103, %v1064
      %1130 = vst.msk [vmem:[%s170 + $0x68] sm:$0xf] %vm1103, %v1065
      %1131 = vst.msk [vmem:[%s170 + $0x6c] sm:$0xf] %vm1103, %v1066
      %1132 = vst.msk [vmem:[%s170 + $0x70] sm:$0xf] %vm1103, %v1067
      %1133 = vst.msk [vmem:[%s170 + $0x74] sm:$0xf] %vm1103, %v1068
      %1134 = vst.msk [vmem:[%s170 + $0x78] sm:$0xf] %vm1103, %v1069
      %1135 = vst.msk [vmem:[%s170 + $0x7c] sm:$0xf] %vm1103, %v1070
      %p1136 = scmp.lt.s32.totalorder %s14, 1
      %s1137 = scalar_select %p1136, %s14, 1
      %s1138 = smul.addr %s1137, 32
      %s1139 = smul.addr %s1138, 4
      %s1140 = scalar_lea.vmem %s3, %s1139
      // Predicated region
      $region33: #{_lambda_.14} parent=31 // pred_check
        %p1141 = pneg %p100
      $region34: #{_lambda_.14} parent=31 // pred_check_branch
        %1143 = sbr.rel (%p1141) target = $region36
      $region35: #{_lambda_.14} parent=31 // pred_region
        _
      $region36: #{_lambda_.14} parent=31 // pred_fallthru
        _
    $region32: #{_lambda_.14} parent=5 // pred_fallthru
      _
    %p1144 = scmp.le.s32.totalorder 2, %s9
    // Predicated region
    $region37: #{_lambda_.14} parent=5 // pred_check
      %p1145 = pneg %p1144
    $region38: #{_lambda_.14} parent=5 // pred_check_branch
      %1147 = sbr.rel (%p1145) target = $region40
    $region39: #{_lambda_.14} parent=5 // pred_region
      %s1148 = ssub.s32 %s9, 2
      // Predicated region
      $region41: #{_lambda_.14} parent=39 // pred_check
        %p1149 = pneg %p106
      $region42: #{_lambda_.14} parent=39 // pred_check_branch
        %1151 = sbr.rel (%p1149) target = $region44
      $region43: #{_lambda_.14} parent=39 // pred_region
        %p1152 = scmp.lt.s32.totalorder %s15, 1
        %s1153 = scalar_select %p1152, %s15, 1
        %s1154 = smul.addr %s1153, 32
        %s1155 = smul.addr %s1154, 4
        %s1156 = scalar_lea.vmem %s3, %s1155
      $region44: #{_lambda_.14} parent=39 // pred_fallthru
        _
    $region40: #{_lambda_.14} parent=5 // pred_fallthru
      _
  $region6: #{_lambda_.14} parent=0 // loop_footer
    %s13 = sadd.s32 1, %s9
  $region7: #{_lambda_.14} parent=0 // loop_footer_branch
    %8 = sbr.rel target = $region3
  $region8: #{_lambda_.14} parent=0 // loop_exit
    _

// kernel: _lambda_.15
$region0: #{_lambda_.15}
  #allocation0 [shape = 'u32[]', space=smem, size = 0x4, offset = 0x4, fixed_abs, tag = 'smem constant byte address 0x4 - core index']
  #allocation1 [shape = 'u32[144,128]{1,0:T(1,128)}', space=vmem, size = 0x12000, scoped, tag = 'internal scratch']
  %s0 = inlined_call_operand.vmem [shape: bf16[2,18,16,96], index: 0, kind: input, shape index: {}]
  %s1 = inlined_call_operand.vmem [shape: bf16[2,18,16,96], index: 1, kind: input, shape index: {}]
  %s2 = inlined_call_operand.vmem [shape: bf16[3,96,32], index: 2, kind: input, shape index: {}]
  %s3 = inlined_call_operand.vmem [shape: bf16[3,96,32], index: 3, kind: input, shape index: {}]
  %s4 = inlined_call_operand.vmem [shape: f32[1,32], index: 4, kind: input, shape index: {}]
  %s5 = inlined_call_operand.vmem [shape: bf16[32,3], index: 5, kind: input, shape index: {}]
  %s6 = inlined_call_operand.vmem [shape: f32[1,3], index: 6, kind: input, shape index: {}]
  %s7 = inlined_call_operand.vmem [shape: f32[2,16,16,3], index: 7, kind: output, shape index: {}]
  %s8 = sld [smem:[#allocation0]]
  $region61: #{_lambda_.15} parent=0
    _
  %s10 = ssub.s32 1, %s8
  %s11 = scalar_select 0, %s10, %s8
  loop: start=0, step=1, limit=4
  $region2: #{_lambda_.15} parent=0 // loop_pre_header
    _
  $region3: #{_lambda_.15} parent=0 // loop_header
    %s13 = sphi 0, %s17
    %p14 = scmp.ge.s32.totalorder %s13, 4
    %s23 = sphi 0, %s25
    %s26 = sphi 0, %s23
    %s27 = sphi 0, %s26
    %s43 = sphi 0, %s27
    %s49 = sphi 0, %s51
    %s52 = sphi 0, %s49
    %s53 = sphi 0, %s52
    %s69 = sphi 0, %s53
    %s73 = sphi 0, %s73
    %s75 = sphi 0, %s73
    %s76 = sphi 0, %s75
    %s90 = sphi 0, %s76
    %s94 = sphi 0, %s94
    %s96 = sphi 0, %s94
    %s97 = sphi 0, %s96
    %s111 = sphi 0, %s97
    %s115 = sphi 0, %s115
    %s117 = sphi 0, %s115
    %s118 = sphi 0, %s117
    %s132 = sphi 0, %s118
    %s136 = sphi 0, %s136
    %s138 = sphi 0, %s136
    %s139 = sphi 0, %s138
    %s153 = sphi 0, %s139
    %s157 = sphi 0, %s157
    %s159 = sphi 0, %s157
    %s160 = sphi 0, %s159
    %s174 = sphi 0, %s160
    %s180 = sphi 0, %s182
    %s183 = sphi 0, %s180
    %s184 = sphi 0, %s183
    %s200 = sphi 0, %s184
  $region4: #{_lambda_.15} parent=0 // loop_header_branch
    %16 = sbr.rel (%p14) target = $region8
  $region5: #{_lambda_.15} parent=0 // loop_body
    %s18 = ssub.s32 %s13, 1
    %s19 = ssub.s32 %s13, 2
    %s20 = sadd.s32 %s13, 1
    %s21 = ssub.s32 %s13, %s20
    %p22 = scmp.eq.s32.totalorder %s21, 0
    %s24 = sadd.s32 %s23, 1
    %s25 = scalar_select %p22, %s23, %s24
    %p28 = pneg %p22
    %p29 = scmp.eq.s32.totalorder %s13, 1
    %p30 = por %p28, %p29
    %p31 = scmp.ne.s32.totalorder %s23, %s26
    %p32 = scmp.eq.s32.totalorder %s13, 0
    %p33 = por %p31, %p32
    %p34 = scmp.ne.s32.totalorder %s23, %s26
    %p35 = scmp.eq.s32.totalorder %s18, 1
    %p36 = por %p34, %p35
    %p37 = scmp.ne.s32.totalorder %s26, %s27
    %p38 = scmp.eq.s32.totalorder %s18, 0
    %p39 = por %p37, %p38
    %p40 = scmp.ne.s32.totalorder %s26, %s27
    %p41 = scmp.eq.s32.totalorder %s19, 1
    %p42 = por %p40, %p41
    %p44 = scmp.ne.s32.totalorder %s27, %s43
    %p45 = scmp.eq.s32.totalorder %s19, 0
    %p46 = por %p44, %p45
    %s47 = ssub.s32 %s13, %s20
    %p48 = scmp.eq.s32.totalorder %s47, 0
    %s50 = sadd.s32 %s49, 1
    %s51 = scalar_select %p48, %s49, %s50
    %p54 = pneg %p48
    %p55 = scmp.eq.s32.totalorder %s13, 1
    %p56 = por %p54, %p55
    %p57 = scmp.ne.s32.totalorder %s49, %s52
    %p58 = scmp.eq.s32.totalorder %s13, 0
    %p59 = por %p57, %p58
    %p60 = scmp.ne.s32.totalorder %s49, %s52
    %p61 = scmp.eq.s32.totalorder %s18, 1
    %p62 = por %p60, %p61
    %p63 = scmp.ne.s32.totalorder %s52, %s53
    %p64 = scmp.eq.s32.totalorder %s18, 0
    %p65 = por %p63, %p64
    %p66 = scmp.ne.s32.totalorder %s52, %s53
    %p67 = scmp.eq.s32.totalorder %s19, 1
    %p68 = por %p66, %p67
    %p70 = scmp.ne.s32.totalorder %s53, %s69
    %p71 = scmp.eq.s32.totalorder %s19, 0
    %p72 = por %p70, %p71
    %s74 = sadd.s32 %s73, 1
    %p77 = scmp.eq.s32.totalorder %s13, 1
    %p78 = scmp.ne.s32.totalorder %s73, %s75
    %p79 = scmp.eq.s32.totalorder %s13, 0
    %p80 = por %p78, %p79
    %p81 = scmp.ne.s32.totalorder %s73, %s75
    %p82 = scmp.eq.s32.totalorder %s18, 1
    %p83 = por %p81, %p82
    %p84 = scmp.ne.s32.totalorder %s75, %s76
    %p85 = scmp.eq.s32.totalorder %s18, 0
    %p86 = por %p84, %p85
    %p87 = scmp.ne.s32.totalorder %s75, %s76
    %p88 = scmp.eq.s32.totalorder %s19, 1
    %p89 = por %p87, %p88
    %p91 = scmp.ne.s32.totalorder %s76, %s90
    %p92 = scmp.eq.s32.totalorder %s19, 0
    %p93 = por %p91, %p92
    %s95 = sadd.s32 %s94, 1
    %p98 = scmp.eq.s32.totalorder %s13, 1
    %p99 = scmp.ne.s32.totalorder %s94, %s96
    %p100 = scmp.eq.s32.totalorder %s13, 0
    %p101 = por %p99, %p100
    %p102 = scmp.ne.s32.totalorder %s94, %s96
    %p103 = scmp.eq.s32.totalorder %s18, 1
    %p104 = por %p102, %p103
    %p105 = scmp.ne.s32.totalorder %s96, %s97
    %p106 = scmp.eq.s32.totalorder %s18, 0
    %p107 = por %p105, %p106
    %p108 = scmp.ne.s32.totalorder %s96, %s97
    %p109 = scmp.eq.s32.totalorder %s19, 1
    %p110 = por %p108, %p109
    %p112 = scmp.ne.s32.totalorder %s97, %s111
    %p113 = scmp.eq.s32.totalorder %s19, 0
    %p114 = por %p112, %p113
    %s116 = sadd.s32 %s115, 1
    %p119 = scmp.eq.s32.totalorder %s13, 1
    %p120 = scmp.ne.s32.totalorder %s115, %s117
    %p121 = scmp.eq.s32.totalorder %s13, 0
    %p122 = por %p120, %p121
    %p123 = scmp.ne.s32.totalorder %s115, %s117
    %p124 = scmp.eq.s32.totalorder %s18, 1
    %p125 = por %p123, %p124
    %p126 = scmp.ne.s32.totalorder %s117, %s118
    %p127 = scmp.eq.s32.totalorder %s18, 0
    %p128 = por %p126, %p127
    %p129 = scmp.ne.s32.totalorder %s117, %s118
    %p130 = scmp.eq.s32.totalorder %s19, 1
    %p131 = por %p129, %p130
    %p133 = scmp.ne.s32.totalorder %s118, %s132
    %p134 = scmp.eq.s32.totalorder %s19, 0
    %p135 = por %p133, %p134
    %s137 = sadd.s32 %s136, 1
    %p140 = scmp.eq.s32.totalorder %s13, 1
    %p141 = scmp.ne.s32.totalorder %s136, %s138
    %p142 = scmp.eq.s32.totalorder %s13, 0
    %p143 = por %p141, %p142
    %p144 = scmp.ne.s32.totalorder %s136, %s138
    %p145 = scmp.eq.s32.totalorder %s18, 1
    %p146 = por %p144, %p145
    %p147 = scmp.ne.s32.totalorder %s138, %s139
    %p148 = scmp.eq.s32.totalorder %s18, 0
    %p149 = por %p147, %p148
    %p150 = scmp.ne.s32.totalorder %s138, %s139
    %p151 = scmp.eq.s32.totalorder %s19, 1
    %p152 = por %p150, %p151
    %p154 = scmp.ne.s32.totalorder %s139, %s153
    %p155 = scmp.eq.s32.totalorder %s19, 0
    %p156 = por %p154, %p155
    %s158 = sadd.s32 %s157, 1
    %p161 = scmp.eq.s32.totalorder %s13, 1
    %p162 = scmp.ne.s32.totalorder %s157, %s159
    %p163 = scmp.eq.s32.totalorder %s13, 0
    %p164 = por %p162, %p163
    %p165 = scmp.ne.s32.totalorder %s157, %s159
    %p166 = scmp.eq.s32.totalorder %s18, 1
    %p167 = por %p165, %p166
    %p168 = scmp.ne.s32.totalorder %s159, %s160
    %p169 = scmp.eq.s32.totalorder %s18, 0
    %p170 = por %p168, %p169
    %p171 = scmp.ne.s32.totalorder %s159, %s160
    %p172 = scmp.eq.s32.totalorder %s19, 1
    %p173 = por %p171, %p172
    %p175 = scmp.ne.s32.totalorder %s160, %s174
    %p176 = scmp.eq.s32.totalorder %s19, 0
    %p177 = por %p175, %p176
    %s178 = ssub.s32 %s13, %s20
    %p179 = scmp.eq.s32.totalorder %s178, 0
    %s181 = sadd.s32 %s180, 1
    %s182 = scalar_select %p179, %s180, %s181
    %p185 = pneg %p179
    %p186 = scmp.eq.s32.totalorder %s13, 1
    %p187 = por %p185, %p186
    %p188 = scmp.ne.s32.totalorder %s180, %s183
    %p189 = scmp.eq.s32.totalorder %s13, 0
    %p190 = por %p188, %p189
    %p191 = scmp.ne.s32.totalorder %s180, %s183
    %p192 = scmp.eq.s32.totalorder %s18, 1
    %p193 = por %p191, %p192
    %p194 = scmp.ne.s32.totalorder %s183, %s184
    %p195 = scmp.eq.s32.totalorder %s18, 0
    %p196 = por %p194, %p195
    %p197 = scmp.ne.s32.totalorder %s183, %s184
    %p198 = scmp.eq.s32.totalorder %s19, 1
    %p199 = por %p197, %p198
    %p201 = scmp.ne.s32.totalorder %s184, %s200
    %p202 = scmp.eq.s32.totalorder %s19, 0
    %p203 = por %p201, %p202
    %p204 = scmp.le.s32.totalorder 1, %s13
    %p205 = scmp.lt.s32.totalorder %s13, 3
    %p206 = pnand %p204, %p205
    %p207 = pneg %p206
    // Predicated region
    $region9: #{_lambda_.15} parent=5 // pred_check
      _
    $region10: #{_lambda_.15} parent=5 // pred_check_branch
      %209 = sbr.rel (%p206) target = $region12
    $region11: #{_lambda_.15} parent=5 // pred_region
      %s210 = ssub.s32 %s13, 1
      // Predicated region
      $region13: #{_lambda_.15} parent=11 // pred_check
        %p211 = pneg %p86
      $region14: #{_lambda_.15} parent=11 // pred_check_branch
        %213 = sbr.rel (%p211) target = $region16
      $region15: #{_lambda_.15} parent=11 // pred_region
        _
      $region16: #{_lambda_.15} parent=11 // pred_fallthru
        _
      // Predicated region
      $region17: #{_lambda_.15} parent=11 // pred_check
        %p214 = pneg %p107
      $region18: #{_lambda_.15} parent=11 // pred_check_branch
        %216 = sbr.rel (%p214) target = $region20
      $region19: #{_lambda_.15} parent=11 // pred_region
        _
      $region20: #{_lambda_.15} parent=11 // pred_fallthru
        _
      // Predicated region
      $region21: #{_lambda_.15} parent=11 // pred_check
        %p217 = pneg %p128
      $region22: #{_lambda_.15} parent=11 // pred_check_branch
        %219 = sbr.rel (%p217) target = $region24
      $region23: #{_lambda_.15} parent=11 // pred_region
        _
      $region24: #{_lambda_.15} parent=11 // pred_fallthru
        _
      // Predicated region
      $region25: #{_lambda_.15} parent=11 // pred_check
        %p220 = pneg %p149
      $region26: #{_lambda_.15} parent=11 // pred_check_branch
        %222 = sbr.rel (%p220) target = $region28
      $region27: #{_lambda_.15} parent=11 // pred_region
        _
      $region28: #{_lambda_.15} parent=11 // pred_fallthru
        _
      // Predicated region
      $region29: #{_lambda_.15} parent=11 // pred_check
        %p223 = pneg %p170
      $region30: #{_lambda_.15} parent=11 // pred_check_branch
        %225 = sbr.rel (%p223) target = $region32
      $region31: #{_lambda_.15} parent=11 // pred_region
        _
      $region32: #{_lambda_.15} parent=11 // pred_fallthru
        _
    $region12: #{_lambda_.15} parent=5 // pred_fallthru
      _
    %p226 = scmp.lt.s32.totalorder %s13, 2
    // Predicated region
    $region33: #{_lambda_.15} parent=5 // pred_check
      %p227 = pneg %p226
    $region34: #{_lambda_.15} parent=5 // pred_check_branch
      %229 = sbr.rel (%p227) target = $region36
    $region35: #{_lambda_.15} parent=5 // pred_region
      // Predicated region
      $region37: #{_lambda_.15} parent=35 // pred_check
        %p230 = pneg %p33
      $region38: #{_lambda_.15} parent=35 // pred_check_branch
        %232 = sbr.rel (%p230) target = $region40
      $region39: #{_lambda_.15} parent=35 // pred_region
        %p233 = scmp.lt.s32.totalorder %s13, 1
        %s234 = scalar_select %p233, %s13, 1
        %s235 = smul.addr %s234, 36
        %s236 = smul.addr %s235, 4
        %s237 = scalar_lea.vmem %s0, %s236
      $region40: #{_lambda_.15} parent=35 // pred_fallthru
        _
      // Predicated region
      $region41: #{_lambda_.15} parent=35 // pred_check
        %p238 = pneg %p59
      $region42: #{_lambda_.15} parent=35 // pred_check_branch
        %240 = sbr.rel (%p238) target = $region44
      $region43: #{_lambda_.15} parent=35 // pred_region
        %p241 = scmp.lt.s32.totalorder %s13, 1
        %s242 = scalar_select %p241, %s13, 1
        %s243 = smul.addr %s242, 36
        %s244 = smul.addr %s243, 4
        %s245 = scalar_lea.vmem %s1, %s244
      $region44: #{_lambda_.15} parent=35 // pred_fallthru
        _
    $region36: #{_lambda_.15} parent=5 // pred_fallthru
      _
    %p246 = scmp.le.s32.totalorder 1, %s13
    %p247 = scmp.lt.s32.totalorder %s13, 3
    %p248 = pnand %p246, %p247
    %p249 = pneg %p248
    // Predicated region
    $region45: #{_lambda_.15} parent=5 // pred_check
      _
    $region46: #{_lambda_.15} parent=5 // pred_check_branch
      %251 = sbr.rel (%p248) target = $region48
    $region47: #{_lambda_.15} parent=5 // pred_region
      %s252 = ssub.s32 %s13, 1
      %p253 = scmp.lt.s32.totalorder %s18, 1
      %s254 = scalar_select %p253, %s18, 1
      %s255 = smul.addr %s254, 36
      %s256 = smul.addr %s255, 4
      %s257 = scalar_lea.vmem %s0, %s256
      %p258 = pneg %p39
      %p259 = pneg %p36
      %p260 = scmp.lt.s32.totalorder %s18, 1
      %s261 = scalar_select %p260, %s18, 1
      %s262 = smul.addr %s261, 36
      %s263 = smul.addr %s262, 4
      %s264 = scalar_lea.vmem %s1, %s263
      %p265 = pneg %p65
      %p266 = pneg %p62
      %p267 = pneg %p86
      %p268 = pneg %p83
      %p269 = pneg %p107
      %p270 = pneg %p104
      %p271 = pneg %p128
      %p272 = pneg %p125
      %p273 = pneg %p149
      %p274 = pneg %p146
      %p275 = pneg %p170
      %p276 = pneg %p167
      %p277 = pneg %p196
      %p278 = pneg %p193
      %p279 = scmp.lt.s32.totalorder %s18, 1
      %s280 = scalar_select %p279, %s18, 1
      %s281 = smul.addr %s280, 32
      %s282 = smul.addr %s281, 8
      %s283 = scalar_lea.vmem %s7, %s282
      %p284 = scmp.lt.s32.totalorder %s18, 1
      %s285 = scalar_select %p284, %s18, 1
      %s286 = smul.addr %s285, 36
      %s287 = smul.addr %s286, 4
      %s288 = scalar_lea.vmem %s0, %s287
      %p289 = scmp.lt.s32.totalorder %s18, 1
      %s290 = scalar_select %p289, %s18, 1
      %s291 = smul.addr %s290, 36
      %s292 = smul.addr %s291, 4
      %s293 = scalar_lea.vmem %s1, %s292
      %p294 = scmp.lt.s32.totalorder %s18, 1
      %s295 = scalar_select %p294, %s18, 1
      %s296 = smul.addr %s295, 32
      %s297 = smul.addr %s296, 8
      %s298 = scalar_lea.vmem %s7, %s297
      %v300 = vld [vmem:[%s288] sm:$0xf]
      %v301 = vld [vmem:[%s288 + $0x4] sm:$0xf]
      %v302 = vld [vmem:[%s288 + $0x8] sm:$0xf]
      %v303 = vld [vmem:[%s288 + $0xc] sm:$0xf]
      %v304 = vld [vmem:[%s288 + $0x10] sm:$0xf]
      %v305 = vld [vmem:[%s288 + $0x14] sm:$0xf]
      %v306 = vld [vmem:[%s288 + $0x18] sm:$0xf]
      %v307 = vld [vmem:[%s288 + $0x1c] sm:$0xf]
      %v308 = vld [vmem:[%s288 + $0x20] sm:$0xf]
      %v309 = vld [vmem:[%s288 + $0x24] sm:$0xf]
      %v310 = vld [vmem:[%s288 + $0x28] sm:$0xf]
      %v311 = vld [vmem:[%s288 + $0x2c] sm:$0xf]
      %v312 = vld [vmem:[%s288 + $0x30] sm:$0xf]
      %v313 = vld [vmem:[%s288 + $0x34] sm:$0xf]
      %v314 = vld [vmem:[%s288 + $0x38] sm:$0xf]
      %v315 = vld [vmem:[%s288 + $0x3c] sm:$0xf]
      %v316 = vld [vmem:[%s288 + $0x40] sm:$0xf]
      %v317 = vld [vmem:[%s288 + $0x44] sm:$0xf]
      %v318 = vld [vmem:[%s288 + $0x48] sm:$0xf]
      %v319 = vld [vmem:[%s288 + $0x4c] sm:$0xf]
      %v320 = vld [vmem:[%s288 + $0x50] sm:$0xf]
      %v321 = vld [vmem:[%s288 + $0x54] sm:$0xf]
      %v322 = vld [vmem:[%s288 + $0x58] sm:$0xf]
      %v323 = vld [vmem:[%s288 + $0x5c] sm:$0xf]
      %v324 = vld [vmem:[%s288 + $0x60] sm:$0xf]
      %v325 = vld [vmem:[%s288 + $0x64] sm:$0xf]
      %v326 = vld [vmem:[%s288 + $0x68] sm:$0xf]
      %v327 = vld [vmem:[%s288 + $0x6c] sm:$0xf]
      %v328 = vld [vmem:[%s288 + $0x70] sm:$0xf]
      %v329 = vld [vmem:[%s288 + $0x74] sm:$0xf]
      %v330 = vld [vmem:[%s288 + $0x78] sm:$0xf]
      %v331 = vld [vmem:[%s288 + $0x7c] sm:$0xf]
      %v332 = vld [vmem:[%s288 + $0x80] sm:$0xf]
      %v333 = vld [vmem:[%s288 + $0x84] sm:$0xf]
      %v334 = vld [vmem:[%s288 + $0x88] sm:$0xf]
      %v335 = vld [vmem:[%s288 + $0x8c] sm:$0xf]
      %v336 = vld [vmem:[%s2] sm:$0xf]
      %v337 = vld [vmem:[%s2 + $0x4] sm:$0xf]
      %v338 = vld [vmem:[%s2 + $0x8] sm:$0xf]
      %v339 = vld [vmem:[%s2 + $0xc] sm:$0xf]
      %v340 = vld [vmem:[%s2 + $0x10] sm:$0xf]
      %v341 = vld [vmem:[%s2 + $0x14] sm:$0xf]
      %v342 = vld [vmem:[%s2 + $0x18] sm:$0xf]
      %v343 = vld [vmem:[%s2 + $0x1c] sm:$0xf]
      %v344 = vld [vmem:[%s2 + $0x20] sm:$0xf]
      %v345 = vld [vmem:[%s2 + $0x24] sm:$0xf]
      %v346 = vld [vmem:[%s2 + $0x28] sm:$0xf]
      %v347 = vld [vmem:[%s2 + $0x2c] sm:$0xf]
      %s348 = scalar_lea.vmem %s2, 48
      %v349 = vld [vmem:[%s348] sm:$0xf]
      %v350 = vld [vmem:[%s348 + $0x4] sm:$0xf]
      %v351 = vld [vmem:[%s348 + $0x8] sm:$0xf]
      %v352 = vld [vmem:[%s348 + $0xc] sm:$0xf]
      %v353 = vld [vmem:[%s348 + $0x10] sm:$0xf]
      %v354 = vld [vmem:[%s348 + $0x14] sm:$0xf]
      %v355 = vld [vmem:[%s348 + $0x18] sm:$0xf]
      %v356 = vld [vmem:[%s348 + $0x1c] sm:$0xf]
      %v357 = vld [vmem:[%s348 + $0x20] sm:$0xf]
      %v358 = vld [vmem:[%s348 + $0x24] sm:$0xf]
      %v359 = vld [vmem:[%s348 + $0x28] sm:$0xf]
      %v360 = vld [vmem:[%s348 + $0x2c] sm:$0xf]
      %v393 = vunpack.c.l.b16 %v302
      %v394 = vunpack.c.l.b16 %v303
      %v395 = vunpack.c.l.b16 %v304
      %v396 = vunpack.c.l.b16 %v305
      %v397 = vunpack.c.l.b16 %v306
      %v398 = vunpack.c.l.b16 %v307
      %v399 = vunpack.c.l.b16 %v308
      %v400 = vunpack.c.l.b16 %v309
      %v401 = vunpack.c.l.b16 %v310
      %v402 = vunpack.c.l.b16 %v311
      %v403 = vunpack.c.l.b16 %v312
      %v404 = vunpack.c.l.b16 %v313
      %v405 = vunpack.c.l.b16 %v314
      %v406 = vunpack.c.l.b16 %v315
      %v407 = vunpack.c.l.b16 %v316
      %v408 = vunpack.c.l.b16 %v317
      %v409 = vunpack.c.l.b16 %v318
      %v410 = vunpack.c.l.b16 %v319
      %v411 = vunpack.c.l.b16 %v320
      %v412 = vunpack.c.l.b16 %v321
      %v413 = vunpack.c.l.b16 %v322
      %v414 = vunpack.c.l.b16 %v323
      %v415 = vunpack.c.l.b16 %v324
      %v416 = vunpack.c.l.b16 %v325
      %v417 = vunpack.c.l.b16 %v326
      %v418 = vunpack.c.l.b16 %v327
      %v419 = vunpack.c.l.b16 %v328
      %v420 = vunpack.c.l.b16 %v329
      %v421 = vunpack.c.l.b16 %v330
      %v422 = vunpack.c.l.b16 %v331
      %v423 = vunpack.c.l.b16 %v332
      %v424 = vunpack.c.l.b16 %v333
      %v425 = vpack.c.b16 %v394, %v393
      %v426 = vpack.c.b16 %v396, %v395
      %v427 = vpack.c.b16 %v398, %v397
      %v428 = vpack.c.b16 %v400, %v399
      %v429 = vpack.c.b16 %v402, %v401
      %v430 = vpack.c.b16 %v404, %v403
      %v431 = vpack.c.b16 %v406, %v405
      %v432 = vpack.c.b16 %v408, %v407
      %v433 = vpack.c.b16 %v410, %v409
      %v434 = vpack.c.b16 %v412, %v411
      %v435 = vpack.c.b16 %v414, %v413
      %v436 = vpack.c.b16 %v416, %v415
      %v437 = vpack.c.b16 %v418, %v417
      %v438 = vpack.c.b16 %v420, %v419
      %v439 = vpack.c.b16 %v422, %v421
      %v440 = vpack.c.b16 %v424, %v423
      %v453 = vunpack.c.l.b16 %v349
      %v454 = vunpack.c.l.b16 %v350
      %v455 = vunpack.c.l.b16 %v351
      %v456 = vunpack.c.l.b16 %v352
      %v457 = vunpack.c.l.b16 %v353
      %v458 = vunpack.c.l.b16 %v354
      %v459 = vunpack.c.l.b16 %v355
      %v460 = vunpack.c.l.b16 %v356
      %v461 = vunpack.c.l.b16 %v357
      %v462 = vunpack.c.l.b16 %v358
      %v463 = vunpack.c.l.b16 %v359
      %v464 = vunpack.c.l.b16 %v360
      %v465 = vpack.c.b16 %v454, %v453
      %v466 = vpack.c.b16 %v456, %v455
      %v467 = vpack.c.b16 %v458, %v457
      %v468 = vpack.c.b16 %v460, %v459
      %v469 = vpack.c.b16 %v462, %v461
      %v470 = vpack.c.b16 %v464, %v463
      %vm477 = vcmask 785408
      %v479 = vsel %vm477, %v425, 0
      %v482 = vsel %vm477, %v426, 0
      %v485 = vsel %vm477, %v427, 0
      %v488 = vsel %vm477, %v428, 0
      %v491 = vsel %vm477, %v429, 0
      %v494 = vsel %vm477, %v430, 0
      %v497 = vsel %vm477, %v431, 0
      %v500 = vsel %vm477, %v432, 0
      %v503 = vsel %vm477, %v433, 0
      %v506 = vsel %vm477, %v434, 0
      %v509 = vsel %vm477, %v435, 0
      %v512 = vsel %vm477, %v436, 0
      %v515 = vsel %vm477, %v437, 0
      %v518 = vsel %vm477, %v438, 0
      %v521 = vsel %vm477, %v439, 0
      %v524 = vsel %vm477, %v440, 0
      %526 = vmatprep.subr.bf16.mxu0 0
      %527 = vmatpush1.bf16.msra.mxu0 0
      %528 = vmatprep.subr.bf16.mxu0 0
      %529 = vmatpush1.bf16.msra.mxu0 0
      %530 = vmatprep.subr.bf16.mxu0 0
      %531 = vmatpush1.bf16.msra.mxu0 %v470
      %532 = vmatprep.subr.bf16.mxu0 0
      %533 = vmatpush1.bf16.msra.mxu0 %v469
      %534 = vmatprep.subr.bf16.mxu0 0
      %535 = vmatpush1.bf16.msra.mxu0 %v468
      %536 = vmatprep.subr.bf16.mxu0 0
      %537 = vmatpush1.bf16.msra.mxu0 %v467
      %538 = vmatprep.subr.bf16.mxu0 0
      %539 = vmatpush1.bf16.msra.mxu0 %v466
      %540 = vmatprep.subr.bf16.mxu0 0
      %541 = vmatpush1.bf16.msra.mxu0 %v465
      %542 = vmatprep.subr.bf16.mxu0 0
      %543 = vmatpush2.bf16.msra.mxu0 0
      %544 = vmatprep.subr.bf16.mxu0 0
      %545 = vmatpush2.bf16.msra.mxu0 0
      %546 = vmatprep.subr.bf16.mxu0 0
      %547 = vmatpush2.bf16.msra.mxu0 0
      %548 = vmatprep.subr.bf16.mxu0 0
      %549 = vmatpush2.bf16.msra.mxu0 0
      %550 = vmatprep.subr.bf16.mxu0 0
      %551 = vmatpush2.bf16.msra.mxu0 0
      %552 = vmatprep.subr.bf16.mxu0 0
      %553 = vmatpush2.bf16.msra.mxu0 0
      %554 = vmatprep.subr.bf16.mxu0 0
      %555 = vmatpush2.bf16.msra.mxu0 0
      %556 = vmatprep.subr.bf16.mxu0 0
      %557 = vmatpush2.bf16.msra.mxu0 0
      %558 = vmatprep.mubr.bf16.mxu0 0
      %559 = vmatmul.mubr.bf16.gmra.mxu0 %v479
      %v560 = vpop.f32.mrf.mxu0
      %v561 = vadd.f32 0.0, %v560
      %v562 = vpop.f32.mrf.mxu0
      %v563 = vpop.f32.mrf.mxu0
      %v564 = vadd.f32 0.0, %v563
      %v565 = vpop.f32.mrf.mxu0
      %566 = vmatprep.mubr.bf16.mxu0 0
      %567 = vmatmul.mubr.bf16.gmra.mxu0 %v482
      %v568 = vpop.f32.mrf.mxu0
      %v569 = vadd.f32 0.0, %v568
      %v570 = vpop.f32.mrf.mxu0
      %v571 = vpop.f32.mrf.mxu0
      %v572 = vadd.f32 0.0, %v571
      %v573 = vpop.f32.mrf.mxu0
      %574 = vmatprep.mubr.bf16.mxu0 0
      %575 = vmatmul.mubr.bf16.gmra.mxu0 %v485
      %v576 = vpop.f32.mrf.mxu0
      %v577 = vadd.f32 0.0, %v576
      %v578 = vpop.f32.mrf.mxu0
      %v579 = vpop.f32.mrf.mxu0
      %v580 = vadd.f32 0.0, %v579
      %v581 = vpop.f32.mrf.mxu0
      %582 = vmatprep.mubr.bf16.mxu0 0
      %583 = vmatmul.mubr.bf16.gmra.mxu0 %v488
      %v584 = vpop.f32.mrf.mxu0
      %v585 = vadd.f32 0.0, %v584
      %v586 = vpop.f32.mrf.mxu0
      %v587 = vpop.f32.mrf.mxu0
      %v588 = vadd.f32 0.0, %v587
      %v589 = vpop.f32.mrf.mxu0
      %590 = vmatprep.mubr.bf16.mxu0 0
      %591 = vmatmul.mubr.bf16.gmra.mxu0 %v491
      %v592 = vpop.f32.mrf.mxu0
      %v593 = vadd.f32 0.0, %v592
      %v594 = vpop.f32.mrf.mxu0
      %v595 = vpop.f32.mrf.mxu0
      %v596 = vadd.f32 0.0, %v595
      %v597 = vpop.f32.mrf.mxu0
      %598 = vmatprep.mubr.bf16.mxu0 0
      %599 = vmatmul.mubr.bf16.gmra.mxu0 %v494
      %v600 = vpop.f32.mrf.mxu0
      %v601 = vadd.f32 0.0, %v600
      %v602 = vpop.f32.mrf.mxu0
      %v603 = vpop.f32.mrf.mxu0
      %v604 = vadd.f32 0.0, %v603
      %v605 = vpop.f32.mrf.mxu0
      %606 = vmatprep.mubr.bf16.mxu0 0
      %607 = vmatmul.mubr.bf16.gmra.mxu0 %v497
      %v608 = vpop.f32.mrf.mxu0
      %v609 = vadd.f32 0.0, %v608
      %v610 = vpop.f32.mrf.mxu0
      %v611 = vpop.f32.mrf.mxu0
      %v612 = vadd.f32 0.0, %v611
      %v613 = vpop.f32.mrf.mxu0
      %614 = vmatprep.mubr.bf16.mxu0 0
      %615 = vmatmul.mubr.bf16.gmra.mxu0 %v500
      %v616 = vpop.f32.mrf.mxu0
      %v617 = vadd.f32 0.0, %v616
      %v618 = vpop.f32.mrf.mxu0
      %v619 = vpop.f32.mrf.mxu0
      %v620 = vadd.f32 0.0, %v619
      %v621 = vpop.f32.mrf.mxu0
      %622 = vmatprep.mubr.bf16.mxu0 0
      %623 = vmatmul.mubr.bf16.gmra.mxu0 %v503
      %v624 = vpop.f32.mrf.mxu0
      %v625 = vadd.f32 0.0, %v624
      %v626 = vpop.f32.mrf.mxu0
      %v627 = vpop.f32.mrf.mxu0
      %v628 = vadd.f32 0.0, %v627
      %v629 = vpop.f32.mrf.mxu0
      %630 = vmatprep.mubr.bf16.mxu0 0
      %631 = vmatmul.mubr.bf16.gmra.mxu0 %v506
      %v632 = vpop.f32.mrf.mxu0
      %v633 = vadd.f32 0.0, %v632
      %v634 = vpop.f32.mrf.mxu0
      %v635 = vpop.f32.mrf.mxu0
      %v636 = vadd.f32 0.0, %v635
      %v637 = vpop.f32.mrf.mxu0
      %638 = vmatprep.mubr.bf16.mxu0 0
      %639 = vmatmul.mubr.bf16.gmra.mxu0 %v509
      %v640 = vpop.f32.mrf.mxu0
      %v641 = vadd.f32 0.0, %v640
      %v642 = vpop.f32.mrf.mxu0
      %v643 = vpop.f32.mrf.mxu0
      %v644 = vadd.f32 0.0, %v643
      %v645 = vpop.f32.mrf.mxu0
      %646 = vmatprep.mubr.bf16.mxu0 0
      %647 = vmatmul.mubr.bf16.gmra.mxu0 %v512
      %v648 = vpop.f32.mrf.mxu0
      %v649 = vadd.f32 0.0, %v648
      %v650 = vpop.f32.mrf.mxu0
      %v651 = vpop.f32.mrf.mxu0
      %v652 = vadd.f32 0.0, %v651
      %v653 = vpop.f32.mrf.mxu0
      %654 = vmatprep.mubr.bf16.mxu0 0
      %655 = vmatmul.mubr.bf16.gmra.mxu0 %v515
      %v656 = vpop.f32.mrf.mxu0
      %v657 = vadd.f32 0.0, %v656
      %v658 = vpop.f32.mrf.mxu0
      %v659 = vpop.f32.mrf.mxu0
      %v660 = vadd.f32 0.0, %v659
      %v661 = vpop.f32.mrf.mxu0
      %662 = vmatprep.mubr.bf16.mxu0 0
      %663 = vmatmul.mubr.bf16.gmra.mxu0 %v518
      %v664 = vpop.f32.mrf.mxu0
      %v665 = vadd.f32 0.0, %v664
      %v666 = vpop.f32.mrf.mxu0
      %v667 = vpop.f32.mrf.mxu0
      %v668 = vadd.f32 0.0, %v667
      %v669 = vpop.f32.mrf.mxu0
      %670 = vmatprep.mubr.bf16.mxu0 0
      %671 = vmatmul.mubr.bf16.gmra.mxu0 %v521
      %v672 = vpop.f32.mrf.mxu0
      %v673 = vadd.f32 0.0, %v672
      %v674 = vpop.f32.mrf.mxu0
      %v675 = vpop.f32.mrf.mxu0
      %v676 = vadd.f32 0.0, %v675
      %v677 = vpop.f32.mrf.mxu0
      %678 = vmatprep.mubr.bf16.mxu0 0
      %679 = vmatmul.mubr.bf16.gmra.mxu0 %v524
      %v680 = vpop.f32.mrf.mxu0
      %v681 = vadd.f32 0.0, %v680
      %v682 = vpop.f32.mrf.mxu0
      %v683 = vpop.f32.mrf.mxu0
      %v684 = vadd.f32 0.0, %v683
      %v685 = vpop.f32.mrf.mxu0
      %686 = vdwg.mxu0
      %v689 = vunpack.c.l.b16 %v300
      %v690 = vunpack.c.l.b16 %v301
      %v691 = vpack.c.b16 %v690, %v689
      %v704 = vunpack.c.l.b16 %v336
      %v705 = vunpack.c.l.b16 %v337
      %v706 = vunpack.c.l.b16 %v338
      %v707 = vunpack.c.l.b16 %v339
      %v708 = vunpack.c.l.b16 %v340
      %v709 = vunpack.c.l.b16 %v341
      %v710 = vunpack.c.l.b16 %v342
      %v711 = vunpack.c.l.b16 %v343
      %v712 = vunpack.c.l.b16 %v344
      %v713 = vunpack.c.l.b16 %v345
      %v714 = vunpack.c.l.b16 %v346
      %v715 = vunpack.c.l.b16 %v347
      %v716 = vpack.c.b16 %v705, %v704
      %v717 = vpack.c.b16 %v707, %v706
      %v718 = vpack.c.b16 %v709, %v708
      %v719 = vpack.c.b16 %v711, %v710
      %v720 = vpack.c.b16 %v713, %v712
      %v721 = vpack.c.b16 %v715, %v714
      %v729 = vsel %vm477, %v691, 0
      %731 = vmatprep.subr.bf16.mxu0 0
      %732 = vmatpush1.bf16.msra.mxu0 0
      %733 = vmatprep.subr.bf16.mxu0 0
      %734 = vmatpush1.bf16.msra.mxu0 0
      %735 = vmatprep.subr.bf16.mxu0 0
      %736 = vmatpush1.bf16.msra.mxu0 %v721
      %737 = vmatprep.subr.bf16.mxu0 0
      %738 = vmatpush1.bf16.msra.mxu0 %v720
      %739 = vmatprep.subr.bf16.mxu0 0
      %740 = vmatpush1.bf16.msra.mxu0 %v719
      %741 = vmatprep.subr.bf16.mxu0 0
      %742 = vmatpush1.bf16.msra.mxu0 %v718
      %743 = vmatprep.subr.bf16.mxu0 0
      %744 = vmatpush1.bf16.msra.mxu0 %v717
      %745 = vmatprep.subr.bf16.mxu0 0
      %746 = vmatpush1.bf16.msra.mxu0 %v716
      %747 = vmatprep.subr.bf16.mxu0 0
      %748 = vmatpush2.bf16.msra.mxu0 0
      %749 = vmatprep.subr.bf16.mxu0 0
      %750 = vmatpush2.bf16.msra.mxu0 0
      %751 = vmatprep.subr.bf16.mxu0 0
      %752 = vmatpush2.bf16.msra.mxu0 0
      %753 = vmatprep.subr.bf16.mxu0 0
      %754 = vmatpush2.bf16.msra.mxu0 0
      %755 = vmatprep.subr.bf16.mxu0 0
      %756 = vmatpush2.bf16.msra.mxu0 0
      %757 = vmatprep.subr.bf16.mxu0 0
      %758 = vmatpush2.bf16.msra.mxu0 0
      %759 = vmatprep.subr.bf16.mxu0 0
      %760 = vmatpush2.bf16.msra.mxu0 0
      %761 = vmatprep.subr.bf16.mxu0 0
      %762 = vmatpush2.bf16.msra.mxu0 0
      %763 = vmatprep.mubr.bf16.mxu0 0
      %764 = vmatmul.mubr.bf16.gmra.mxu0 %v729
      %v765 = vpop.f32.mrf.mxu0
      %v766 = vadd.f32 %v561, %v765
      %v767 = vpop.f32.mrf.mxu0
      %v768 = vpop.f32.mrf.mxu0
      %v769 = vadd.f32 %v564, %v768
      %v770 = vpop.f32.mrf.mxu0
      %771 = vmatprep.mubr.bf16.mxu0 0
      %772 = vmatmul.mubr.bf16.gmra.mxu0 %v479
      %v773 = vpop.f32.mrf.mxu0
      %v774 = vadd.f32 %v569, %v773
      %v775 = vpop.f32.mrf.mxu0
      %v776 = vpop.f32.mrf.mxu0
      %v777 = vadd.f32 %v572, %v776
      %v778 = vpop.f32.mrf.mxu0
      %779 = vmatprep.mubr.bf16.mxu0 0
      %780 = vmatmul.mubr.bf16.gmra.mxu0 %v482
      %v781 = vpop.f32.mrf.mxu0
      %v782 = vadd.f32 %v577, %v781
      %v783 = vpop.f32.mrf.mxu0
      %v784 = vpop.f32.mrf.mxu0
      %v785 = vadd.f32 %v580, %v784
      %v786 = vpop.f32.mrf.mxu0
      %787 = vmatprep.mubr.bf16.mxu0 0
      %788 = vmatmul.mubr.bf16.gmra.mxu0 %v485
      %v789 = vpop.f32.mrf.mxu0
      %v790 = vadd.f32 %v585, %v789
      %v791 = vpop.f32.mrf.mxu0
      %v792 = vpop.f32.mrf.mxu0
      %v793 = vadd.f32 %v588, %v792
      %v794 = vpop.f32.mrf.mxu0
      %795 = vmatprep.mubr.bf16.mxu0 0
      %796 = vmatmul.mubr.bf16.gmra.mxu0 %v488
      %v797 = vpop.f32.mrf.mxu0
      %v798 = vadd.f32 %v593, %v797
      %v799 = vpop.f32.mrf.mxu0
      %v800 = vpop.f32.mrf.mxu0
      %v801 = vadd.f32 %v596, %v800
      %v802 = vpop.f32.mrf.mxu0
      %803 = vmatprep.mubr.bf16.mxu0 0
      %804 = vmatmul.mubr.bf16.gmra.mxu0 %v491
      %v805 = vpop.f32.mrf.mxu0
      %v806 = vadd.f32 %v601, %v805
      %v807 = vpop.f32.mrf.mxu0
      %v808 = vpop.f32.mrf.mxu0
      %v809 = vadd.f32 %v604, %v808
      %v810 = vpop.f32.mrf.mxu0
      %811 = vmatprep.mubr.bf16.mxu0 0
      %812 = vmatmul.mubr.bf16.gmra.mxu0 %v494
      %v813 = vpop.f32.mrf.mxu0
      %v814 = vadd.f32 %v609, %v813
      %v815 = vpop.f32.mrf.mxu0
      %v816 = vpop.f32.mrf.mxu0
      %v817 = vadd.f32 %v612, %v816
      %v818 = vpop.f32.mrf.mxu0
      %819 = vmatprep.mubr.bf16.mxu0 0
      %820 = vmatmul.mubr.bf16.gmra.mxu0 %v497
      %v821 = vpop.f32.mrf.mxu0
      %v822 = vadd.f32 %v617, %v821
      %v823 = vpop.f32.mrf.mxu0
      %v824 = vpop.f32.mrf.mxu0
      %v825 = vadd.f32 %v620, %v824
      %v826 = vpop.f32.mrf.mxu0
      %827 = vmatprep.mubr.bf16.mxu0 0
      %828 = vmatmul.mubr.bf16.gmra.mxu0 %v500
      %v829 = vpop.f32.mrf.mxu0
      %v830 = vadd.f32 %v625, %v829
      %v831 = vpop.f32.mrf.mxu0
      %v832 = vpop.f32.mrf.mxu0
      %v833 = vadd.f32 %v628, %v832
      %v834 = vpop.f32.mrf.mxu0
      %835 = vmatprep.mubr.bf16.mxu0 0
      %836 = vmatmul.mubr.bf16.gmra.mxu0 %v503
      %v837 = vpop.f32.mrf.mxu0
      %v838 = vadd.f32 %v633, %v837
      %v839 = vpop.f32.mrf.mxu0
      %v840 = vpop.f32.mrf.mxu0
      %v841 = vadd.f32 %v636, %v840
      %v842 = vpop.f32.mrf.mxu0
      %843 = vmatprep.mubr.bf16.mxu0 0
      %844 = vmatmul.mubr.bf16.gmra.mxu0 %v506
      %v845 = vpop.f32.mrf.mxu0
      %v846 = vadd.f32 %v641, %v845
      %v847 = vpop.f32.mrf.mxu0
      %v848 = vpop.f32.mrf.mxu0
      %v849 = vadd.f32 %v644, %v848
      %v850 = vpop.f32.mrf.mxu0
      %851 = vmatprep.mubr.bf16.mxu0 0
      %852 = vmatmul.mubr.bf16.gmra.mxu0 %v509
      %v853 = vpop.f32.mrf.mxu0
      %v854 = vadd.f32 %v649, %v853
      %v855 = vpop.f32.mrf.mxu0
      %v856 = vpop.f32.mrf.mxu0
      %v857 = vadd.f32 %v652, %v856
      %v858 = vpop.f32.mrf.mxu0
      %859 = vmatprep.mubr.bf16.mxu0 0
      %860 = vmatmul.mubr.bf16.gmra.mxu0 %v512
      %v861 = vpop.f32.mrf.mxu0
      %v862 = vadd.f32 %v657, %v861
      %v863 = vpop.f32.mrf.mxu0
      %v864 = vpop.f32.mrf.mxu0
      %v865 = vadd.f32 %v660, %v864
      %v866 = vpop.f32.mrf.mxu0
      %867 = vmatprep.mubr.bf16.mxu0 0
      %868 = vmatmul.mubr.bf16.gmra.mxu0 %v515
      %v869 = vpop.f32.mrf.mxu0
      %v870 = vadd.f32 %v665, %v869
      %v871 = vpop.f32.mrf.mxu0
      %v872 = vpop.f32.mrf.mxu0
      %v873 = vadd.f32 %v668, %v872
      %v874 = vpop.f32.mrf.mxu0
      %875 = vmatprep.mubr.bf16.mxu0 0
      %876 = vmatmul.mubr.bf16.gmra.mxu0 %v518
      %v877 = vpop.f32.mrf.mxu0
      %v878 = vadd.f32 %v673, %v877
      %v879 = vpop.f32.mrf.mxu0
      %v880 = vpop.f32.mrf.mxu0
      %v881 = vadd.f32 %v676, %v880
      %v882 = vpop.f32.mrf.mxu0
      %883 = vmatprep.mubr.bf16.mxu0 0
      %884 = vmatmul.mubr.bf16.gmra.mxu0 %v521
      %v885 = vpop.f32.mrf.mxu0
      %v886 = vadd.f32 %v681, %v885
      %v887 = vpop.f32.mrf.mxu0
      %v888 = vpop.f32.mrf.mxu0
      %v889 = vadd.f32 %v684, %v888
      %v890 = vpop.f32.mrf.mxu0
      %891 = vdwg.mxu0
      %s892 = scalar_lea.vmem %s2, 96
      %v893 = vld [vmem:[%s892] sm:$0xf]
      %v894 = vld [vmem:[%s892 + $0x4] sm:$0xf]
      %v895 = vld [vmem:[%s892 + $0x8] sm:$0xf]
      %v896 = vld [vmem:[%s892 + $0xc] sm:$0xf]
      %v897 = vld [vmem:[%s892 + $0x10] sm:$0xf]
      %v898 = vld [vmem:[%s892 + $0x14] sm:$0xf]
      %v899 = vld [vmem:[%s892 + $0x18] sm:$0xf]
      %v900 = vld [vmem:[%s892 + $0x1c] sm:$0xf]
      %v901 = vld [vmem:[%s892 + $0x20] sm:$0xf]
      %v902 = vld [vmem:[%s892 + $0x24] sm:$0xf]
      %v903 = vld [vmem:[%s892 + $0x28] sm:$0xf]
      %v904 = vld [vmem:[%s892 + $0x2c] sm:$0xf]
      %v907 = vunpack.c.l.b16 %v334
      %v908 = vunpack.c.l.b16 %v335
      %v909 = vpack.c.b16 %v908, %v907
      %v922 = vunpack.c.l.b16 %v893
      %v923 = vunpack.c.l.b16 %v894
      %v924 = vunpack.c.l.b16 %v895
      %v925 = vunpack.c.l.b16 %v896
      %v926 = vunpack.c.l.b16 %v897
      %v927 = vunpack.c.l.b16 %v898
      %v928 = vunpack.c.l.b16 %v899
      %v929 = vunpack.c.l.b16 %v900
      %v930 = vunpack.c.l.b16 %v901
      %v931 = vunpack.c.l.b16 %v902
      %v932 = vunpack.c.l.b16 %v903
      %v933 = vunpack.c.l.b16 %v904
      %v934 = vpack.c.b16 %v923, %v922
      %v935 = vpack.c.b16 %v925, %v924
      %v936 = vpack.c.b16 %v927, %v926
      %v937 = vpack.c.b16 %v929, %v928
      %v938 = vpack.c.b16 %v931, %v930
      %v939 = vpack.c.b16 %v933, %v932
      %v947 = vsel %vm477, %v909, 0
      %949 = vmatprep.subr.bf16.mxu0 0
      %950 = vmatpush1.bf16.msra.mxu0 0
      %951 = vmatprep.subr.bf16.mxu0 0
      %952 = vmatpush1.bf16.msra.mxu0 0
      %953 = vmatprep.subr.bf16.mxu0 0
      %954 = vmatpush1.bf16.msra.mxu0 %v939
      %955 = vmatprep.subr.bf16.mxu0 0
      %956 = vmatpush1.bf16.msra.mxu0 %v938
      %957 = vmatprep.subr.bf16.mxu0 0
      %958 = vmatpush1.bf16.msra.mxu0 %v937
      %959 = vmatprep.subr.bf16.mxu0 0
      %960 = vmatpush1.bf16.msra.mxu0 %v936
      %961 = vmatprep.subr.bf16.mxu0 0
      %962 = vmatpush1.bf16.msra.mxu0 %v935
      %963 = vmatprep.subr.bf16.mxu0 0
      %964 = vmatpush1.bf16.msra.mxu0 %v934
      %965 = vmatprep.subr.bf16.mxu0 0
      %966 = vmatpush2.bf16.msra.mxu0 0
      %967 = vmatprep.subr.bf16.mxu0 0
      %968 = vmatpush2.bf16.msra.mxu0 0
      %969 = vmatprep.subr.bf16.mxu0 0
      %970 = vmatpush2.bf16.msra.mxu0 0
      %971 = vmatprep.subr.bf16.mxu0 0
      %972 = vmatpush2.bf16.msra.mxu0 0
      %973 = vmatprep.subr.bf16.mxu0 0
      %974 = vmatpush2.bf16.msra.mxu0 0
      %975 = vmatprep.subr.bf16.mxu0 0
      %976 = vmatpush2.bf16.msra.mxu0 0
      %977 = vmatprep.subr.bf16.mxu0 0
      %978 = vmatpush2.bf16.msra.mxu0 0
      %979 = vmatprep.subr.bf16.mxu0 0
      %980 = vmatpush2.bf16.msra.mxu0 0
      %981 = vmatprep.mubr.bf16.mxu0 0
      %982 = vmatmul.mubr.bf16.gmra.mxu0 %v482
      %v983 = vpop.f32.mrf.mxu0
      %v984 = vadd.f32 0.0, %v983
      %v985 = vpop.f32.mrf.mxu0
      %v986 = vpop.f32.mrf.mxu0
      %v987 = vadd.f32 0.0, %v986
      %v988 = vpop.f32.mrf.mxu0
      %989 = vmatprep.mubr.bf16.mxu0 0
      %990 = vmatmul.mubr.bf16.gmra.mxu0 %v485
      %v991 = vpop.f32.mrf.mxu0
      %v992 = vadd.f32 0.0, %v991
      %v993 = vpop.f32.mrf.mxu0
      %v994 = vpop.f32.mrf.mxu0
      %v995 = vadd.f32 0.0, %v994
      %v996 = vpop.f32.mrf.mxu0
      %997 = vmatprep.mubr.bf16.mxu0 0
      %998 = vmatmul.mubr.bf16.gmra.mxu0 %v488
      %v999 = vpop.f32.mrf.mxu0
      %v1000 = vadd.f32 0.0, %v999
      %v1001 = vpop.f32.mrf.mxu0
      %v1002 = vpop.f32.mrf.mxu0
      %v1003 = vadd.f32 0.0, %v1002
      %v1004 = vpop.f32.mrf.mxu0
      %1005 = vmatprep.mubr.bf16.mxu0 0
      %1006 = vmatmul.mubr.bf16.gmra.mxu0 %v491
      %v1007 = vpop.f32.mrf.mxu0
      %v1008 = vadd.f32 0.0, %v1007
      %v1009 = vpop.f32.mrf.mxu0
      %v1010 = vpop.f32.mrf.mxu0
      %v1011 = vadd.f32 0.0, %v1010
      %v1012 = vpop.f32.mrf.mxu0
      %1013 = vmatprep.mubr.bf16.mxu0 0
      %1014 = vmatmul.mubr.bf16.gmra.mxu0 %v494
      %v1015 = vpop.f32.mrf.mxu0
      %v1016 = vadd.f32 0.0, %v1015
      %v1017 = vpop.f32.mrf.mxu0
      %v1018 = vpop.f32.mrf.mxu0
      %v1019 = vadd.f32 0.0, %v1018
      %v1020 = vpop.f32.mrf.mxu0
      %1021 = vmatprep.mubr.bf16.mxu0 0
      %1022 = vmatmul.mubr.bf16.gmra.mxu0 %v497
      %v1023 = vpop.f32.mrf.mxu0
      %v1024 = vadd.f32 0.0, %v1023
      %v1025 = vpop.f32.mrf.mxu0
      %v1026 = vpop.f32.mrf.mxu0
      %v1027 = vadd.f32 0.0, %v1026
      %v1028 = vpop.f32.mrf.mxu0
      %1029 = vmatprep.mubr.bf16.mxu0 0
      %1030 = vmatmul.mubr.bf16.gmra.mxu0 %v500
      %v1031 = vpop.f32.mrf.mxu0
      %v1032 = vadd.f32 0.0, %v1031
      %v1033 = vpop.f32.mrf.mxu0
      %v1034 = vpop.f32.mrf.mxu0
      %v1035 = vadd.f32 0.0, %v1034
      %v1036 = vpop.f32.mrf.mxu0
      %1037 = vmatprep.mubr.bf16.mxu0 0
      %1038 = vmatmul.mubr.bf16.gmra.mxu0 %v503
      %v1039 = vpop.f32.mrf.mxu0
      %v1040 = vadd.f32 0.0, %v1039
      %v1041 = vpop.f32.mrf.mxu0
      %v1042 = vpop.f32.mrf.mxu0
      %v1043 = vadd.f32 0.0, %v1042
      %v1044 = vpop.f32.mrf.mxu0
      %1045 = vmatprep.mubr.bf16.mxu0 0
      %1046 = vmatmul.mubr.bf16.gmra.mxu0 %v506
      %v1047 = vpop.f32.mrf.mxu0
      %v1048 = vadd.f32 0.0, %v1047
      %v1049 = vpop.f32.mrf.mxu0
      %v1050 = vpop.f32.mrf.mxu0
      %v1051 = vadd.f32 0.0, %v1050
      %v1052 = vpop.f32.mrf.mxu0
      %1053 = vmatprep.mubr.bf16.mxu0 0
      %1054 = vmatmul.mubr.bf16.gmra.mxu0 %v509
      %v1055 = vpop.f32.mrf.mxu0
      %v1056 = vadd.f32 0.0, %v1055
      %v1057 = vpop.f32.mrf.mxu0
      %v1058 = vpop.f32.mrf.mxu0
      %v1059 = vadd.f32 0.0, %v1058
      %v1060 = vpop.f32.mrf.mxu0
      %1061 = vmatprep.mubr.bf16.mxu0 0
      %1062 = vmatmul.mubr.bf16.gmra.mxu0 %v512
      %v1063 = vpop.f32.mrf.mxu0
      %v1064 = vadd.f32 0.0, %v1063
      %v1065 = vpop.f32.mrf.mxu0
      %v1066 = vpop.f32.mrf.mxu0
      %v1067 = vadd.f32 0.0, %v1066
      %v1068 = vpop.f32.mrf.mxu0
      %1069 = vmatprep.mubr.bf16.mxu0 0
      %1070 = vmatmul.mubr.bf16.gmra.mxu0 %v515
      %v1071 = vpop.f32.mrf.mxu0
      %v1072 = vadd.f32 0.0, %v1071
      %v1073 = vpop.f32.mrf.mxu0
      %v1074 = vpop.f32.mrf.mxu0
      %v1075 = vadd.f32 0.0, %v1074
      %v1076 = vpop.f32.mrf.mxu0
      %1077 = vmatprep.mubr.bf16.mxu0 0
      %1078 = vmatmul.mubr.bf16.gmra.mxu0 %v518
      %v1079 = vpop.f32.mrf.mxu0
      %v1080 = vadd.f32 0.0, %v1079
      %v1081 = vpop.f32.mrf.mxu0
      %v1082 = vpop.f32.mrf.mxu0
      %v1083 = vadd.f32 0.0, %v1082
      %v1084 = vpop.f32.mrf.mxu0
      %1085 = vmatprep.mubr.bf16.mxu0 0
      %1086 = vmatmul.mubr.bf16.gmra.mxu0 %v521
      %v1087 = vpop.f32.mrf.mxu0
      %v1088 = vadd.f32 0.0, %v1087
      %v1089 = vpop.f32.mrf.mxu0
      %v1090 = vpop.f32.mrf.mxu0
      %v1091 = vadd.f32 0.0, %v1090
      %v1092 = vpop.f32.mrf.mxu0
      %1093 = vmatprep.mubr.bf16.mxu0 0
      %1094 = vmatmul.mubr.bf16.gmra.mxu0 %v524
      %v1095 = vpop.f32.mrf.mxu0
      %v1096 = vadd.f32 0.0, %v1095
      %v1097 = vpop.f32.mrf.mxu0
      %v1098 = vpop.f32.mrf.mxu0
      %v1099 = vadd.f32 0.0, %v1098
      %v1100 = vpop.f32.mrf.mxu0
      %1101 = vmatprep.mubr.bf16.mxu0 0
      %1102 = vmatmul.mubr.bf16.gmra.mxu0 %v947
      %v1103 = vpop.f32.mrf.mxu0
      %v1104 = vadd.f32 0.0, %v1103
      %v1105 = vpop.f32.mrf.mxu0
      %v1106 = vpop.f32.mrf.mxu0
      %v1107 = vadd.f32 0.0, %v1106
      %v1108 = vpop.f32.mrf.mxu0
      %1109 = vdwg.mxu0
      %v1110 = vadd.f32 %v766, %v984
      %v1111 = vadd.f32 %v769, %v987
      %v1112 = vadd.f32 %v774, %v992
      %v1113 = vadd.f32 %v777, %v995
      %v1114 = vadd.f32 %v782, %v1000
      %v1115 = vadd.f32 %v785, %v1003
      %v1116 = vadd.f32 %v790, %v1008
      %v1117 = vadd.f32 %v793, %v1011
      %v1118 = vadd.f32 %v798, %v1016
      %v1119 = vadd.f32 %v801, %v1019
      %v1120 = vadd.f32 %v806, %v1024
      %v1121 = vadd.f32 %v809, %v1027
      %v1122 = vadd.f32 %v814, %v1032
      %v1123 = vadd.f32 %v817, %v1035
      %v1124 = vadd.f32 %v822, %v1040
      %v1125 = vadd.f32 %v825, %v1043
      %v1126 = vadd.f32 %v830, %v1048
      %v1127 = vadd.f32 %v833, %v1051
      %v1128 = vadd.f32 %v838, %v1056
      %v1129 = vadd.f32 %v841, %v1059
      %v1130 = vadd.f32 %v846, %v1064
      %v1131 = vadd.f32 %v849, %v1067
      %v1132 = vadd.f32 %v854, %v1072
      %v1133 = vadd.f32 %v857, %v1075
      %v1134 = vadd.f32 %v862, %v1080
      %v1135 = vadd.f32 %v865, %v1083
      %v1136 = vadd.f32 %v870, %v1088
      %v1137 = vadd.f32 %v873, %v1091
      %v1138 = vadd.f32 %v878, %v1096
      %v1139 = vadd.f32 %v881, %v1099
      %v1140 = vadd.f32 %v886, %v1104
      %v1141 = vadd.f32 %v889, %v1107
      %v1142 = vld [vmem:[%s293] sm:$0xf]
      %v1143 = vld [vmem:[%s293 + $0x4] sm:$0xf]
      %v1144 = vld [vmem:[%s293 + $0x8] sm:$0xf]
      %v1145 = vld [vmem:[%s293 + $0xc] sm:$0xf]
      %v1146 = vld [vmem:[%s293 + $0x10] sm:$0xf]
      %v1147 = vld [vmem:[%s293 + $0x14] sm:$0xf]
      %v1148 = vld [vmem:[%s293 + $0x18] sm:$0xf]
      %v1149 = vld [vmem:[%s293 + $0x1c] sm:$0xf]
      %v1150 = vld [vmem:[%s293 + $0x20] sm:$0xf]
      %v1151 = vld [vmem:[%s293 + $0x24] sm:$0xf]
      %v1152 = vld [vmem:[%s293 + $0x28] sm:$0xf]
      %v1153 = vld [vmem:[%s293 + $0x2c] sm:$0xf]
      %v1154 = vld [vmem:[%s293 + $0x30] sm:$0xf]
      %v1155 = vld [vmem:[%s293 + $0x34] sm:$0xf]
      %v1156 = vld [vmem:[%s293 + $0x38] sm:$0xf]
      %v1157 = vld [vmem:[%s293 + $0x3c] sm:$0xf]
      %v1158 = vld [vmem:[%s293 + $0x40] sm:$0xf]
      %v1159 = vld [vmem:[%s293 + $0x44] sm:$0xf]
      %v1160 = vld [vmem:[%s293 + $0x48] sm:$0xf]
      %v1161 = vld [vmem:[%s293 + $0x4c] sm:$0xf]
      %v1162 = vld [vmem:[%s293 + $0x50] sm:$0xf]
      %v1163 = vld [vmem:[%s293 + $0x54] sm:$0xf]
      %v1164 = vld [vmem:[%s293 + $0x58] sm:$0xf]
      %v1165 = vld [vmem:[%s293 + $0x5c] sm:$0xf]
      %v1166 = vld [vmem:[%s293 + $0x60] sm:$0xf]
      %v1167 = vld [vmem:[%s293 + $0x64] sm:$0xf]
      %v1168 = vld [vmem:[%s293 + $0x68] sm:$0xf]
      %v1169 = vld [vmem:[%s293 + $0x6c] sm:$0xf]
      %v1170 = vld [vmem:[%s293 + $0x70] sm:$0xf]
      %v1171 = vld [vmem:[%s293 + $0x74] sm:$0xf]
      %v1172 = vld [vmem:[%s293 + $0x78] sm:$0xf]
      %v1173 = vld [vmem:[%s293 + $0x7c] sm:$0xf]
      %v1174 = vld [vmem:[%s293 + $0x80] sm:$0xf]
      %v1175 = vld [vmem:[%s293 + $0x84] sm:$0xf]
      %v1176 = vld [vmem:[%s293 + $0x88] sm:$0xf]
      %v1177 = vld [vmem:[%s293 + $0x8c] sm:$0xf]
      %v1178 = vld [vmem:[%s3] sm:$0xf]
      %v1179 = vld [vmem:[%s3 + $0x4] sm:$0xf]
      %v1180 = vld [vmem:[%s3 + $0x8] sm:$0xf]
      %v1181 = vld [vmem:[%s3 + $0xc] sm:$0xf]
      %v1182 = vld [vmem:[%s3 + $0x10] sm:$0xf]
      %v1183 = vld [vmem:[%s3 + $0x14] sm:$0xf]
      %v1184 = vld [vmem:[%s3 + $0x18] sm:$0xf]
      %v1185 = vld [vmem:[%s3 + $0x1c] sm:$0xf]
      %v1186 = vld [vmem:[%s3 + $0x20] sm:$0xf]
      %v1187 = vld [vmem:[%s3 + $0x24] sm:$0xf]
      %v1188 = vld [vmem:[%s3 + $0x28] sm:$0xf]
      %v1189 = vld [vmem:[%s3 + $0x2c] sm:$0xf]
      %v1222 = vunpack.c.l.b16 %v1142
      %v1223 = vunpack.c.l.b16 %v1143
      %v1224 = vunpack.c.l.b16 %v1144
      %v1225 = vunpack.c.l.b16 %v1145
      %v1226 = vunpack.c.l.b16 %v1146
      %v1227 = vunpack.c.l.b16 %v1147
      %v1228 = vunpack.c.l.b16 %v1148
      %v1229 = vunpack.c.l.b16 %v1149
      %v1230 = vunpack.c.l.b16 %v1150
      %v1231 = vunpack.c.l.b16 %v1151
      %v1232 = vunpack.c.l.b16 %v1152
      %v1233 = vunpack.c.l.b16 %v1153
      %v1234 = vunpack.c.l.b16 %v1154
      %v1235 = vunpack.c.l.b16 %v1155
      %v1236 = vunpack.c.l.b16 %v1156
      %v1237 = vunpack.c.l.b16 %v1157
      %v1238 = vunpack.c.l.b16 %v1158
      %v1239 = vunpack.c.l.b16 %v1159
      %v1240 = vunpack.c.l.b16 %v1160
      %v1241 = vunpack.c.l.b16 %v1161
      %v1242 = vunpack.c.l.b16 %v1162
      %v1243 = vunpack.c.l.b16 %v1163
      %v1244 = vunpack.c.l.b16 %v1164
      %v1245 = vunpack.c.l.b16 %v1165
      %v1246 = vunpack.c.l.b16 %v1166
      %v1247 = vunpack.c.l.b16 %v1167
      %v1248 = vunpack.c.l.b16 %v1168
      %v1249 = vunpack.c.l.b16 %v1169
      %v1250 = vunpack.c.l.b16 %v1170
      %v1251 = vunpack.c.l.b16 %v1171
      %v1252 = vunpack.c.l.b16 %v1172
      %v1253 = vunpack.c.l.b16 %v1173
      %v1254 = vpack.c.b16 %v1223, %v1222
      %v1255 = vpack.c.b16 %v1225, %v1224
      %v1256 = vpack.c.b16 %v1227, %v1226
      %v1257 = vpack.c.b16 %v1229, %v1228
      %v1258 = vpack.c.b16 %v1231, %v1230
      %v1259 = vpack.c.b16 %v1233, %v1232
      %v1260 = vpack.c.b16 %v1235, %v1234
      %v1261 = vpack.c.b16 %v1237, %v1236
      %v1262 = vpack.c.b16 %v1239, %v1238
      %v1263 = vpack.c.b16 %v1241, %v1240
      %v1264 = vpack.c.b16 %v1243, %v1242
      %v1265 = vpack.c.b16 %v1245, %v1244
      %v1266 = vpack.c.b16 %v1247, %v1246
      %v1267 = vpack.c.b16 %v1249, %v1248
      %v1268 = vpack.c.b16 %v1251, %v1250
      %v1269 = vpack.c.b16 %v1253, %v1252
      %v1282 = vunpack.c.l.b16 %v1178
      %v1283 = vunpack.c.l.b16 %v1179
      %v1284 = vunpack.c.l.b16 %v1180
      %v1285 = vunpack.c.l.b16 %v1181
      %v1286 = vunpack.c.l.b16 %v1182
      %v1287 = vunpack.c.l.b16 %v1183
      %v1288 = vunpack.c.l.b16 %v1184
      %v1289 = vunpack.c.l.b16 %v1185
      %v1290 = vunpack.c.l.b16 %v1186
      %v1291 = vunpack.c.l.b16 %v1187
      %v1292 = vunpack.c.l.b16 %v1188
      %v1293 = vunpack.c.l.b16 %v1189
      %v1294 = vpack.c.b16 %v1283, %v1282
      %v1295 = vpack.c.b16 %v1285, %v1284
      %v1296 = vpack.c.b16 %v1287, %v1286
      %v1297 = vpack.c.b16 %v1289, %v1288
      %v1298 = vpack.c.b16 %v1291, %v1290
      %v1299 = vpack.c.b16 %v1293, %v1292
      %v1307 = vsel %vm477, %v1254, 0
      %v1310 = vsel %vm477, %v1255, 0
      %v1313 = vsel %vm477, %v1256, 0
      %v1316 = vsel %vm477, %v1257, 0
      %v1319 = vsel %vm477, %v1258, 0
      %v1322 = vsel %vm477, %v1259, 0
      %v1325 = vsel %vm477, %v1260, 0
      %v1328 = vsel %vm477, %v1261, 0
      %v1331 = vsel %vm477, %v1262, 0
      %v1334 = vsel %vm477, %v1263, 0
      %v1337 = vsel %vm477, %v1264, 0
      %v1340 = vsel %vm477, %v1265, 0
      %v1343 = vsel %vm477, %v1266, 0
      %v1346 = vsel %vm477, %v1267, 0
      %v1349 = vsel %vm477, %v1268, 0
      %v1352 = vsel %vm477, %v1269, 0
      %1354 = vmatprep.subr.bf16.mxu0 0
      %1355 = vmatpush1.bf16.msra.mxu0 0
      %1356 = vmatprep.subr.bf16.mxu0 0
      %1357 = vmatpush1.bf16.msra.mxu0 0
      %1358 = vmatprep.subr.bf16.mxu0 0
      %1359 = vmatpush1.bf16.msra.mxu0 %v1299
      %1360 = vmatprep.subr.bf16.mxu0 0
      %1361 = vmatpush1.bf16.msra.mxu0 %v1298
      %1362 = vmatprep.subr.bf16.mxu0 0
      %1363 = vmatpush1.bf16.msra.mxu0 %v1297
      %1364 = vmatprep.subr.bf16.mxu0 0
      %1365 = vmatpush1.bf16.msra.mxu0 %v1296
      %1366 = vmatprep.subr.bf16.mxu0 0
      %1367 = vmatpush1.bf16.msra.mxu0 %v1295
      %1368 = vmatprep.subr.bf16.mxu0 0
      %1369 = vmatpush1.bf16.msra.mxu0 %v1294
      %1370 = vmatprep.subr.bf16.mxu0 0
      %1371 = vmatpush2.bf16.msra.mxu0 0
      %1372 = vmatprep.subr.bf16.mxu0 0
      %1373 = vmatpush2.bf16.msra.mxu0 0
      %1374 = vmatprep.subr.bf16.mxu0 0
      %1375 = vmatpush2.bf16.msra.mxu0 0
      %1376 = vmatprep.subr.bf16.mxu0 0
      %1377 = vmatpush2.bf16.msra.mxu0 0
      %1378 = vmatprep.subr.bf16.mxu0 0
      %1379 = vmatpush2.bf16.msra.mxu0 0
      %1380 = vmatprep.subr.bf16.mxu0 0
      %1381 = vmatpush2.bf16.msra.mxu0 0
      %1382 = vmatprep.subr.bf16.mxu0 0
      %1383 = vmatpush2.bf16.msra.mxu0 0
      %1384 = vmatprep.subr.bf16.mxu0 0
      %1385 = vmatpush2.bf16.msra.mxu0 0
      %1386 = vmatprep.mubr.bf16.mxu0 0
      %1387 = vmatmul.mubr.bf16.gmra.mxu0 %v1307
      %v1388 = vpop.f32.mrf.mxu0
      %v1389 = vadd.f32 0.0, %v1388
      %v1390 = vpop.f32.mrf.mxu0
      %v1391 = vpop.f32.mrf.mxu0
      %v1392 = vadd.f32 0.0, %v1391
      %v1393 = vpop.f32.mrf.mxu0
      %1394 = vmatprep.mubr.bf16.mxu0 0
      %1395 = vmatmul.mubr.bf16.gmra.mxu0 %v1310
      %v1396 = vpop.f32.mrf.mxu0
      %v1397 = vadd.f32 0.0, %v1396
      %v1398 = vpop.f32.mrf.mxu0
      %v1399 = vpop.f32.mrf.mxu0
      %v1400 = vadd.f32 0.0, %v1399
      %v1401 = vpop.f32.mrf.mxu0
      %1402 = vmatprep.mubr.bf16.mxu0 0
      %1403 = vmatmul.mubr.bf16.gmra.mxu0 %v1313
      %v1404 = vpop.f32.mrf.mxu0
      %v1405 = vadd.f32 0.0, %v1404
      %v1406 = vpop.f32.mrf.mxu0
      %v1407 = vpop.f32.mrf.mxu0
      %v1408 = vadd.f32 0.0, %v1407
      %v1409 = vpop.f32.mrf.mxu0
      %1410 = vmatprep.mubr.bf16.mxu0 0
      %1411 = vmatmul.mubr.bf16.gmra.mxu0 %v1316
      %v1412 = vpop.f32.mrf.mxu0
      %v1413 = vadd.f32 0.0, %v1412
      %v1414 = vpop.f32.mrf.mxu0
      %v1415 = vpop.f32.mrf.mxu0
      %v1416 = vadd.f32 0.0, %v1415
      %v1417 = vpop.f32.mrf.mxu0
      %1418 = vmatprep.mubr.bf16.mxu0 0
      %1419 = vmatmul.mubr.bf16.gmra.mxu0 %v1319
      %v1420 = vpop.f32.mrf.mxu0
      %v1421 = vadd.f32 0.0, %v1420
      %v1422 = vpop.f32.mrf.mxu0
      %v1423 = vpop.f32.mrf.mxu0
      %v1424 = vadd.f32 0.0, %v1423
      %v1425 = vpop.f32.mrf.mxu0
      %1426 = vmatprep.mubr.bf16.mxu0 0
      %1427 = vmatmul.mubr.bf16.gmra.mxu0 %v1322
      %v1428 = vpop.f32.mrf.mxu0
      %v1429 = vadd.f32 0.0, %v1428
      %v1430 = vpop.f32.mrf.mxu0
      %v1431 = vpop.f32.mrf.mxu0
      %v1432 = vadd.f32 0.0, %v1431
      %v1433 = vpop.f32.mrf.mxu0
      %1434 = vmatprep.mubr.bf16.mxu0 0
      %1435 = vmatmul.mubr.bf16.gmra.mxu0 %v1325
      %v1436 = vpop.f32.mrf.mxu0
      %v1437 = vadd.f32 0.0, %v1436
      %v1438 = vpop.f32.mrf.mxu0
      %v1439 = vpop.f32.mrf.mxu0
      %v1440 = vadd.f32 0.0, %v1439
      %v1441 = vpop.f32.mrf.mxu0
      %1442 = vmatprep.mubr.bf16.mxu0 0
      %1443 = vmatmul.mubr.bf16.gmra.mxu0 %v1328
      %v1444 = vpop.f32.mrf.mxu0
      %v1445 = vadd.f32 0.0, %v1444
      %v1446 = vpop.f32.mrf.mxu0
      %v1447 = vpop.f32.mrf.mxu0
      %v1448 = vadd.f32 0.0, %v1447
      %v1449 = vpop.f32.mrf.mxu0
      %1450 = vmatprep.mubr.bf16.mxu0 0
      %1451 = vmatmul.mubr.bf16.gmra.mxu0 %v1331
      %v1452 = vpop.f32.mrf.mxu0
      %v1453 = vadd.f32 0.0, %v1452
      %v1454 = vpop.f32.mrf.mxu0
      %v1455 = vpop.f32.mrf.mxu0
      %v1456 = vadd.f32 0.0, %v1455
      %v1457 = vpop.f32.mrf.mxu0
      %1458 = vmatprep.mubr.bf16.mxu0 0
      %1459 = vmatmul.mubr.bf16.gmra.mxu0 %v1334
      %v1460 = vpop.f32.mrf.mxu0
      %v1461 = vadd.f32 0.0, %v1460
      %v1462 = vpop.f32.mrf.mxu0
      %v1463 = vpop.f32.mrf.mxu0
      %v1464 = vadd.f32 0.0, %v1463
      %v1465 = vpop.f32.mrf.mxu0
      %1466 = vmatprep.mubr.bf16.mxu0 0
      %1467 = vmatmul.mubr.bf16.gmra.mxu0 %v1337
      %v1468 = vpop.f32.mrf.mxu0
      %v1469 = vadd.f32 0.0, %v1468
      %v1470 = vpop.f32.mrf.mxu0
      %v1471 = vpop.f32.mrf.mxu0
      %v1472 = vadd.f32 0.0, %v1471
      %v1473 = vpop.f32.mrf.mxu0
      %1474 = vmatprep.mubr.bf16.mxu0 0
      %1475 = vmatmul.mubr.bf16.gmra.mxu0 %v1340
      %v1476 = vpop.f32.mrf.mxu0
      %v1477 = vadd.f32 0.0, %v1476
      %v1478 = vpop.f32.mrf.mxu0
      %v1479 = vpop.f32.mrf.mxu0
      %v1480 = vadd.f32 0.0, %v1479
      %v1481 = vpop.f32.mrf.mxu0
      %1482 = vmatprep.mubr.bf16.mxu0 0
      %1483 = vmatmul.mubr.bf16.gmra.mxu0 %v1343
      %v1484 = vpop.f32.mrf.mxu0
      %v1485 = vadd.f32 0.0, %v1484
      %v1486 = vpop.f32.mrf.mxu0
      %v1487 = vpop.f32.mrf.mxu0
      %v1488 = vadd.f32 0.0, %v1487
      %v1489 = vpop.f32.mrf.mxu0
      %1490 = vmatprep.mubr.bf16.mxu0 0
      %1491 = vmatmul.mubr.bf16.gmra.mxu0 %v1346
      %v1492 = vpop.f32.mrf.mxu0
      %v1493 = vadd.f32 0.0, %v1492
      %v1494 = vpop.f32.mrf.mxu0
      %v1495 = vpop.f32.mrf.mxu0
      %v1496 = vadd.f32 0.0, %v1495
      %v1497 = vpop.f32.mrf.mxu0
      %1498 = vmatprep.mubr.bf16.mxu0 0
      %1499 = vmatmul.mubr.bf16.gmra.mxu0 %v1349
      %v1500 = vpop.f32.mrf.mxu0
      %v1501 = vadd.f32 0.0, %v1500
      %v1502 = vpop.f32.mrf.mxu0
      %v1503 = vpop.f32.mrf.mxu0
      %v1504 = vadd.f32 0.0, %v1503
      %v1505 = vpop.f32.mrf.mxu0
      %1506 = vmatprep.mubr.bf16.mxu0 0
      %1507 = vmatmul.mubr.bf16.gmra.mxu0 %v1352
      %v1508 = vpop.f32.mrf.mxu0
      %v1509 = vadd.f32 0.0, %v1508
      %v1510 = vpop.f32.mrf.mxu0
      %v1511 = vpop.f32.mrf.mxu0
      %v1512 = vadd.f32 0.0, %v1511
      %v1513 = vpop.f32.mrf.mxu0
      %1514 = vdwg.mxu0
      %v1515 = vadd.f32 %v1110, %v1389
      %v1516 = vadd.f32 %v1111, %v1392
      %v1517 = vadd.f32 %v1112, %v1397
      %v1518 = vadd.f32 %v1113, %v1400
      %v1519 = vadd.f32 %v1114, %v1405
      %v1520 = vadd.f32 %v1115, %v1408
      %v1521 = vadd.f32 %v1116, %v1413
      %v1522 = vadd.f32 %v1117, %v1416
      %v1523 = vadd.f32 %v1118, %v1421
      %v1524 = vadd.f32 %v1119, %v1424
      %v1525 = vadd.f32 %v1120, %v1429
      %v1526 = vadd.f32 %v1121, %v1432
      %v1527 = vadd.f32 %v1122, %v1437
      %v1528 = vadd.f32 %v1123, %v1440
      %v1529 = vadd.f32 %v1124, %v1445
      %v1530 = vadd.f32 %v1125, %v1448
      %v1531 = vadd.f32 %v1126, %v1453
      %v1532 = vadd.f32 %v1127, %v1456
      %v1533 = vadd.f32 %v1128, %v1461
      %v1534 = vadd.f32 %v1129, %v1464
      %v1535 = vadd.f32 %v1130, %v1469
      %v1536 = vadd.f32 %v1131, %v1472
      %v1537 = vadd.f32 %v1132, %v1477
      %v1538 = vadd.f32 %v1133, %v1480
      %v1539 = vadd.f32 %v1134, %v1485
      %v1540 = vadd.f32 %v1135, %v1488
      %v1541 = vadd.f32 %v1136, %v1493
      %v1542 = vadd.f32 %v1137, %v1496
      %v1543 = vadd.f32 %v1138, %v1501
      %v1544 = vadd.f32 %v1139, %v1504
      %v1545 = vadd.f32 %v1140, %v1509
      %v1546 = vadd.f32 %v1141, %v1512
      %s1547 = scalar_lea.vmem %s3, 48
      %v1548 = vld [vmem:[%s1547] sm:$0xf]
      %v1549 = vld [vmem:[%s1547 + $0x4] sm:$0xf]
      %v1550 = vld [vmem:[%s1547 + $0x8] sm:$0xf]
      %v1551 = vld [vmem:[%s1547 + $0xc] sm:$0xf]
      %v1552 = vld [vmem:[%s1547 + $0x10] sm:$0xf]
      %v1553 = vld [vmem:[%s1547 + $0x14] sm:$0xf]
      %v1554 = vld [vmem:[%s1547 + $0x18] sm:$0xf]
      %v1555 = vld [vmem:[%s1547 + $0x1c] sm:$0xf]
      %v1556 = vld [vmem:[%s1547 + $0x20] sm:$0xf]
      %v1557 = vld [vmem:[%s1547 + $0x24] sm:$0xf]
      %v1558 = vld [vmem:[%s1547 + $0x28] sm:$0xf]
      %v1559 = vld [vmem:[%s1547 + $0x2c] sm:$0xf]
      %v1562 = vunpack.c.l.b16 %v1174
      %v1563 = vunpack.c.l.b16 %v1175
      %v1564 = vpack.c.b16 %v1563, %v1562
      %v1577 = vunpack.c.l.b16 %v1548
      %v1578 = vunpack.c.l.b16 %v1549
      %v1579 = vunpack.c.l.b16 %v1550
      %v1580 = vunpack.c.l.b16 %v1551
      %v1581 = vunpack.c.l.b16 %v1552
      %v1582 = vunpack.c.l.b16 %v1553
      %v1583 = vunpack.c.l.b16 %v1554
      %v1584 = vunpack.c.l.b16 %v1555
      %v1585 = vunpack.c.l.b16 %v1556
      %v1586 = vunpack.c.l.b16 %v1557
      %v1587 = vunpack.c.l.b16 %v1558
      %v1588 = vunpack.c.l.b16 %v1559
      %v1589 = vpack.c.b16 %v1578, %v1577
      %v1590 = vpack.c.b16 %v1580, %v1579
      %v1591 = vpack.c.b16 %v1582, %v1581
      %v1592 = vpack.c.b16 %v1584, %v1583
      %v1593 = vpack.c.b16 %v1586, %v1585
      %v1594 = vpack.c.b16 %v1588, %v1587
      %v1602 = vsel %vm477, %v1564, 0
      %1604 = vmatprep.subr.bf16.mxu0 0
      %1605 = vmatpush1.bf16.msra.mxu0 0
      %1606 = vmatprep.subr.bf16.mxu0 0
      %1607 = vmatpush1.bf16.msra.mxu0 0
      %1608 = vmatprep.subr.bf16.mxu0 0
      %1609 = vmatpush1.bf16.msra.mxu0 %v1594
      %1610 = vmatprep.subr.bf16.mxu0 0
      %1611 = vmatpush1.bf16.msra.mxu0 %v1593
      %1612 = vmatprep.subr.bf16.mxu0 0
      %1613 = vmatpush1.bf16.msra.mxu0 %v1592
      %1614 = vmatprep.subr.bf16.mxu0 0
      %1615 = vmatpush1.bf16.msra.mxu0 %v1591
      %1616 = vmatprep.subr.bf16.mxu0 0
      %1617 = vmatpush1.bf16.msra.mxu0 %v1590
      %1618 = vmatprep.subr.bf16.mxu0 0
      %1619 = vmatpush1.bf16.msra.mxu0 %v1589
      %1620 = vmatprep.subr.bf16.mxu0 0
      %1621 = vmatpush2.bf16.msra.mxu0 0
      %1622 = vmatprep.subr.bf16.mxu0 0
      %1623 = vmatpush2.bf16.msra.mxu0 0
      %1624 = vmatprep.subr.bf16.mxu0 0
      %1625 = vmatpush2.bf16.msra.mxu0 0
      %1626 = vmatprep.subr.bf16.mxu0 0
      %1627 = vmatpush2.bf16.msra.mxu0 0
      %1628 = vmatprep.subr.bf16.mxu0 0
      %1629 = vmatpush2.bf16.msra.mxu0 0
      %1630 = vmatprep.subr.bf16.mxu0 0
      %1631 = vmatpush2.bf16.msra.mxu0 0
      %1632 = vmatprep.subr.bf16.mxu0 0
      %1633 = vmatpush2.bf16.msra.mxu0 0
      %1634 = vmatprep.subr.bf16.mxu0 0
      %1635 = vmatpush2.bf16.msra.mxu0 0
      %1636 = vmatprep.mubr.bf16.mxu0 0
      %1637 = vmatmul.mubr.bf16.gmra.mxu0 %v1310
      %v1638 = vpop.f32.mrf.mxu0
      %v1639 = vadd.f32 0.0, %v1638
      %v1640 = vpop.f32.mrf.mxu0
      %v1641 = vpop.f32.mrf.mxu0
      %v1642 = vadd.f32 0.0, %v1641
      %v1643 = vpop.f32.mrf.mxu0
      %1644 = vmatprep.mubr.bf16.mxu0 0
      %1645 = vmatmul.mubr.bf16.gmra.mxu0 %v1313
      %v1646 = vpop.f32.mrf.mxu0
      %v1647 = vadd.f32 0.0, %v1646
      %v1648 = vpop.f32.mrf.mxu0
      %v1649 = vpop.f32.mrf.mxu0
      %v1650 = vadd.f32 0.0, %v1649
      %v1651 = vpop.f32.mrf.mxu0
      %1652 = vmatprep.mubr.bf16.mxu0 0
      %1653 = vmatmul.mubr.bf16.gmra.mxu0 %v1316
      %v1654 = vpop.f32.mrf.mxu0
      %v1655 = vadd.f32 0.0, %v1654
      %v1656 = vpop.f32.mrf.mxu0
      %v1657 = vpop.f32.mrf.mxu0
      %v1658 = vadd.f32 0.0, %v1657
      %v1659 = vpop.f32.mrf.mxu0
      %1660 = vmatprep.mubr.bf16.mxu0 0
      %1661 = vmatmul.mubr.bf16.gmra.mxu0 %v1319
      %v1662 = vpop.f32.mrf.mxu0
      %v1663 = vadd.f32 0.0, %v1662
      %v1664 = vpop.f32.mrf.mxu0
      %v1665 = vpop.f32.mrf.mxu0
      %v1666 = vadd.f32 0.0, %v1665
      %v1667 = vpop.f32.mrf.mxu0
      %1668 = vmatprep.mubr.bf16.mxu0 0
      %1669 = vmatmul.mubr.bf16.gmra.mxu0 %v1322
      %v1670 = vpop.f32.mrf.mxu0
      %v1671 = vadd.f32 0.0, %v1670
      %v1672 = vpop.f32.mrf.mxu0
      %v1673 = vpop.f32.mrf.mxu0
      %v1674 = vadd.f32 0.0, %v1673
      %v1675 = vpop.f32.mrf.mxu0
      %1676 = vmatprep.mubr.bf16.mxu0 0
      %1677 = vmatmul.mubr.bf16.gmra.mxu0 %v1325
      %v1678 = vpop.f32.mrf.mxu0
      %v1679 = vadd.f32 0.0, %v1678
      %v1680 = vpop.f32.mrf.mxu0
      %v1681 = vpop.f32.mrf.mxu0
      %v1682 = vadd.f32 0.0, %v1681
      %v1683 = vpop.f32.mrf.mxu0
      %1684 = vmatprep.mubr.bf16.mxu0 0
      %1685 = vmatmul.mubr.bf16.gmra.mxu0 %v1328
      %v1686 = vpop.f32.mrf.mxu0
      %v1687 = vadd.f32 0.0, %v1686
      %v1688 = vpop.f32.mrf.mxu0
      %v1689 = vpop.f32.mrf.mxu0
      %v1690 = vadd.f32 0.0, %v1689
      %v1691 = vpop.f32.mrf.mxu0
      %1692 = vmatprep.mubr.bf16.mxu0 0
      %1693 = vmatmul.mubr.bf16.gmra.mxu0 %v1331
      %v1694 = vpop.f32.mrf.mxu0
      %v1695 = vadd.f32 0.0, %v1694
      %v1696 = vpop.f32.mrf.mxu0
      %v1697 = vpop.f32.mrf.mxu0
      %v1698 = vadd.f32 0.0, %v1697
      %v1699 = vpop.f32.mrf.mxu0
      %1700 = vmatprep.mubr.bf16.mxu0 0
      %1701 = vmatmul.mubr.bf16.gmra.mxu0 %v1334
      %v1702 = vpop.f32.mrf.mxu0
      %v1703 = vadd.f32 0.0, %v1702
      %v1704 = vpop.f32.mrf.mxu0
      %v1705 = vpop.f32.mrf.mxu0
      %v1706 = vadd.f32 0.0, %v1705
      %v1707 = vpop.f32.mrf.mxu0
      %1708 = vmatprep.mubr.bf16.mxu0 0
      %1709 = vmatmul.mubr.bf16.gmra.mxu0 %v1337
      %v1710 = vpop.f32.mrf.mxu0
      %v1711 = vadd.f32 0.0, %v1710
      %v1712 = vpop.f32.mrf.mxu0
      %v1713 = vpop.f32.mrf.mxu0
      %v1714 = vadd.f32 0.0, %v1713
      %v1715 = vpop.f32.mrf.mxu0
      %1716 = vmatprep.mubr.bf16.mxu0 0
      %1717 = vmatmul.mubr.bf16.gmra.mxu0 %v1340
      %v1718 = vpop.f32.mrf.mxu0
      %v1719 = vadd.f32 0.0, %v1718
      %v1720 = vpop.f32.mrf.mxu0
      %v1721 = vpop.f32.mrf.mxu0
      %v1722 = vadd.f32 0.0, %v1721
      %v1723 = vpop.f32.mrf.mxu0
      %1724 = vmatprep.mubr.bf16.mxu0 0
      %1725 = vmatmul.mubr.bf16.gmra.mxu0 %v1343
      %v1726 = vpop.f32.mrf.mxu0
      %v1727 = vadd.f32 0.0, %v1726
      %v1728 = vpop.f32.mrf.mxu0
      %v1729 = vpop.f32.mrf.mxu0
      %v1730 = vadd.f32 0.0, %v1729
      %v1731 = vpop.f32.mrf.mxu0
      %1732 = vmatprep.mubr.bf16.mxu0 0
      %1733 = vmatmul.mubr.bf16.gmra.mxu0 %v1346
      %v1734 = vpop.f32.mrf.mxu0
      %v1735 = vadd.f32 0.0, %v1734
      %v1736 = vpop.f32.mrf.mxu0
      %v1737 = vpop.f32.mrf.mxu0
      %v1738 = vadd.f32 0.0, %v1737
      %v1739 = vpop.f32.mrf.mxu0
      %1740 = vmatprep.mubr.bf16.mxu0 0
      %1741 = vmatmul.mubr.bf16.gmra.mxu0 %v1349
      %v1742 = vpop.f32.mrf.mxu0
      %v1743 = vadd.f32 0.0, %v1742
      %v1744 = vpop.f32.mrf.mxu0
      %v1745 = vpop.f32.mrf.mxu0
      %v1746 = vadd.f32 0.0, %v1745
      %v1747 = vpop.f32.mrf.mxu0
      %1748 = vmatprep.mubr.bf16.mxu0 0
      %1749 = vmatmul.mubr.bf16.gmra.mxu0 %v1352
      %v1750 = vpop.f32.mrf.mxu0
      %v1751 = vadd.f32 0.0, %v1750
      %v1752 = vpop.f32.mrf.mxu0
      %v1753 = vpop.f32.mrf.mxu0
      %v1754 = vadd.f32 0.0, %v1753
      %v1755 = vpop.f32.mrf.mxu0
      %1756 = vmatprep.mubr.bf16.mxu0 0
      %1757 = vmatmul.mubr.bf16.gmra.mxu0 %v1602
      %v1758 = vpop.f32.mrf.mxu0
      %v1759 = vadd.f32 0.0, %v1758
      %v1760 = vpop.f32.mrf.mxu0
      %v1761 = vpop.f32.mrf.mxu0
      %v1762 = vadd.f32 0.0, %v1761
      %v1763 = vpop.f32.mrf.mxu0
      %1764 = vdwg.mxu0
      %v1765 = vadd.f32 %v1515, %v1639
      %v1766 = vadd.f32 %v1516, %v1642
      %v1767 = vadd.f32 %v1517, %v1647
      %v1768 = vadd.f32 %v1518, %v1650
      %v1769 = vadd.f32 %v1519, %v1655
      %v1770 = vadd.f32 %v1520, %v1658
      %v1771 = vadd.f32 %v1521, %v1663
      %v1772 = vadd.f32 %v1522, %v1666
      %v1773 = vadd.f32 %v1523, %v1671
      %v1774 = vadd.f32 %v1524, %v1674
      %v1775 = vadd.f32 %v1525, %v1679
      %v1776 = vadd.f32 %v1526, %v1682
      %v1777 = vadd.f32 %v1527, %v1687
      %v1778 = vadd.f32 %v1528, %v1690
      %v1779 = vadd.f32 %v1529, %v1695
      %v1780 = vadd.f32 %v1530, %v1698
      %v1781 = vadd.f32 %v1531, %v1703
      %v1782 = vadd.f32 %v1532, %v1706
      %v1783 = vadd.f32 %v1533, %v1711
      %v1784 = vadd.f32 %v1534, %v1714
      %v1785 = vadd.f32 %v1535, %v1719
      %v1786 = vadd.f32 %v1536, %v1722
      %v1787 = vadd.f32 %v1537, %v1727
      %v1788 = vadd.f32 %v1538, %v1730
      %v1789 = vadd.f32 %v1539, %v1735
      %v1790 = vadd.f32 %v1540, %v1738
      %v1791 = vadd.f32 %v1541, %v1743
      %v1792 = vadd.f32 %v1542, %v1746
      %v1793 = vadd.f32 %v1543, %v1751
      %v1794 = vadd.f32 %v1544, %v1754
      %v1795 = vadd.f32 %v1545, %v1759
      %v1796 = vadd.f32 %v1546, %v1762
      %s1797 = scalar_lea.vmem %s3, 96
      %v1798 = vld [vmem:[%s1797] sm:$0xf]
      %v1799 = vld [vmem:[%s1797 + $0x4] sm:$0xf]
      %v1800 = vld [vmem:[%s1797 + $0x8] sm:$0xf]
      %v1801 = vld [vmem:[%s1797 + $0xc] sm:$0xf]
      %v1802 = vld [vmem:[%s1797 + $0x10] sm:$0xf]
      %v1803 = vld [vmem:[%s1797 + $0x14] sm:$0xf]
      %v1804 = vld [vmem:[%s1797 + $0x18] sm:$0xf]
      %v1805 = vld [vmem:[%s1797 + $0x1c] sm:$0xf]
      %v1806 = vld [vmem:[%s1797 + $0x20] sm:$0xf]
      %v1807 = vld [vmem:[%s1797 + $0x24] sm:$0xf]
      %v1808 = vld [vmem:[%s1797 + $0x28] sm:$0xf]
      %v1809 = vld [vmem:[%s1797 + $0x2c] sm:$0xf]
      %v1812 = vunpack.c.l.b16 %v1176
      %v1813 = vunpack.c.l.b16 %v1177
      %v1814 = vpack.c.b16 %v1813, %v1812
      %v1827 = vunpack.c.l.b16 %v1798
      %v1828 = vunpack.c.l.b16 %v1799
      %v1829 = vunpack.c.l.b16 %v1800
      %v1830 = vunpack.c.l.b16 %v1801
      %v1831 = vunpack.c.l.b16 %v1802
      %v1832 = vunpack.c.l.b16 %v1803
      %v1833 = vunpack.c.l.b16 %v1804
      %v1834 = vunpack.c.l.b16 %v1805
      %v1835 = vunpack.c.l.b16 %v1806
      %v1836 = vunpack.c.l.b16 %v1807
      %v1837 = vunpack.c.l.b16 %v1808
      %v1838 = vunpack.c.l.b16 %v1809
      %v1839 = vpack.c.b16 %v1828, %v1827
      %v1840 = vpack.c.b16 %v1830, %v1829
      %v1841 = vpack.c.b16 %v1832, %v1831
      %v1842 = vpack.c.b16 %v1834, %v1833
      %v1843 = vpack.c.b16 %v1836, %v1835
      %v1844 = vpack.c.b16 %v1838, %v1837
      %v1852 = vsel %vm477, %v1814, 0
      %1854 = vmatprep.subr.bf16.mxu0 0
      %1855 = vmatpush1.bf16.msra.mxu0 0
      %1856 = vmatprep.subr.bf16.mxu0 0
      %1857 = vmatpush1.bf16.msra.mxu0 0
      %1858 = vmatprep.subr.bf16.mxu0 0
      %1859 = vmatpush1.bf16.msra.mxu0 %v1844
      %1860 = vmatprep.subr.bf16.mxu0 0
      %1861 = vmatpush1.bf16.msra.mxu0 %v1843
      %1862 = vmatprep.subr.bf16.mxu0 0
      %1863 = vmatpush1.bf16.msra.mxu0 %v1842
      %1864 = vmatprep.subr.bf16.mxu0 0
      %1865 = vmatpush1.bf16.msra.mxu0 %v1841
      %1866 = vmatprep.subr.bf16.mxu0 0
      %1867 = vmatpush1.bf16.msra.mxu0 %v1840
      %1868 = vmatprep.subr.bf16.mxu0 0
      %1869 = vmatpush1.bf16.msra.mxu0 %v1839
      %1870 = vmatprep.subr.bf16.mxu0 0
      %1871 = vmatpush2.bf16.msra.mxu0 0
      %1872 = vmatprep.subr.bf16.mxu0 0
      %1873 = vmatpush2.bf16.msra.mxu0 0
      %1874 = vmatprep.subr.bf16.mxu0 0
      %1875 = vmatpush2.bf16.msra.mxu0 0
      %1876 = vmatprep.subr.bf16.mxu0 0
      %1877 = vmatpush2.bf16.msra.mxu0 0
      %1878 = vmatprep.subr.bf16.mxu0 0
      %1879 = vmatpush2.bf16.msra.mxu0 0
      %1880 = vmatprep.subr.bf16.mxu0 0
      %1881 = vmatpush2.bf16.msra.mxu0 0
      %1882 = vmatprep.subr.bf16.mxu0 0
      %1883 = vmatpush2.bf16.msra.mxu0 0
      %1884 = vmatprep.subr.bf16.mxu0 0
      %1885 = vmatpush2.bf16.msra.mxu0 0
      %1886 = vmatprep.mubr.bf16.mxu0 0
      %1887 = vmatmul.mubr.bf16.gmra.mxu0 %v1313
      %v1888 = vpop.f32.mrf.mxu0
      %v1889 = vadd.f32 0.0, %v1888
      %v1890 = vpop.f32.mrf.mxu0
      %v1891 = vpop.f32.mrf.mxu0
      %v1892 = vadd.f32 0.0, %v1891
      %v1893 = vpop.f32.mrf.mxu0
      %1894 = vmatprep.mubr.bf16.mxu0 0
      %1895 = vmatmul.mubr.bf16.gmra.mxu0 %v1316
      %v1896 = vpop.f32.mrf.mxu0
      %v1897 = vadd.f32 0.0, %v1896
      %v1898 = vpop.f32.mrf.mxu0
      %v1899 = vpop.f32.mrf.mxu0
      %v1900 = vadd.f32 0.0, %v1899
      %v1901 = vpop.f32.mrf.mxu0
      %1902 = vmatprep.mubr.bf16.mxu0 0
      %1903 = vmatmul.mubr.bf16.gmra.mxu0 %v1319
      %v1904 = vpop.f32.mrf.mxu0
      %v1905 = vadd.f32 0.0, %v1904
      %v1906 = vpop.f32.mrf.mxu0
      %v1907 = vpop.f32.mrf.mxu0
      %v1908 = vadd.f32 0.0, %v1907
      %v1909 = vpop.f32.mrf.mxu0
      %1910 = vmatprep.mubr.bf16.mxu0 0
      %1911 = vmatmul.mubr.bf16.gmra.mxu0 %v1322
      %v1912 = vpop.f32.mrf.mxu0
      %v1913 = vadd.f32 0.0, %v1912
      %v1914 = vpop.f32.mrf.mxu0
      %v1915 = vpop.f32.mrf.mxu0
      %v1916 = vadd.f32 0.0, %v1915
      %v1917 = vpop.f32.mrf.mxu0
      %1918 = vmatprep.mubr.bf16.mxu0 0
      %1919 = vmatmul.mubr.bf16.gmra.mxu0 %v1325
      %v1920 = vpop.f32.mrf.mxu0
      %v1921 = vadd.f32 0.0, %v1920
      %v1922 = vpop.f32.mrf.mxu0
      %v1923 = vpop.f32.mrf.mxu0
      %v1924 = vadd.f32 0.0, %v1923
      %v1925 = vpop.f32.mrf.mxu0
      %1926 = vmatprep.mubr.bf16.mxu0 0
      %1927 = vmatmul.mubr.bf16.gmra.mxu0 %v1328
      %v1928 = vpop.f32.mrf.mxu0
      %v1929 = vadd.f32 0.0, %v1928
      %v1930 = vpop.f32.mrf.mxu0
      %v1931 = vpop.f32.mrf.mxu0
      %v1932 = vadd.f32 0.0, %v1931
      %v1933 = vpop.f32.mrf.mxu0
      %1934 = vmatprep.mubr.bf16.mxu0 0
      %1935 = vmatmul.mubr.bf16.gmra.mxu0 %v1331
      %v1936 = vpop.f32.mrf.mxu0
      %v1937 = vadd.f32 0.0, %v1936
      %v1938 = vpop.f32.mrf.mxu0
      %v1939 = vpop.f32.mrf.mxu0
      %v1940 = vadd.f32 0.0, %v1939
      %v1941 = vpop.f32.mrf.mxu0
      %1942 = vmatprep.mubr.bf16.mxu0 0
      %1943 = vmatmul.mubr.bf16.gmra.mxu0 %v1334
      %v1944 = vpop.f32.mrf.mxu0
      %v1945 = vadd.f32 0.0, %v1944
      %v1946 = vpop.f32.mrf.mxu0
      %v1947 = vpop.f32.mrf.mxu0
      %v1948 = vadd.f32 0.0, %v1947
      %v1949 = vpop.f32.mrf.mxu0
      %1950 = vmatprep.mubr.bf16.mxu0 0
      %1951 = vmatmul.mubr.bf16.gmra.mxu0 %v1337
      %v1952 = vpop.f32.mrf.mxu0
      %v1953 = vadd.f32 0.0, %v1952
      %v1954 = vpop.f32.mrf.mxu0
      %v1955 = vpop.f32.mrf.mxu0
      %v1956 = vadd.f32 0.0, %v1955
      %v1957 = vpop.f32.mrf.mxu0
      %1958 = vmatprep.mubr.bf16.mxu0 0
      %1959 = vmatmul.mubr.bf16.gmra.mxu0 %v1340
      %v1960 = vpop.f32.mrf.mxu0
      %v1961 = vadd.f32 0.0, %v1960
      %v1962 = vpop.f32.mrf.mxu0
      %v1963 = vpop.f32.mrf.mxu0
      %v1964 = vadd.f32 0.0, %v1963
      %v1965 = vpop.f32.mrf.mxu0
      %1966 = vmatprep.mubr.bf16.mxu0 0
      %1967 = vmatmul.mubr.bf16.gmra.mxu0 %v1343
      %v1968 = vpop.f32.mrf.mxu0
      %v1969 = vadd.f32 0.0, %v1968
      %v1970 = vpop.f32.mrf.mxu0
      %v1971 = vpop.f32.mrf.mxu0
      %v1972 = vadd.f32 0.0, %v1971
      %v1973 = vpop.f32.mrf.mxu0
      %1974 = vmatprep.mubr.bf16.mxu0 0
      %1975 = vmatmul.mubr.bf16.gmra.mxu0 %v1346
      %v1976 = vpop.f32.mrf.mxu0
      %v1977 = vadd.f32 0.0, %v1976
      %v1978 = vpop.f32.mrf.mxu0
      %v1979 = vpop.f32.mrf.mxu0
      %v1980 = vadd.f32 0.0, %v1979
      %v1981 = vpop.f32.mrf.mxu0
      %1982 = vmatprep.mubr.bf16.mxu0 0
      %1983 = vmatmul.mubr.bf16.gmra.mxu0 %v1349
      %v1984 = vpop.f32.mrf.mxu0
      %v1985 = vadd.f32 0.0, %v1984
      %v1986 = vpop.f32.mrf.mxu0
      %v1987 = vpop.f32.mrf.mxu0
      %v1988 = vadd.f32 0.0, %v1987
      %v1989 = vpop.f32.mrf.mxu0
      %1990 = vmatprep.mubr.bf16.mxu0 0
      %1991 = vmatmul.mubr.bf16.gmra.mxu0 %v1352
      %v1992 = vpop.f32.mrf.mxu0
      %v1993 = vadd.f32 0.0, %v1992
      %v1994 = vpop.f32.mrf.mxu0
      %v1995 = vpop.f32.mrf.mxu0
      %v1996 = vadd.f32 0.0, %v1995
      %v1997 = vpop.f32.mrf.mxu0
      %1998 = vmatprep.mubr.bf16.mxu0 0
      %1999 = vmatmul.mubr.bf16.gmra.mxu0 %v1602
      %v2000 = vpop.f32.mrf.mxu0
      %v2001 = vadd.f32 0.0, %v2000
      %v2002 = vpop.f32.mrf.mxu0
      %v2003 = vpop.f32.mrf.mxu0
      %v2004 = vadd.f32 0.0, %v2003
      %v2005 = vpop.f32.mrf.mxu0
      %2006 = vmatprep.mubr.bf16.mxu0 0
      %2007 = vmatmul.mubr.bf16.gmra.mxu0 %v1852
      %v2008 = vpop.f32.mrf.mxu0
      %v2009 = vadd.f32 0.0, %v2008
      %v2010 = vpop.f32.mrf.mxu0
      %v2011 = vpop.f32.mrf.mxu0
      %v2012 = vadd.f32 0.0, %v2011
      %v2013 = vpop.f32.mrf.mxu0
      %2014 = vdwg.mxu0
      %v2015 = vadd.f32 %v1765, %v1889
      %v2016 = vadd.f32 %v1766, %v1892
      %v2017 = vadd.f32 %v1767, %v1897
      %v2018 = vadd.f32 %v1768, %v1900
      %v2019 = vadd.f32 %v1769, %v1905
      %v2020 = vadd.f32 %v1770, %v1908
      %v2021 = vadd.f32 %v1771, %v1913
      %v2022 = vadd.f32 %v1772, %v1916
      %v2023 = vadd.f32 %v1773, %v1921
      %v2024 = vadd.f32 %v1774, %v1924
      %v2025 = vadd.f32 %v1775, %v1929
      %v2026 = vadd.f32 %v1776, %v1932
      %v2027 = vadd.f32 %v1777, %v1937
      %v2028 = vadd.f32 %v1778, %v1940
      %v2029 = vadd.f32 %v1779, %v1945
      %v2030 = vadd.f32 %v1780, %v1948
      %v2031 = vadd.f32 %v1781, %v1953
      %v2032 = vadd.f32 %v1782, %v1956
      %v2033 = vadd.f32 %v1783, %v1961
      %v2034 = vadd.f32 %v1784, %v1964
      %v2035 = vadd.f32 %v1785, %v1969
      %v2036 = vadd.f32 %v1786, %v1972
      %v2037 = vadd.f32 %v1787, %v1977
      %v2038 = vadd.f32 %v1788, %v1980
      %v2039 = vadd.f32 %v1789, %v1985
      %v2040 = vadd.f32 %v1790, %v1988
      %v2041 = vadd.f32 %v1791, %v1993
      %v2042 = vadd.f32 %v1792, %v1996
      %v2043 = vadd.f32 %v1793, %v2001
      %v2044 = vadd.f32 %v1794, %v2004
      %v2045 = vadd.f32 %v1795, %v2009
      %v2046 = vadd.f32 %v1796, %v2012
      %v2047 = vld [vmem:[%s4] sm:$0x1]
      %v2049 = vlaneseq
      %v2050 = vshrl.u32 %v2049, 7
      %v2051 = vsub.s32 0, %v2050
      %v2052 = vrot.slane %v2047, %v2051
      %v2054 = vadd.f32 %v2015, %v2052
      %v2055 = vadd.f32 %v2016, %v2052
      %v2056 = vadd.f32 %v2017, %v2052
      %v2057 = vadd.f32 %v2018, %v2052
      %v2058 = vadd.f32 %v2019, %v2052
      %v2059 = vadd.f32 %v2020, %v2052
      %v2060 = vadd.f32 %v2021, %v2052
      %v2061 = vadd.f32 %v2022, %v2052
      %v2062 = vadd.f32 %v2023, %v2052
      %v2063 = vadd.f32 %v2024, %v2052
      %v2064 = vadd.f32 %v2025, %v2052
      %v2065 = vadd.f32 %v2026, %v2052
      %v2066 = vadd.f32 %v2027, %v2052
      %v2067 = vadd.f32 %v2028, %v2052
      %v2068 = vadd.f32 %v2029, %v2052
      %v2069 = vadd.f32 %v2030, %v2052
      %v2070 = vadd.f32 %v2031, %v2052
      %v2071 = vadd.f32 %v2032, %v2052
      %v2072 = vadd.f32 %v2033, %v2052
      %v2073 = vadd.f32 %v2034, %v2052
      %v2074 = vadd.f32 %v2035, %v2052
      %v2075 = vadd.f32 %v2036, %v2052
      %v2076 = vadd.f32 %v2037, %v2052
      %v2077 = vadd.f32 %v2038, %v2052
      %v2078 = vadd.f32 %v2039, %v2052
      %v2079 = vadd.f32 %v2040, %v2052
      %v2080 = vadd.f32 %v2041, %v2052
      %v2081 = vadd.f32 %v2042, %v2052
      %v2082 = vadd.f32 %v2043, %v2052
      %v2083 = vadd.f32 %v2044, %v2052
      %v2084 = vadd.f32 %v2045, %v2052
      %v2085 = vadd.f32 %v2046, %v2052
      %v2086 = vmax.f32 %v2054, 0.0
      %v2087 = vmax.f32 %v2055, 0.0
      %v2088 = vmax.f32 %v2056, 0.0
      %v2089 = vmax.f32 %v2057, 0.0
      %v2090 = vmax.f32 %v2058, 0.0
      %v2091 = vmax.f32 %v2059, 0.0
      %v2092 = vmax.f32 %v2060, 0.0
      %v2093 = vmax.f32 %v2061, 0.0
      %v2094 = vmax.f32 %v2062, 0.0
      %v2095 = vmax.f32 %v2063, 0.0
      %v2096 = vmax.f32 %v2064, 0.0
      %v2097 = vmax.f32 %v2065, 0.0
      %v2098 = vmax.f32 %v2066, 0.0
      %v2099 = vmax.f32 %v2067, 0.0
      %v2100 = vmax.f32 %v2068, 0.0
      %v2101 = vmax.f32 %v2069, 0.0
      %v2102 = vmax.f32 %v2070, 0.0
      %v2103 = vmax.f32 %v2071, 0.0
      %v2104 = vmax.f32 %v2072, 0.0
      %v2105 = vmax.f32 %v2073, 0.0
      %v2106 = vmax.f32 %v2074, 0.0
      %v2107 = vmax.f32 %v2075, 0.0
      %v2108 = vmax.f32 %v2076, 0.0
      %v2109 = vmax.f32 %v2077, 0.0
      %v2110 = vmax.f32 %v2078, 0.0
      %v2111 = vmax.f32 %v2079, 0.0
      %v2112 = vmax.f32 %v2080, 0.0
      %v2113 = vmax.f32 %v2081, 0.0
      %v2114 = vmax.f32 %v2082, 0.0
      %v2115 = vmax.f32 %v2083, 0.0
      %v2116 = vmax.f32 %v2084, 0.0
      %v2117 = vmax.f32 %v2085, 0.0
      %v2118 = vpack.c.bf16 %v2087, %v2086
      %v2119 = vpack.c.bf16 %v2089, %v2088
      %v2120 = vpack.c.bf16 %v2091, %v2090
      %v2121 = vpack.c.bf16 %v2093, %v2092
      %v2122 = vpack.c.bf16 %v2095, %v2094
      %v2123 = vpack.c.bf16 %v2097, %v2096
      %v2124 = vpack.c.bf16 %v2099, %v2098
      %v2125 = vpack.c.bf16 %v2101, %v2100
      %v2126 = vpack.c.bf16 %v2103, %v2102
      %v2127 = vpack.c.bf16 %v2105, %v2104
      %v2128 = vpack.c.bf16 %v2107, %v2106
      %v2129 = vpack.c.bf16 %v2109, %v2108
      %v2130 = vpack.c.bf16 %v2111, %v2110
      %v2131 = vpack.c.bf16 %v2113, %v2112
      %v2132 = vpack.c.bf16 %v2115, %v2114
      %v2133 = vpack.c.bf16 %v2117, %v2116
      %v2134 = vld [vmem:[%s5] sm:$0xf]
      %v2135 = vld [vmem:[%s5 + $0x4] sm:$0xf]
      %v2136 = vld [vmem:[%s5 + $0x8] sm:$0xf]
      %v2137 = vld [vmem:[%s5 + $0xc] sm:$0xf]
      %v2138 = vld [vmem:[%s6] sm:$0x1]
      %v2140 = vlaneseq
      %v2141 = vshrl.u32 %v2140, 7
      %v2142 = vsub.s32 0, %v2141
      %v2143 = vrot.slane %v2138, %v2142
      %v2149 = vunpack.c.l.b16 %v2134
      %v2150 = vunpack.c.l.b16 %v2135
      %v2151 = vunpack.c.l.b16 %v2136
      %v2152 = vunpack.c.l.b16 %v2137
      %v2153 = vpack.c.b16 %v2150, %v2149
      %v2154 = vpack.c.b16 %v2152, %v2151
      %vm2157 = vcmask 261120
      %v2159 = vsel %vm2157, %v2118, 0
      %v2162 = vsel %vm2157, %v2119, 0
      %v2165 = vsel %vm2157, %v2120, 0
      %v2168 = vsel %vm2157, %v2121, 0
      %v2171 = vsel %vm2157, %v2122, 0
      %v2174 = vsel %vm2157, %v2123, 0
      %v2177 = vsel %vm2157, %v2124, 0
      %v2180 = vsel %vm2157, %v2125, 0
      %v2183 = vsel %vm2157, %v2126, 0
      %v2186 = vsel %vm2157, %v2127, 0
      %v2189 = vsel %vm2157, %v2128, 0
      %v2192 = vsel %vm2157, %v2129, 0
      %v2195 = vsel %vm2157, %v2130, 0
      %v2198 = vsel %vm2157, %v2131, 0
      %v2201 = vsel %vm2157, %v2132, 0
      %v2204 = vsel %vm2157, %v2133, 0
      %2206 = vmatprep.subr.bf16.mxu0 0
      %2207 = vmatpush1.bf16.msra.mxu0 0
      %2208 = vmatprep.subr.bf16.mxu0 0
      %2209 = vmatpush1.bf16.msra.mxu0 0
      %2210 = vmatprep.subr.bf16.mxu0 0
      %2211 = vmatpush1.bf16.msra.mxu0 0
      %2212 = vmatprep.subr.bf16.mxu0 0
      %2213 = vmatpush1.bf16.msra.mxu0 0
      %2214 = vmatprep.subr.bf16.mxu0 0
      %2215 = vmatpush1.bf16.msra.mxu0 0
      %2216 = vmatprep.subr.bf16.mxu0 0
      %2217 = vmatpush1.bf16.msra.mxu0 0
      %2218 = vmatprep.subr.bf16.mxu0 0
      %2219 = vmatpush1.bf16.msra.mxu0 %v2154
      %2220 = vmatprep.subr.bf16.mxu0 0
      %2221 = vmatpush1.bf16.msra.mxu0 %v2153
      %2222 = vmatprep.subr.bf16.mxu0 0
      %2223 = vmatpush2.bf16.msra.mxu0 0
      %2224 = vmatprep.subr.bf16.mxu0 0
      %2225 = vmatpush2.bf16.msra.mxu0 0
      %2226 = vmatprep.subr.bf16.mxu0 0
      %2227 = vmatpush2.bf16.msra.mxu0 0
      %2228 = vmatprep.subr.bf16.mxu0 0
      %2229 = vmatpush2.bf16.msra.mxu0 0
      %2230 = vmatprep.subr.bf16.mxu0 0
      %2231 = vmatpush2.bf16.msra.mxu0 0
      %2232 = vmatprep.subr.bf16.mxu0 0
      %2233 = vmatpush2.bf16.msra.mxu0 0
      %2234 = vmatprep.subr.bf16.mxu0 0
      %2235 = vmatpush2.bf16.msra.mxu0 0
      %2236 = vmatprep.subr.bf16.mxu0 0
      %2237 = vmatpush2.bf16.msra.mxu0 0
      %2238 = vmatprep.mubr.bf16.mxu0 0
      %2239 = vmatmul.mubr.bf16.gmra.mxu0 %v2159
      %v2240 = vpop.f32.mrf.mxu0
      %v2241 = vadd.f32 %v2143, %v2240
      %v2242 = vpop.f32.mrf.mxu0
      %v2243 = vpop.f32.mrf.mxu0
      %v2244 = vadd.f32 %v2143, %v2243
      %v2245 = vpop.f32.mrf.mxu0
      %2246 = vmatprep.mubr.bf16.mxu0 0
      %2247 = vmatmul.mubr.bf16.gmra.mxu0 %v2162
      %v2248 = vpop.f32.mrf.mxu0
      %v2249 = vadd.f32 %v2143, %v2248
      %v2250 = vpop.f32.mrf.mxu0
      %v2251 = vpop.f32.mrf.mxu0
      %v2252 = vadd.f32 %v2143, %v2251
      %v2253 = vpop.f32.mrf.mxu0
      %2254 = vmatprep.mubr.bf16.mxu0 0
      %2255 = vmatmul.mubr.bf16.gmra.mxu0 %v2165
      %v2256 = vpop.f32.mrf.mxu0
      %v2257 = vadd.f32 %v2143, %v2256
      %v2258 = vpop.f32.mrf.mxu0
      %v2259 = vpop.f32.mrf.mxu0
      %v2260 = vadd.f32 %v2143, %v2259
      %v2261 = vpop.f32.mrf.mxu0
      %2262 = vmatprep.mubr.bf16.mxu0 0
      %2263 = vmatmul.mubr.bf16.gmra.mxu0 %v2168
      %v2264 = vpop.f32.mrf.mxu0
      %v2265 = vadd.f32 %v2143, %v2264
      %v2266 = vpop.f32.mrf.mxu0
      %v2267 = vpop.f32.mrf.mxu0
      %v2268 = vadd.f32 %v2143, %v2267
      %v2269 = vpop.f32.mrf.mxu0
      %2270 = vmatprep.mubr.bf16.mxu0 0
      %2271 = vmatmul.mubr.bf16.gmra.mxu0 %v2171
      %v2272 = vpop.f32.mrf.mxu0
      %v2273 = vadd.f32 %v2143, %v2272
      %v2274 = vpop.f32.mrf.mxu0
      %v2275 = vpop.f32.mrf.mxu0
      %v2276 = vadd.f32 %v2143, %v2275
      %v2277 = vpop.f32.mrf.mxu0
      %2278 = vmatprep.mubr.bf16.mxu0 0
      %2279 = vmatmul.mubr.bf16.gmra.mxu0 %v2174
      %v2280 = vpop.f32.mrf.mxu0
      %v2281 = vadd.f32 %v2143, %v2280
      %v2282 = vpop.f32.mrf.mxu0
      %v2283 = vpop.f32.mrf.mxu0
      %v2284 = vadd.f32 %v2143, %v2283
      %v2285 = vpop.f32.mrf.mxu0
      %2286 = vmatprep.mubr.bf16.mxu0 0
      %2287 = vmatmul.mubr.bf16.gmra.mxu0 %v2177
      %v2288 = vpop.f32.mrf.mxu0
      %v2289 = vadd.f32 %v2143, %v2288
      %v2290 = vpop.f32.mrf.mxu0
      %v2291 = vpop.f32.mrf.mxu0
      %v2292 = vadd.f32 %v2143, %v2291
      %v2293 = vpop.f32.mrf.mxu0
      %2294 = vmatprep.mubr.bf16.mxu0 0
      %2295 = vmatmul.mubr.bf16.gmra.mxu0 %v2180
      %v2296 = vpop.f32.mrf.mxu0
      %v2297 = vadd.f32 %v2143, %v2296
      %v2298 = vpop.f32.mrf.mxu0
      %v2299 = vpop.f32.mrf.mxu0
      %v2300 = vadd.f32 %v2143, %v2299
      %v2301 = vpop.f32.mrf.mxu0
      %2302 = vmatprep.mubr.bf16.mxu0 0
      %2303 = vmatmul.mubr.bf16.gmra.mxu0 %v2183
      %v2304 = vpop.f32.mrf.mxu0
      %v2305 = vadd.f32 %v2143, %v2304
      %v2306 = vpop.f32.mrf.mxu0
      %v2307 = vpop.f32.mrf.mxu0
      %v2308 = vadd.f32 %v2143, %v2307
      %v2309 = vpop.f32.mrf.mxu0
      %2310 = vmatprep.mubr.bf16.mxu0 0
      %2311 = vmatmul.mubr.bf16.gmra.mxu0 %v2186
      %v2312 = vpop.f32.mrf.mxu0
      %v2313 = vadd.f32 %v2143, %v2312
      %v2314 = vpop.f32.mrf.mxu0
      %v2315 = vpop.f32.mrf.mxu0
      %v2316 = vadd.f32 %v2143, %v2315
      %v2317 = vpop.f32.mrf.mxu0
      %2318 = vmatprep.mubr.bf16.mxu0 0
      %2319 = vmatmul.mubr.bf16.gmra.mxu0 %v2189
      %v2320 = vpop.f32.mrf.mxu0
      %v2321 = vadd.f32 %v2143, %v2320
      %v2322 = vpop.f32.mrf.mxu0
      %v2323 = vpop.f32.mrf.mxu0
      %v2324 = vadd.f32 %v2143, %v2323
      %v2325 = vpop.f32.mrf.mxu0
      %2326 = vmatprep.mubr.bf16.mxu0 0
      %2327 = vmatmul.mubr.bf16.gmra.mxu0 %v2192
      %v2328 = vpop.f32.mrf.mxu0
      %v2329 = vadd.f32 %v2143, %v2328
      %v2330 = vpop.f32.mrf.mxu0
      %v2331 = vpop.f32.mrf.mxu0
      %v2332 = vadd.f32 %v2143, %v2331
      %v2333 = vpop.f32.mrf.mxu0
      %2334 = vmatprep.mubr.bf16.mxu0 0
      %2335 = vmatmul.mubr.bf16.gmra.mxu0 %v2195
      %v2336 = vpop.f32.mrf.mxu0
      %v2337 = vadd.f32 %v2143, %v2336
      %v2338 = vpop.f32.mrf.mxu0
      %v2339 = vpop.f32.mrf.mxu0
      %v2340 = vadd.f32 %v2143, %v2339
      %v2341 = vpop.f32.mrf.mxu0
      %2342 = vmatprep.mubr.bf16.mxu0 0
      %2343 = vmatmul.mubr.bf16.gmra.mxu0 %v2198
      %v2344 = vpop.f32.mrf.mxu0
      %v2345 = vadd.f32 %v2143, %v2344
      %v2346 = vpop.f32.mrf.mxu0
      %v2347 = vpop.f32.mrf.mxu0
      %v2348 = vadd.f32 %v2143, %v2347
      %v2349 = vpop.f32.mrf.mxu0
      %2350 = vmatprep.mubr.bf16.mxu0 0
      %2351 = vmatmul.mubr.bf16.gmra.mxu0 %v2201
      %v2352 = vpop.f32.mrf.mxu0
      %v2353 = vadd.f32 %v2143, %v2352
      %v2354 = vpop.f32.mrf.mxu0
      %v2355 = vpop.f32.mrf.mxu0
      %v2356 = vadd.f32 %v2143, %v2355
      %v2357 = vpop.f32.mrf.mxu0
      %2358 = vmatprep.mubr.bf16.mxu0 0
      %2359 = vmatmul.mubr.bf16.gmra.mxu0 %v2204
      %v2360 = vpop.f32.mrf.mxu0
      %v2361 = vadd.f32 %v2143, %v2360
      %v2362 = vpop.f32.mrf.mxu0
      %v2363 = vpop.f32.mrf.mxu0
      %v2364 = vadd.f32 %v2143, %v2363
      %v2365 = vpop.f32.mrf.mxu0
      %2366 = vdwg.mxu0
      %vm2367 = vcmask 23552
      %2368 = vst.msk [vmem:[%s298] sm:$0xff] %vm2367, %v2241
      %2369 = vst.msk [vmem:[%s298 + $0x8] sm:$0xff] %vm2367, %v2244
      %2370 = vst.msk [vmem:[%s298 + $0x10] sm:$0xff] %vm2367, %v2249
      %2371 = vst.msk [vmem:[%s298 + $0x18] sm:$0xff] %vm2367, %v2252
      %2372 = vst.msk [vmem:[%s298 + $0x20] sm:$0xff] %vm2367, %v2257
      %2373 = vst.msk [vmem:[%s298 + $0x28] sm:$0xff] %vm2367, %v2260
      %2374 = vst.msk [vmem:[%s298 + $0x30] sm:$0xff] %vm2367, %v2265
      %2375 = vst.msk [vmem:[%s298 + $0x38] sm:$0xff] %vm2367, %v2268
      %2376 = vst.msk [vmem:[%s298 + $0x40] sm:$0xff] %vm2367, %v2273
      %2377 = vst.msk [vmem:[%s298 + $0x48] sm:$0xff] %vm2367, %v2276
      %2378 = vst.msk [vmem:[%s298 + $0x50] sm:$0xff] %vm2367, %v2281
      %2379 = vst.msk [vmem:[%s298 + $0x58] sm:$0xff] %vm2367, %v2284
      %2380 = vst.msk [vmem:[%s298 + $0x60] sm:$0xff] %vm2367, %v2289
      %2381 = vst.msk [vmem:[%s298 + $0x68] sm:$0xff] %vm2367, %v2292
      %2382 = vst.msk [vmem:[%s298 + $0x70] sm:$0xff] %vm2367, %v2297
      %2383 = vst.msk [vmem:[%s298 + $0x78] sm:$0xff] %vm2367, %v2300
      %2384 = vst.msk [vmem:[%s298 + $0x80] sm:$0xff] %vm2367, %v2305
      %2385 = vst.msk [vmem:[%s298 + $0x88] sm:$0xff] %vm2367, %v2308
      %2386 = vst.msk [vmem:[%s298 + $0x90] sm:$0xff] %vm2367, %v2313
      %2387 = vst.msk [vmem:[%s298 + $0x98] sm:$0xff] %vm2367, %v2316
      %2388 = vst.msk [vmem:[%s298 + $0xa0] sm:$0xff] %vm2367, %v2321
      %2389 = vst.msk [vmem:[%s298 + $0xa8] sm:$0xff] %vm2367, %v2324
      %2390 = vst.msk [vmem:[%s298 + $0xb0] sm:$0xff] %vm2367, %v2329
      %2391 = vst.msk [vmem:[%s298 + $0xb8] sm:$0xff] %vm2367, %v2332
      %2392 = vst.msk [vmem:[%s298 + $0xc0] sm:$0xff] %vm2367, %v2337
      %2393 = vst.msk [vmem:[%s298 + $0xc8] sm:$0xff] %vm2367, %v2340
      %2394 = vst.msk [vmem:[%s298 + $0xd0] sm:$0xff] %vm2367, %v2345
      %2395 = vst.msk [vmem:[%s298 + $0xd8] sm:$0xff] %vm2367, %v2348
      %2396 = vst.msk [vmem:[%s298 + $0xe0] sm:$0xff] %vm2367, %v2353
      %2397 = vst.msk [vmem:[%s298 + $0xe8] sm:$0xff] %vm2367, %v2356
      %2398 = vst.msk [vmem:[%s298 + $0xf0] sm:$0xff] %vm2367, %v2361
      %2399 = vst.msk [vmem:[%s298 + $0xf8] sm:$0xff] %vm2367, %v2364
      %p2400 = scmp.lt.s32.totalorder %s18, 1
      %s2401 = scalar_select %p2400, %s18, 1
      %s2402 = smul.addr %s2401, 32
      %s2403 = smul.addr %s2402, 8
      %s2404 = scalar_lea.vmem %s7, %s2403
      // Predicated region
      $region49: #{_lambda_.15} parent=47 // pred_check
        %p2405 = pneg %p193
      $region50: #{_lambda_.15} parent=47 // pred_check_branch
        %2407 = sbr.rel (%p2405) target = $region52
      $region51: #{_lambda_.15} parent=47 // pred_region
        _
      $region52: #{_lambda_.15} parent=47 // pred_fallthru
        _
    $region48: #{_lambda_.15} parent=5 // pred_fallthru
      _
    %p2408 = scmp.le.s32.totalorder 2, %s13
    // Predicated region
    $region53: #{_lambda_.15} parent=5 // pred_check
      %p2409 = pneg %p2408
    $region54: #{_lambda_.15} parent=5 // pred_check_branch
      %2411 = sbr.rel (%p2409) target = $region56
    $region55: #{_lambda_.15} parent=5 // pred_region
      %s2412 = ssub.s32 %s13, 2
      // Predicated region
      $region57: #{_lambda_.15} parent=55 // pred_check
        %p2413 = pneg %p199
      $region58: #{_lambda_.15} parent=55 // pred_check_branch
        %2415 = sbr.rel (%p2413) target = $region60
      $region59: #{_lambda_.15} parent=55 // pred_region
        %p2416 = scmp.lt.s32.totalorder %s19, 1
        %s2417 = scalar_select %p2416, %s19, 1
        %s2418 = smul.addr %s2417, 32
        %s2419 = smul.addr %s2418, 8
        %s2420 = scalar_lea.vmem %s7, %s2419
      $region60: #{_lambda_.15} parent=55 // pred_fallthru
        _
    $region56: #{_lambda_.15} parent=5 // pred_fallthru
      _
  $region6: #{_lambda_.15} parent=0 // loop_footer
    %s17 = sadd.s32 1, %s13
  $region7: #{_lambda_.15} parent=0 // loop_footer_branch
    %12 = sbr.rel target = $region3
  $region8: #{_lambda_.15} parent=0 // loop_exit
    _

</llo_original>
